<compile_context>
chip_gen: v7x
topology: tpu7x:2x2x1
jax: 0.10.0
libtpu: 0.0.40
codegen_flags: <defaults>
</compile_context>

<pallas_src>
import functools

import jax
import jax.numpy as jnp
from jax.experimental import pallas as pl
from jax.experimental.pallas import tpu as pltpu

LABEL_LENGTH = 8
ACTIVATION = "GeLU"  # deterministic stand-in for trial.suggest_categorical(...)

_DIMS = [(768, 600), (600, 600), (600, 600), (600, 300), (300, LABEL_LENGTH)]


def _round_up(n, m):
    return ((n + m - 1) // m) * m


def _activation(x):
    if ACTIVATION == "Softplus":
        # F.softplus default (beta=1): log(1 + exp(x)), numerically stable form.
        return jnp.where(x > 20.0, x, jnp.log1p(jnp.exp(jnp.minimum(x, 20.0))))
    # F.gelu default: exact erf-based GELU.
    return 0.5 * x * (1.0 + jax.lax.erf(x * (1.0 / jnp.sqrt(2.0).astype(x.dtype))))


def mlp_kernel(x_ref,
               w1_ref, b1_ref,
               w2_ref, b2_ref,
               w3_ref, b3_ref,
               w4_ref, b4_ref,
               w5_ref, b5_ref,
               out_ref):
    # bf16 inputs to the MXU, f32 accumulation, activations computed in f32.
    h = x_ref[...].astype(jnp.bfloat16)
    for w_ref, b_ref in ((w1_ref, b1_ref), (w2_ref, b2_ref),
                         (w3_ref, b3_ref), (w4_ref, b4_ref)):
        z = jnp.dot(h, w_ref[...], preferred_element_type=jnp.float32) + b_ref[...]
        # dropout == identity in eval mode
        h = _activation(z).astype(jnp.bfloat16)
    out_ref[...] = (jnp.dot(h, w5_ref[...], preferred_element_type=jnp.float32)
                    + b5_ref[...]).astype(out_ref.dtype)


@jax.jit
def mlp_forward(x, params):
    B, F = x.shape  # F == 768 (already a multiple of 128)

    # Batch tile: small batches get one lane-aligned block; big batches tile at 128
    # rows so the (VMEM-resident) weights are amortized over many grid steps.
    TB = min(128, _round_up(B, 8))
    B_pad = _round_up(B, TB)
    if B_pad != B:
        x = jnp.pad(x, ((0, B_pad - B), (0, 0)))

    flat = [x]
    in_specs = [pl.BlockSpec((TB, F), lambda i: (i, 0))]
    for (w, b) in params:
        flat += [w, b]
        # Constant block index -> weights/biases DMA'd once, stay resident in VMEM.
        in_specs.append(pl.BlockSpec(w.shape, lambda i: (0, 0)))
        in_specs.append(pl.BlockSpec(b.shape, lambda i: (0, 0)))

    out_pad = params[-1][0].shape[1]  # 128 (padded from 8)
    out = pl.pallas_call(
        mlp_kernel,
        out_shape=jax.ShapeDtypeStruct((B_pad, out_pad), jnp.float32),
        grid=(B_pad // TB,),
        in_specs=in_specs,
        out_specs=pl.BlockSpec((TB, out_pad), lambda i: (i, 0)),
        compiler_params=pltpu.CompilerParams(dimension_semantics=("parallel",)),
    )(*flat)
    return out[:B, :LABEL_LENGTH]


def init_params(key):
    """nn.Linear-style init (uniform +/- 1/sqrt(fan_in)), stored as [in, out],
    zero-padded to 128-aligned shapes, weights cast to bf16."""
    params = []
    for fan_in, fan_out in _DIMS:
        kw, kb, key = jax.random.split(key, 3)
        bound = float(1.0 / (fan_in ** 0.5))
        w = jax.random.uniform(kw, (fan_in, fan_out), jnp.float32, -bound, bound)
        b = jax.random.uniform(kb, (fan_out,), jnp.float32, -bound, bound)
        in_p, out_p = _round_up(fan_in, 128), _round_up(fan_out, 128)
        w_pad = jnp.zeros((in_p, out_p), jnp.float32).at[:fan_in, :fan_out].set(w)
        b_pad = jnp.zeros((1, out_p), jnp.float32).at[0, :fan_out].set(b)
        params.append((w_pad.astype(jnp.bfloat16), b_pad))
    return params


def reference_forward(x, params):
    """Pure-JAX reference using the same bf16-weight / f32-accumulate math."""
    h = x.astype(jnp.bfloat16)
    for i, (w, b) in enumerate(params):
        z = jnp.dot(h, w, preferred_element_type=jnp.float32) + b
        if i < len(params) - 1:
            h = _activation(z).astype(jnp.bfloat16)
        else:
            h = z
    return h[:, :LABEL_LENGTH]


if __name__ == "__main__":
    key = jax.random.PRNGKey(0)
    kx, kp = jax.random.split(key)
    batch = 8
    x = jax.random.normal(kx, (batch, 768), jnp.float32)
    params = init_params(kp)

    out = mlp_forward(x, params)
    out = jax.block_until_ready(out)

    ref = reference_forward(x, params)
    assert out.shape == (batch, LABEL_LENGTH)
    assert jnp.allclose(out, ref, atol=1e-2, rtol=1e-2), (
        float(jnp.max(jnp.abs(out - ref))))

    print("KERNEL_OK")
</pallas_src>

<mosaic_0001>
module attributes {stable_mosaic.version = 11 : i64} {
  func.func @mlp_kernel(%arg0: i32, %arg1: memref<8x768xf32, #tpu.memory_space<vmem>>, %arg2: memref<768x640xbf16, #tpu.memory_space<vmem>>, %arg3: memref<1x640xf32, #tpu.memory_space<vmem>>, %arg4: memref<640x640xbf16, #tpu.memory_space<vmem>>, %arg5: memref<1x640xf32, #tpu.memory_space<vmem>>, %arg6: memref<640x640xbf16, #tpu.memory_space<vmem>>, %arg7: memref<1x640xf32, #tpu.memory_space<vmem>>, %arg8: memref<640x384xbf16, #tpu.memory_space<vmem>>, %arg9: memref<1x384xf32, #tpu.memory_space<vmem>>, %arg10: memref<384x128xbf16, #tpu.memory_space<vmem>>, %arg11: memref<1x128xf32, #tpu.memory_space<vmem>>, %arg12: memref<8x128xf32, #tpu.memory_space<vmem>>) attributes {dimension_semantics = [#tpu.dimension_semantics<parallel>], iteration_bounds = array<i64: 1>, scalar_prefetch = 0 : i64, scratch_operands = 0 : i64, tpu.core_type = #tpu.core_type<tc>, window_params = [{transform_indices = @transform_0, window_bounds = array<i64: 8, 768>}, {pipeline_mode = #tpu.pipeline_mode<synchronous>, transform_indices = @transform_1, window_bounds = array<i64: 768, 640>}, {pipeline_mode = #tpu.pipeline_mode<synchronous>, transform_indices = @transform_2, window_bounds = array<i64: 1, 640>}, {pipeline_mode = #tpu.pipeline_mode<synchronous>, transform_indices = @transform_3, window_bounds = array<i64: 640, 640>}, {pipeline_mode = #tpu.pipeline_mode<synchronous>, transform_indices = @transform_4, window_bounds = array<i64: 1, 640>}, {pipeline_mode = #tpu.pipeline_mode<synchronous>, transform_indices = @transform_5, window_bounds = array<i64: 640, 640>}, {pipeline_mode = #tpu.pipeline_mode<synchronous>, transform_indices = @transform_6, window_bounds = array<i64: 1, 640>}, {pipeline_mode = #tpu.pipeline_mode<synchronous>, transform_indices = @transform_7, window_bounds = array<i64: 640, 384>}, {pipeline_mode = #tpu.pipeline_mode<synchronous>, transform_indices = @transform_8, window_bounds = array<i64: 1, 384>}, {pipeline_mode = #tpu.pipeline_mode<synchronous>, transform_indices = @transform_9, window_bounds = array<i64: 384, 128>}, {pipeline_mode = #tpu.pipeline_mode<synchronous>, transform_indices = @transform_10, window_bounds = array<i64: 1, 128>}, {transform_indices = @transform_11, window_bounds = array<i64: 8, 128>}]} {
    %c0 = arith.constant 0 : index
    %c0_0 = arith.constant 0 : index
    %0 = vector.load %arg1[%c0, %c0_0] : memref<8x768xf32, #tpu.memory_space<vmem>>, vector<8x768xf32>
    %1 = arith.truncf %0 : vector<8x768xf32> to vector<8x768xbf16>
    %c0_1 = arith.constant 0 : index
    %c0_2 = arith.constant 0 : index
    %2 = vector.load %arg2[%c0_1, %c0_2] : memref<768x640xbf16, #tpu.memory_space<vmem>>, vector<768x640xbf16>
    %cst = arith.constant dense<0.000000e+00> : vector<8x640xf32>
    %3 = tpu.matmul %1, %2, %cst {dimension_numbers = #tpu.dot_dimension_numbers<[1], [0], [0], [1], [0, 0, 1, 1], [], []>} : vector<8x768xbf16>, vector<768x640xbf16>, vector<8x640xf32> -> vector<8x640xf32>
    %c0_3 = arith.constant 0 : index
    %c0_4 = arith.constant 0 : index
    %4 = vector.load %arg3[%c0_3, %c0_4] : memref<1x640xf32, #tpu.memory_space<vmem>>, vector<1x640xf32>
    %5 = vector.broadcast %4 : vector<1x640xf32> to vector<8x640xf32>
    %6 = arith.addf %3, %5 : vector<8x640xf32>
    %cst_5 = arith.constant 5.000000e-01 : f32
    %7 = vector.broadcast %cst_5 : f32 to vector<8x640xf32>
    %8 = arith.mulf %7, %6 : vector<8x640xf32>
    %cst_6 = arith.constant 2.000000e+00 : f32
    %9 = math.sqrt %cst_6 : f32
    %cst_7 = arith.constant 1.000000e+00 : f32
    %10 = arith.divf %cst_7, %9 : f32
    %11 = vector.broadcast %10 : f32 to vector<8x640xf32>
    %12 = arith.mulf %6, %11 : vector<8x640xf32>
    %13 = math.erf %12 : vector<8x640xf32>
    %cst_8 = arith.constant 1.000000e+00 : f32
    %14 = vector.broadcast %cst_8 : f32 to vector<8x640xf32>
    %15 = arith.addf %14, %13 : vector<8x640xf32>
    %16 = arith.mulf %8, %15 : vector<8x640xf32>
    %17 = arith.truncf %16 : vector<8x640xf32> to vector<8x640xbf16>
    %c0_9 = arith.constant 0 : index
    %c0_10 = arith.constant 0 : index
    %18 = vector.load %arg4[%c0_9, %c0_10] : memref<640x640xbf16, #tpu.memory_space<vmem>>, vector<640x640xbf16>
    %cst_11 = arith.constant dense<0.000000e+00> : vector<8x640xf32>
    %19 = tpu.matmul %17, %18, %cst_11 {dimension_numbers = #tpu.dot_dimension_numbers<[1], [0], [0], [1], [0, 0, 1, 1], [], []>} : vector<8x640xbf16>, vector<640x640xbf16>, vector<8x640xf32> -> vector<8x640xf32>
    %c0_12 = arith.constant 0 : index
    %c0_13 = arith.constant 0 : index
    %20 = vector.load %arg5[%c0_12, %c0_13] : memref<1x640xf32, #tpu.memory_space<vmem>>, vector<1x640xf32>
    %21 = vector.broadcast %20 : vector<1x640xf32> to vector<8x640xf32>
    %22 = arith.addf %19, %21 : vector<8x640xf32>
    %cst_14 = arith.constant 5.000000e-01 : f32
    %23 = vector.broadcast %cst_14 : f32 to vector<8x640xf32>
    %24 = arith.mulf %23, %22 : vector<8x640xf32>
    %cst_15 = arith.constant 2.000000e+00 : f32
    %25 = math.sqrt %cst_15 : f32
    %cst_16 = arith.constant 1.000000e+00 : f32
    %26 = arith.divf %cst_16, %25 : f32
    %27 = vector.broadcast %26 : f32 to vector<8x640xf32>
    %28 = arith.mulf %22, %27 : vector<8x640xf32>
    %29 = math.erf %28 : vector<8x640xf32>
    %cst_17 = arith.constant 1.000000e+00 : f32
    %30 = vector.broadcast %cst_17 : f32 to vector<8x640xf32>
    %31 = arith.addf %30, %29 : vector<8x640xf32>
    %32 = arith.mulf %24, %31 : vector<8x640xf32>
    %33 = arith.truncf %32 : vector<8x640xf32> to vector<8x640xbf16>
    %c0_18 = arith.constant 0 : index
    %c0_19 = arith.constant 0 : index
    %34 = vector.load %arg6[%c0_18, %c0_19] : memref<640x640xbf16, #tpu.memory_space<vmem>>, vector<640x640xbf16>
    %cst_20 = arith.constant dense<0.000000e+00> : vector<8x640xf32>
    %35 = tpu.matmul %33, %34, %cst_20 {dimension_numbers = #tpu.dot_dimension_numbers<[1], [0], [0], [1], [0, 0, 1, 1], [], []>} : vector<8x640xbf16>, vector<640x640xbf16>, vector<8x640xf32> -> vector<8x640xf32>
    %c0_21 = arith.constant 0 : index
    %c0_22 = arith.constant 0 : index
    %36 = vector.load %arg7[%c0_21, %c0_22] : memref<1x640xf32, #tpu.memory_space<vmem>>, vector<1x640xf32>
    %37 = vector.broadcast %36 : vector<1x640xf32> to vector<8x640xf32>
    %38 = arith.addf %35, %37 : vector<8x640xf32>
    %cst_23 = arith.constant 5.000000e-01 : f32
    %39 = vector.broadcast %cst_23 : f32 to vector<8x640xf32>
    %40 = arith.mulf %39, %38 : vector<8x640xf32>
    %cst_24 = arith.constant 2.000000e+00 : f32
    %41 = math.sqrt %cst_24 : f32
    %cst_25 = arith.constant 1.000000e+00 : f32
    %42 = arith.divf %cst_25, %41 : f32
    %43 = vector.broadcast %42 : f32 to vector<8x640xf32>
    %44 = arith.mulf %38, %43 : vector<8x640xf32>
    %45 = math.erf %44 : vector<8x640xf32>
    %cst_26 = arith.constant 1.000000e+00 : f32
    %46 = vector.broadcast %cst_26 : f32 to vector<8x640xf32>
    %47 = arith.addf %46, %45 : vector<8x640xf32>
    %48 = arith.mulf %40, %47 : vector<8x640xf32>
    %49 = arith.truncf %48 : vector<8x640xf32> to vector<8x640xbf16>
    %c0_27 = arith.constant 0 : index
    %c0_28 = arith.constant 0 : index
    %50 = vector.load %arg8[%c0_27, %c0_28] : memref<640x384xbf16, #tpu.memory_space<vmem>>, vector<640x384xbf16>
    %cst_29 = arith.constant dense<0.000000e+00> : vector<8x384xf32>
    %51 = tpu.matmul %49, %50, %cst_29 {dimension_numbers = #tpu.dot_dimension_numbers<[1], [0], [0], [1], [0, 0, 1, 1], [], []>} : vector<8x640xbf16>, vector<640x384xbf16>, vector<8x384xf32> -> vector<8x384xf32>
    %c0_30 = arith.constant 0 : index
    %c0_31 = arith.constant 0 : index
    %52 = vector.load %arg9[%c0_30, %c0_31] : memref<1x384xf32, #tpu.memory_space<vmem>>, vector<1x384xf32>
    %53 = vector.broadcast %52 : vector<1x384xf32> to vector<8x384xf32>
    %54 = arith.addf %51, %53 : vector<8x384xf32>
    %cst_32 = arith.constant 5.000000e-01 : f32
    %55 = vector.broadcast %cst_32 : f32 to vector<8x384xf32>
    %56 = arith.mulf %55, %54 : vector<8x384xf32>
    %cst_33 = arith.constant 2.000000e+00 : f32
    %57 = math.sqrt %cst_33 : f32
    %cst_34 = arith.constant 1.000000e+00 : f32
    %58 = arith.divf %cst_34, %57 : f32
    %59 = vector.broadcast %58 : f32 to vector<8x384xf32>
    %60 = arith.mulf %54, %59 : vector<8x384xf32>
    %61 = math.erf %60 : vector<8x384xf32>
    %cst_35 = arith.constant 1.000000e+00 : f32
    %62 = vector.broadcast %cst_35 : f32 to vector<8x384xf32>
    %63 = arith.addf %62, %61 : vector<8x384xf32>
    %64 = arith.mulf %56, %63 : vector<8x384xf32>
    %65 = arith.truncf %64 : vector<8x384xf32> to vector<8x384xbf16>
    %c0_36 = arith.constant 0 : index
    %c0_37 = arith.constant 0 : index
    %66 = vector.load %arg10[%c0_36, %c0_37] : memref<384x128xbf16, #tpu.memory_space<vmem>>, vector<384x128xbf16>
    %cst_38 = arith.constant dense<0.000000e+00> : vector<8x128xf32>
    %67 = tpu.matmul %65, %66, %cst_38 {dimension_numbers = #tpu.dot_dimension_numbers<[1], [0], [0], [1], [0, 0, 1, 1], [], []>} : vector<8x384xbf16>, vector<384x128xbf16>, vector<8x128xf32> -> vector<8x128xf32>
    %c0_39 = arith.constant 0 : index
    %c0_40 = arith.constant 0 : index
    %68 = vector.load %arg11[%c0_39, %c0_40] : memref<1x128xf32, #tpu.memory_space<vmem>>, vector<1x128xf32>
    %69 = vector.broadcast %68 : vector<1x128xf32> to vector<8x128xf32>
    %70 = arith.addf %67, %69 : vector<8x128xf32>
    %c0_41 = arith.constant 0 : index
    %c0_42 = arith.constant 0 : index
    %71 = vector.load %arg12[%c0_41, %c0_42] : memref<8x128xf32, #tpu.memory_space<vmem>>, vector<8x128xf32>
    tpu.vector_store %arg12[%c0_41, %c0_42], %70 {strides = array<i32>} : memref<8x128xf32, #tpu.memory_space<vmem>>, vector<8x128xf32>,
    return
  }
  func.func @transform_0(%arg0: i32) -> (i32, i32) {
    %c0_i32 = arith.constant 0 : i32
    %c0_i32_0 = arith.constant 0 : i32
    return %arg0, %c0_i32 : i32, i32
  }
  func.func @transform_1(%arg0: i32) -> (i32, i32) {
    %c0_i32 = arith.constant 0 : i32
    %c0_i32_0 = arith.constant 0 : i32
    %c0_i32_1 = arith.constant 0 : i32
    return %c0_i32, %c0_i32_0 : i32, i32
  }
  func.func @transform_2(%arg0: i32) -> (i32, i32) {
    %c0_i32 = arith.constant 0 : i32
    %c0_i32_0 = arith.constant 0 : i32
    %c0_i32_1 = arith.constant 0 : i32
    return %c0_i32, %c0_i32_0 : i32, i32
  }
  func.func @transform_3(%arg0: i32) -> (i32, i32) {
    %c0_i32 = arith.constant 0 : i32
    %c0_i32_0 = arith.constant 0 : i32
    %c0_i32_1 = arith.constant 0 : i32
    return %c0_i32, %c0_i32_0 : i32, i32
  }
  func.func @transform_4(%arg0: i32) -> (i32, i32) {
    %c0_i32 = arith.constant 0 : i32
    %c0_i32_0 = arith.constant 0 : i32
    %c0_i32_1 = arith.constant 0 : i32
    return %c0_i32, %c0_i32_0 : i32, i32
  }
  func.func @transform_5(%arg0: i32) -> (i32, i32) {
    %c0_i32 = arith.constant 0 : i32
    %c0_i32_0 = arith.constant 0 : i32
    %c0_i32_1 = arith.constant 0 : i32
    return %c0_i32, %c0_i32_0 : i32, i32
  }
  func.func @transform_6(%arg0: i32) -> (i32, i32) {
    %c0_i32 = arith.constant 0 : i32
    %c0_i32_0 = arith.constant 0 : i32
    %c0_i32_1 = arith.constant 0 : i32
    return %c0_i32, %c0_i32_0 : i32, i32
  }
  func.func @transform_7(%arg0: i32) -> (i32, i32) {
    %c0_i32 = arith.constant 0 : i32
    %c0_i32_0 = arith.constant 0 : i32
    %c0_i32_1 = arith.constant 0 : i32
    return %c0_i32, %c0_i32_0 : i32, i32
  }
  func.func @transform_8(%arg0: i32) -> (i32, i32) {
    %c0_i32 = arith.constant 0 : i32
    %c0_i32_0 = arith.constant 0 : i32
    %c0_i32_1 = arith.constant 0 : i32
    return %c0_i32, %c0_i32_0 : i32, i32
  }
  func.func @transform_9(%arg0: i32) -> (i32, i32) {
    %c0_i32 = arith.constant 0 : i32
    %c0_i32_0 = arith.constant 0 : i32
    %c0_i32_1 = arith.constant 0 : i32
    return %c0_i32, %c0_i32_0 : i32, i32
  }
  func.func @transform_10(%arg0: i32) -> (i32, i32) {
    %c0_i32 = arith.constant 0 : i32
    %c0_i32_0 = arith.constant 0 : i32
    %c0_i32_1 = arith.constant 0 : i32
    return %c0_i32, %c0_i32_0 : i32, i32
  }
  func.func @transform_11(%arg0: i32) -> (i32, i32) {
    %c0_i32 = arith.constant 0 : i32
    %c0_i32_0 = arith.constant 0 : i32
    return %arg0, %c0_i32 : i32, i32
  }
}

</mosaic_0001>

<llo_original>
// kernel: mlp_forward.1
$region0: #{mlp_forward.1}
  #allocation0 [shape = 'u32[]', space=smem, size = 0x4, offset = 0x4, fixed_abs, tag = 'smem constant byte address 0x4 - core index']
  #allocation1 [shape = 'u32[144,128]{1,0:T(1,128)}', space=vmem, size = 0x12000, scoped, tag = 'internal scratch']
  %s0 = inlined_call_operand.hbm [shape: f32[8,768], index: 0, kind: input, shape index: {}]
  %s1 = inlined_call_operand.hbm [shape: bf16[768,640], index: 1, kind: input, shape index: {}]
  %s2 = inlined_call_operand.vmem [shape: f32[1,640], index: 2, kind: input, shape index: {}]
  %s3 = inlined_call_operand.hbm [shape: bf16[640,640], index: 3, kind: input, shape index: {}]
  %s4 = inlined_call_operand.vmem [shape: f32[1,640], index: 4, kind: input, shape index: {}]
  %s5 = inlined_call_operand.hbm [shape: bf16[640,640], index: 5, kind: input, shape index: {}]
  %s6 = inlined_call_operand.vmem [shape: f32[1,640], index: 6, kind: input, shape index: {}]
  %s7 = inlined_call_operand.hbm [shape: bf16[640,384], index: 7, kind: input, shape index: {}]
  %s8 = inlined_call_operand.vmem [shape: f32[1,384], index: 8, kind: input, shape index: {}]
  %s9 = inlined_call_operand.hbm [shape: bf16[384,128], index: 9, kind: input, shape index: {}]
  %s10 = inlined_call_operand.vmem [shape: f32[1,128], index: 10, kind: input, shape index: {}]
  %s11 = inlined_call_operand.hbm [shape: f32[8,128], index: 11, kind: output, shape index: {}]
  %s12 = sld [smem:[#allocation0]]
  $region78: #{mlp_forward.1} parent=0
    _
  %s14 = ssub.s32 1, %s12
  %s15 = scalar_select 0, %s14, %s12
  $region1: #{mlp_forward.1} parent=0
    #allocation2 [shape = 'u8[24576]{0}', space=vmem, size = 0x6000, scoped, tag = 'input window, operand 0, single buffered']
    #allocation3 [shape = 's32[1]{0}', space=sflag, size = 0x4, scoped, tag = 'scoped memory for mlp_forward.1']
    #allocation4 [shape = 's32[1]{0}', space=sflag, size = 0x4, scoped, tag = 'scoped memory for mlp_forward.1']
    #allocation5 [shape = 'u8[983040]{0}', space=vmem, size = 0xf0000, scoped, tag = 'input window, operand 1, single buffered']
    #allocation6 [shape = 's32[1]{0}', space=sflag, size = 0x4, scoped, tag = 'scoped memory for mlp_forward.1']
    #allocation7 [shape = 'u8[819200]{0}', space=vmem, size = 0xc8000, scoped, tag = 'input window, operand 3, single buffered']
    #allocation8 [shape = 'u8[819200]{0}', space=vmem, size = 0xc8000, scoped, tag = 'input window, operand 5, single buffered']
    #allocation9 [shape = 's32[1]{0}', space=sflag, size = 0x4, scoped, tag = 'scoped memory for mlp_forward.1']
    #allocation10 [shape = 'u8[491520]{0}', space=vmem, size = 0x78000, scoped, tag = 'input window, operand 7, single buffered']
    #allocation11 [shape = 'u8[98304]{0}', space=vmem, size = 0x18000, scoped, tag = 'input window, operand 9, single buffered']
    #allocation12 [shape = 's32[1]{0}', space=sflag, size = 0x4, scoped, tag = 'scoped memory for mlp_forward.1']
    #allocation13 [shape = 'u8[4096]{0}', space=vmem, size = 0x1000, scoped, tag = 'output window, operand 0, single buffered']
    %16 = vsyncpa [#allocation3], 0
    %17 = vsyncpa [#allocation6], 0
    %18 = vsyncpa [#allocation9], 0
    %19 = vsyncpa [#allocation12], 0
    %20 = vsyncpa [#allocation4], 0
    // Predicated region
    $region2: #{mlp_forward.1} parent=1 // pred_check
      _
    $region3: #{mlp_forward.1} parent=1 // pred_check_branch
      %22 = sbr.rel (0) target = $region5
    $region4: #{mlp_forward.1} parent=1 // pred_region
      %s24 = ssub.s32 768, 768
      %25 = vsyncadd [#allocation3], %s24
      %s27 = sshll.u32 [#allocation2], 4
      %s28 = int_to_ptr.vmem [resolvable:$true] %s27
      %30 = dma.hbm_to_vmem [thread:$0]  %s0, 768, %s28, [#allocation3]
    $region5: #{mlp_forward.1} parent=1 // pred_fallthru
      _
    // Predicated region
    $region6: #{mlp_forward.1} parent=1 // pred_check
      _
    $region7: #{mlp_forward.1} parent=1 // pred_check_branch
      %32 = sbr.rel (0) target = $region9
    $region8: #{mlp_forward.1} parent=1 // pred_region
      %s34 = ssub.s32 30720, 30720
      %35 = vsyncadd [#allocation6], %s34
      %s36 = sshll.u32 [#allocation5], 4
      %s37 = int_to_ptr.vmem [resolvable:$true] %s36
      %42 = dma.hbm_to_vmem [thread:$0]  %s1, 30720, %s37, [#allocation6], 320, 320, 20
    $region9: #{mlp_forward.1} parent=1 // pred_fallthru
      _
    // Predicated region
    $region10: #{mlp_forward.1} parent=1 // pred_check
      _
    $region11: #{mlp_forward.1} parent=1 // pred_check_branch
      %44 = sbr.rel (0) target = $region13
    $region12: #{mlp_forward.1} parent=1 // pred_region
      _
    $region13: #{mlp_forward.1} parent=1 // pred_fallthru
      _
    // Predicated region
    $region14: #{mlp_forward.1} parent=1 // pred_check
      _
    $region15: #{mlp_forward.1} parent=1 // pred_check_branch
      %46 = sbr.rel (0) target = $region17
    $region16: #{mlp_forward.1} parent=1 // pred_region
      %s48 = ssub.s32 25600, 25600
      %49 = vsyncadd [#allocation6], %s48
      %s50 = sshll.u32 [#allocation7], 4
      %s51 = int_to_ptr.vmem [resolvable:$true] %s50
      %56 = dma.hbm_to_vmem [thread:$0]  %s3, 25600, %s51, [#allocation6], 320, 320, 20
    $region17: #{mlp_forward.1} parent=1 // pred_fallthru
      _
    // Predicated region
    $region18: #{mlp_forward.1} parent=1 // pred_check
      _
    $region19: #{mlp_forward.1} parent=1 // pred_check_branch
      %58 = sbr.rel (0) target = $region21
    $region20: #{mlp_forward.1} parent=1 // pred_region
      _
    $region21: #{mlp_forward.1} parent=1 // pred_fallthru
      _
    // Predicated region
    $region22: #{mlp_forward.1} parent=1 // pred_check
      _
    $region23: #{mlp_forward.1} parent=1 // pred_check_branch
      %60 = sbr.rel (0) target = $region25
    $region24: #{mlp_forward.1} parent=1 // pred_region
      %s62 = ssub.s32 25600, 25600
      %63 = vsyncadd [#allocation9], %s62
      %s64 = sshll.u32 [#allocation8], 4
      %s65 = int_to_ptr.vmem [resolvable:$true] %s64
      %70 = dma.hbm_to_vmem [thread:$0]  %s5, 25600, %s65, [#allocation9], 320, 320, 20
    $region25: #{mlp_forward.1} parent=1 // pred_fallthru
      _
    // Predicated region
    $region26: #{mlp_forward.1} parent=1 // pred_check
      _
    $region27: #{mlp_forward.1} parent=1 // pred_check_branch
      %72 = sbr.rel (0) target = $region29
    $region28: #{mlp_forward.1} parent=1 // pred_region
      _
    $region29: #{mlp_forward.1} parent=1 // pred_fallthru
      _
    // Predicated region
    $region30: #{mlp_forward.1} parent=1 // pred_check
      _
    $region31: #{mlp_forward.1} parent=1 // pred_check_branch
      %74 = sbr.rel (0) target = $region33
    $region32: #{mlp_forward.1} parent=1 // pred_region
      %s76 = ssub.s32 15360, 15360
      %77 = vsyncadd [#allocation9], %s76
      %s78 = sshll.u32 [#allocation10], 4
      %s79 = int_to_ptr.vmem [resolvable:$true] %s78
      %84 = dma.hbm_to_vmem [thread:$0]  %s7, 15360, %s79, [#allocation9], 192, 192, 12
    $region33: #{mlp_forward.1} parent=1 // pred_fallthru
      _
    // Predicated region
    $region34: #{mlp_forward.1} parent=1 // pred_check
      _
    $region35: #{mlp_forward.1} parent=1 // pred_check_branch
      %86 = sbr.rel (0) target = $region37
    $region36: #{mlp_forward.1} parent=1 // pred_region
      _
    $region37: #{mlp_forward.1} parent=1 // pred_fallthru
      _
    // Predicated region
    $region38: #{mlp_forward.1} parent=1 // pred_check
      _
    $region39: #{mlp_forward.1} parent=1 // pred_check_branch
      %88 = sbr.rel (0) target = $region41
    $region40: #{mlp_forward.1} parent=1 // pred_region
      %s90 = ssub.s32 3072, 3072
      %91 = vsyncadd [#allocation12], %s90
      %s92 = sshll.u32 [#allocation11], 4
      %s93 = int_to_ptr.vmem [resolvable:$true] %s92
      %98 = dma.hbm_to_vmem [thread:$0]  %s9, 3072, %s93, [#allocation12], 64, 64, 4
    $region41: #{mlp_forward.1} parent=1 // pred_fallthru
      _
    // Predicated region
    $region42: #{mlp_forward.1} parent=1 // pred_check
      _
    $region43: #{mlp_forward.1} parent=1 // pred_check_branch
      %100 = sbr.rel (0) target = $region45
    $region44: #{mlp_forward.1} parent=1 // pred_region
      _
    $region45: #{mlp_forward.1} parent=1 // pred_fallthru
      _
    // Predicated region
    $region46: #{mlp_forward.1} parent=1 // pred_check
      _
    $region47: #{mlp_forward.1} parent=1 // pred_check_branch
      %102 = sbr.rel (0) target = $region49
    $region48: #{mlp_forward.1} parent=1 // pred_region
      %103 = dma.done [#allocation3], 768
    $region49: #{mlp_forward.1} parent=1 // pred_fallthru
      _
    // Predicated region
    $region50: #{mlp_forward.1} parent=1 // pred_check
      _
    $region51: #{mlp_forward.1} parent=1 // pred_check_branch
      %105 = sbr.rel (0) target = $region53
    $region52: #{mlp_forward.1} parent=1 // pred_region
      %106 = dma.done [#allocation6], 30720
    $region53: #{mlp_forward.1} parent=1 // pred_fallthru
      _
    // Predicated region
    $region54: #{mlp_forward.1} parent=1 // pred_check
      _
    $region55: #{mlp_forward.1} parent=1 // pred_check_branch
      %108 = sbr.rel (0) target = $region57
    $region56: #{mlp_forward.1} parent=1 // pred_region
      %109 = dma.done [#allocation6], 25600
    $region57: #{mlp_forward.1} parent=1 // pred_fallthru
      _
    // Predicated region
    $region58: #{mlp_forward.1} parent=1 // pred_check
      _
    $region59: #{mlp_forward.1} parent=1 // pred_check_branch
      %111 = sbr.rel (0) target = $region61
    $region60: #{mlp_forward.1} parent=1 // pred_region
      %112 = dma.done [#allocation9], 25600
    $region61: #{mlp_forward.1} parent=1 // pred_fallthru
      _
    // Predicated region
    $region62: #{mlp_forward.1} parent=1 // pred_check
      _
    $region63: #{mlp_forward.1} parent=1 // pred_check_branch
      %114 = sbr.rel (0) target = $region65
    $region64: #{mlp_forward.1} parent=1 // pred_region
      %115 = dma.done [#allocation9], 15360
    $region65: #{mlp_forward.1} parent=1 // pred_fallthru
      _
    // Predicated region
    $region66: #{mlp_forward.1} parent=1 // pred_check
      _
    $region67: #{mlp_forward.1} parent=1 // pred_check_branch
      %117 = sbr.rel (0) target = $region69
    $region68: #{mlp_forward.1} parent=1 // pred_region
      %118 = dma.done [#allocation12], 3072
    $region69: #{mlp_forward.1} parent=1 // pred_fallthru
      _
    %v120 = vld [vmem:[#allocation2] sm:$0xff]
    %v121 = vld [vmem:[#allocation2 + $0x8] sm:$0xff]
    %v122 = vld [vmem:[#allocation2 + $0x10] sm:$0xff]
    %v123 = vld [vmem:[#allocation2 + $0x18] sm:$0xff]
    %v124 = vld [vmem:[#allocation2 + $0x20] sm:$0xff]
    %v125 = vld [vmem:[#allocation2 + $0x28] sm:$0xff]
    %v126 = vpack.c.bf16 %v120, %v120
    %v127 = vpack.c.bf16 %v121, %v121
    %v128 = vpack.c.bf16 %v122, %v122
    %v129 = vpack.c.bf16 %v123, %v123
    %v130 = vpack.c.bf16 %v124, %v124
    %v131 = vpack.c.bf16 %v125, %v125
    %v132 = vld [vmem:[#allocation5] sm:$0xff]
    %v133 = vld [vmem:[#allocation5 + $0x8] sm:$0xff]
    %v134 = vld [vmem:[#allocation5 + $0x10] sm:$0xf]
    %v135 = vld [vmem:[#allocation5 + $0x14] sm:$0xff]
    %v136 = vld [vmem:[#allocation5 + $0x1c] sm:$0xff]
    %v137 = vld [vmem:[#allocation5 + $0x24] sm:$0xf]
    %v138 = vld [vmem:[#allocation5 + $0x28] sm:$0xff]
    %v139 = vld [vmem:[#allocation5 + $0x30] sm:$0xff]
    %v140 = vld [vmem:[#allocation5 + $0x38] sm:$0xf]
    %v141 = vld [vmem:[#allocation5 + $0x3c] sm:$0xff]
    %v142 = vld [vmem:[#allocation5 + $0x44] sm:$0xff]
    %v143 = vld [vmem:[#allocation5 + $0x4c] sm:$0xf]
    %v144 = vld [vmem:[#allocation5 + $0x50] sm:$0xff]
    %v145 = vld [vmem:[#allocation5 + $0x58] sm:$0xff]
    %v146 = vld [vmem:[#allocation5 + $0x60] sm:$0xf]
    %v147 = vld [vmem:[#allocation5 + $0x64] sm:$0xff]
    %v148 = vld [vmem:[#allocation5 + $0x6c] sm:$0xff]
    %v149 = vld [vmem:[#allocation5 + $0x74] sm:$0xf]
    %v150 = vld [vmem:[#allocation5 + $0x78] sm:$0xff]
    %v151 = vld [vmem:[#allocation5 + $0x80] sm:$0xff]
    %v152 = vld [vmem:[#allocation5 + $0x88] sm:$0xf]
    %v153 = vld [vmem:[#allocation5 + $0x8c] sm:$0xff]
    %v154 = vld [vmem:[#allocation5 + $0x94] sm:$0xff]
    %v155 = vld [vmem:[#allocation5 + $0x9c] sm:$0xf]
    %v156 = vld [vmem:[#allocation5 + $0xa0] sm:$0xff]
    %v157 = vld [vmem:[#allocation5 + $0xa8] sm:$0xff]
    %v158 = vld [vmem:[#allocation5 + $0xb0] sm:$0xf]
    %v159 = vld [vmem:[#allocation5 + $0xb4] sm:$0xff]
    %v160 = vld [vmem:[#allocation5 + $0xbc] sm:$0xff]
    %v161 = vld [vmem:[#allocation5 + $0xc4] sm:$0xf]
    %v162 = vld [vmem:[#allocation5 + $0xc8] sm:$0xff]
    %v163 = vld [vmem:[#allocation5 + $0xd0] sm:$0xff]
    %v164 = vld [vmem:[#allocation5 + $0xd8] sm:$0xf]
    %v165 = vld [vmem:[#allocation5 + $0xdc] sm:$0xff]
    %v166 = vld [vmem:[#allocation5 + $0xe4] sm:$0xff]
    %v167 = vld [vmem:[#allocation5 + $0xec] sm:$0xf]
    %v168 = vld [vmem:[#allocation5 + $0xf0] sm:$0xff]
    %v169 = vld [vmem:[#allocation5 + $0xf8] sm:$0xff]
    %v170 = vld [vmem:[#allocation5 + $0x100] sm:$0xf]
    %v171 = vld [vmem:[#allocation5 + $0x104] sm:$0xff]
    %v172 = vld [vmem:[#allocation5 + $0x10c] sm:$0xff]
    %v173 = vld [vmem:[#allocation5 + $0x114] sm:$0xf]
    %v174 = vld [vmem:[#allocation5 + $0x118] sm:$0xff]
    %v175 = vld [vmem:[#allocation5 + $0x120] sm:$0xff]
    %v176 = vld [vmem:[#allocation5 + $0x128] sm:$0xf]
    %v177 = vld [vmem:[#allocation5 + $0x12c] sm:$0xff]
    %v178 = vld [vmem:[#allocation5 + $0x134] sm:$0xff]
    %v179 = vld [vmem:[#allocation5 + $0x13c] sm:$0xf]
    %v180 = vld [vmem:[#allocation5 + $0x140] sm:$0xff]
    %v181 = vld [vmem:[#allocation5 + $0x148] sm:$0xff]
    %v182 = vld [vmem:[#allocation5 + $0x150] sm:$0xf]
    %v183 = vld [vmem:[#allocation5 + $0x154] sm:$0xff]
    %v184 = vld [vmem:[#allocation5 + $0x15c] sm:$0xff]
    %v185 = vld [vmem:[#allocation5 + $0x164] sm:$0xf]
    %v186 = vld [vmem:[#allocation5 + $0x168] sm:$0xff]
    %v187 = vld [vmem:[#allocation5 + $0x170] sm:$0xff]
    %v188 = vld [vmem:[#allocation5 + $0x178] sm:$0xf]
    %v189 = vld [vmem:[#allocation5 + $0x17c] sm:$0xff]
    %v190 = vld [vmem:[#allocation5 + $0x184] sm:$0xff]
    %v191 = vld [vmem:[#allocation5 + $0x18c] sm:$0xf]
    %v192 = vld [vmem:[#allocation5 + $0x190] sm:$0xff]
    %v193 = vld [vmem:[#allocation5 + $0x198] sm:$0xff]
    %v194 = vld [vmem:[#allocation5 + $0x1a0] sm:$0xf]
    %v195 = vld [vmem:[#allocation5 + $0x1a4] sm:$0xff]
    %v196 = vld [vmem:[#allocation5 + $0x1ac] sm:$0xff]
    %v197 = vld [vmem:[#allocation5 + $0x1b4] sm:$0xf]
    %v198 = vld [vmem:[#allocation5 + $0x1b8] sm:$0xff]
    %v199 = vld [vmem:[#allocation5 + $0x1c0] sm:$0xff]
    %v200 = vld [vmem:[#allocation5 + $0x1c8] sm:$0xf]
    %v201 = vld [vmem:[#allocation5 + $0x1cc] sm:$0xff]
    %v202 = vld [vmem:[#allocation5 + $0x1d4] sm:$0xff]
    %v203 = vld [vmem:[#allocation5 + $0x1dc] sm:$0xf]
    %v204 = vld [vmem:[#allocation5 + $0x1e0] sm:$0xff]
    %v205 = vld [vmem:[#allocation5 + $0x1e8] sm:$0xff]
    %v206 = vld [vmem:[#allocation5 + $0x1f0] sm:$0xf]
    %v207 = vld [vmem:[#allocation5 + $0x1f4] sm:$0xff]
    %v208 = vld [vmem:[#allocation5 + $0x1fc] sm:$0xff]
    %v209 = vld [vmem:[#allocation5 + $0x204] sm:$0xf]
    %v210 = vld [vmem:[#allocation5 + $0x208] sm:$0xff]
    %v211 = vld [vmem:[#allocation5 + $0x210] sm:$0xff]
    %v212 = vld [vmem:[#allocation5 + $0x218] sm:$0xf]
    %v213 = vld [vmem:[#allocation5 + $0x21c] sm:$0xff]
    %v214 = vld [vmem:[#allocation5 + $0x224] sm:$0xff]
    %v215 = vld [vmem:[#allocation5 + $0x22c] sm:$0xf]
    %v216 = vld [vmem:[#allocation5 + $0x230] sm:$0xff]
    %v217 = vld [vmem:[#allocation5 + $0x238] sm:$0xff]
    %v218 = vld [vmem:[#allocation5 + $0x240] sm:$0xf]
    %v219 = vld [vmem:[#allocation5 + $0x244] sm:$0xff]
    %v220 = vld [vmem:[#allocation5 + $0x24c] sm:$0xff]
    %v221 = vld [vmem:[#allocation5 + $0x254] sm:$0xf]
    %v222 = vld [vmem:[#allocation5 + $0x258] sm:$0xff]
    %v223 = vld [vmem:[#allocation5 + $0x260] sm:$0xff]
    %v224 = vld [vmem:[#allocation5 + $0x268] sm:$0xf]
    %v225 = vld [vmem:[#allocation5 + $0x26c] sm:$0xff]
    %v226 = vld [vmem:[#allocation5 + $0x274] sm:$0xff]
    %v227 = vld [vmem:[#allocation5 + $0x27c] sm:$0xf]
    %v228 = vld [vmem:[#allocation5 + $0x280] sm:$0xff]
    %v229 = vld [vmem:[#allocation5 + $0x288] sm:$0xff]
    %v230 = vld [vmem:[#allocation5 + $0x290] sm:$0xf]
    %v231 = vld [vmem:[#allocation5 + $0x294] sm:$0xff]
    %v232 = vld [vmem:[#allocation5 + $0x29c] sm:$0xff]
    %v233 = vld [vmem:[#allocation5 + $0x2a4] sm:$0xf]
    %v234 = vld [vmem:[#allocation5 + $0x2a8] sm:$0xff]
    %v235 = vld [vmem:[#allocation5 + $0x2b0] sm:$0xff]
    %v236 = vld [vmem:[#allocation5 + $0x2b8] sm:$0xf]
    %v237 = vld [vmem:[#allocation5 + $0x2bc] sm:$0xff]
    %v238 = vld [vmem:[#allocation5 + $0x2c4] sm:$0xff]
    %v239 = vld [vmem:[#allocation5 + $0x2cc] sm:$0xf]
    %v240 = vld [vmem:[#allocation5 + $0x2d0] sm:$0xff]
    %v241 = vld [vmem:[#allocation5 + $0x2d8] sm:$0xff]
    %v242 = vld [vmem:[#allocation5 + $0x2e0] sm:$0xf]
    %v243 = vld [vmem:[#allocation5 + $0x2e4] sm:$0xff]
    %v244 = vld [vmem:[#allocation5 + $0x2ec] sm:$0xff]
    %v245 = vld [vmem:[#allocation5 + $0x2f4] sm:$0xf]
    %v246 = vld [vmem:[#allocation5 + $0x2f8] sm:$0xff]
    %v247 = vld [vmem:[#allocation5 + $0x300] sm:$0xff]
    %v248 = vld [vmem:[#allocation5 + $0x308] sm:$0xf]
    %v249 = vld [vmem:[#allocation5 + $0x30c] sm:$0xff]
    %v250 = vld [vmem:[#allocation5 + $0x314] sm:$0xff]
    %v251 = vld [vmem:[#allocation5 + $0x31c] sm:$0xf]
    %v252 = vld [vmem:[#allocation5 + $0x320] sm:$0xff]
    %v253 = vld [vmem:[#allocation5 + $0x328] sm:$0xff]
    %v254 = vld [vmem:[#allocation5 + $0x330] sm:$0xf]
    %v255 = vld [vmem:[#allocation5 + $0x334] sm:$0xff]
    %v256 = vld [vmem:[#allocation5 + $0x33c] sm:$0xff]
    %v257 = vld [vmem:[#allocation5 + $0x344] sm:$0xf]
    %v258 = vld [vmem:[#allocation5 + $0x348] sm:$0xff]
    %v259 = vld [vmem:[#allocation5 + $0x350] sm:$0xff]
    %v260 = vld [vmem:[#allocation5 + $0x358] sm:$0xf]
    %v261 = vld [vmem:[#allocation5 + $0x35c] sm:$0xff]
    %v262 = vld [vmem:[#allocation5 + $0x364] sm:$0xff]
    %v263 = vld [vmem:[#allocation5 + $0x36c] sm:$0xf]
    %v264 = vld [vmem:[#allocation5 + $0x370] sm:$0xff]
    %v265 = vld [vmem:[#allocation5 + $0x378] sm:$0xff]
    %v266 = vld [vmem:[#allocation5 + $0x380] sm:$0xf]
    %v267 = vld [vmem:[#allocation5 + $0x384] sm:$0xff]
    %v268 = vld [vmem:[#allocation5 + $0x38c] sm:$0xff]
    %v269 = vld [vmem:[#allocation5 + $0x394] sm:$0xf]
    %v270 = vld [vmem:[#allocation5 + $0x398] sm:$0xff]
    %v271 = vld [vmem:[#allocation5 + $0x3a0] sm:$0xff]
    %v272 = vld [vmem:[#allocation5 + $0x3a8] sm:$0xf]
    %v273 = vld [vmem:[#allocation5 + $0x3ac] sm:$0xff]
    %v274 = vld [vmem:[#allocation5 + $0x3b4] sm:$0xff]
    %v275 = vld [vmem:[#allocation5 + $0x3bc] sm:$0xf]
    %v276 = vld [vmem:[#allocation5 + $0x3c0] sm:$0xff]
    %v277 = vld [vmem:[#allocation5 + $0x3c8] sm:$0xff]
    %v278 = vld [vmem:[#allocation5 + $0x3d0] sm:$0xf]
    %v279 = vld [vmem:[#allocation5 + $0x3d4] sm:$0xff]
    %v280 = vld [vmem:[#allocation5 + $0x3dc] sm:$0xff]
    %v281 = vld [vmem:[#allocation5 + $0x3e4] sm:$0xf]
    %v282 = vld [vmem:[#allocation5 + $0x3e8] sm:$0xff]
    %v283 = vld [vmem:[#allocation5 + $0x3f0] sm:$0xff]
    %v284 = vld [vmem:[#allocation5 + $0x3f8] sm:$0xf]
    %v285 = vld [vmem:[#allocation5 + $0x3fc] sm:$0xff]
    %v286 = vld [vmem:[#allocation5 + $0x404] sm:$0xff]
    %v287 = vld [vmem:[#allocation5 + $0x40c] sm:$0xf]
    %v288 = vld [vmem:[#allocation5 + $0x410] sm:$0xff]
    %v289 = vld [vmem:[#allocation5 + $0x418] sm:$0xff]
    %v290 = vld [vmem:[#allocation5 + $0x420] sm:$0xf]
    %v291 = vld [vmem:[#allocation5 + $0x424] sm:$0xff]
    %v292 = vld [vmem:[#allocation5 + $0x42c] sm:$0xff]
    %v293 = vld [vmem:[#allocation5 + $0x434] sm:$0xf]
    %v294 = vld [vmem:[#allocation5 + $0x438] sm:$0xff]
    %v295 = vld [vmem:[#allocation5 + $0x440] sm:$0xff]
    %v296 = vld [vmem:[#allocation5 + $0x448] sm:$0xf]
    %v297 = vld [vmem:[#allocation5 + $0x44c] sm:$0xff]
    %v298 = vld [vmem:[#allocation5 + $0x454] sm:$0xff]
    %v299 = vld [vmem:[#allocation5 + $0x45c] sm:$0xf]
    %v300 = vld [vmem:[#allocation5 + $0x460] sm:$0xff]
    %v301 = vld [vmem:[#allocation5 + $0x468] sm:$0xff]
    %v302 = vld [vmem:[#allocation5 + $0x470] sm:$0xf]
    %v303 = vld [vmem:[#allocation5 + $0x474] sm:$0xff]
    %v304 = vld [vmem:[#allocation5 + $0x47c] sm:$0xff]
    %v305 = vld [vmem:[#allocation5 + $0x484] sm:$0xf]
    %v306 = vld [vmem:[#allocation5 + $0x488] sm:$0xff]
    %v307 = vld [vmem:[#allocation5 + $0x490] sm:$0xff]
    %v308 = vld [vmem:[#allocation5 + $0x498] sm:$0xf]
    %v309 = vld [vmem:[#allocation5 + $0x49c] sm:$0xff]
    %v310 = vld [vmem:[#allocation5 + $0x4a4] sm:$0xff]
    %v311 = vld [vmem:[#allocation5 + $0x4ac] sm:$0xf]
    %v312 = vld [vmem:[#allocation5 + $0x4b0] sm:$0xff]
    %v313 = vld [vmem:[#allocation5 + $0x4b8] sm:$0xff]
    %v314 = vld [vmem:[#allocation5 + $0x4c0] sm:$0xf]
    %v315 = vld [vmem:[#allocation5 + $0x4c4] sm:$0xff]
    %v316 = vld [vmem:[#allocation5 + $0x4cc] sm:$0xff]
    %v317 = vld [vmem:[#allocation5 + $0x4d4] sm:$0xf]
    %v318 = vld [vmem:[#allocation5 + $0x4d8] sm:$0xff]
    %v319 = vld [vmem:[#allocation5 + $0x4e0] sm:$0xff]
    %v320 = vld [vmem:[#allocation5 + $0x4e8] sm:$0xf]
    %v321 = vld [vmem:[#allocation5 + $0x4ec] sm:$0xff]
    %v322 = vld [vmem:[#allocation5 + $0x4f4] sm:$0xff]
    %v323 = vld [vmem:[#allocation5 + $0x4fc] sm:$0xf]
    %v324 = vld [vmem:[#allocation5 + $0x500] sm:$0xff]
    %v325 = vld [vmem:[#allocation5 + $0x508] sm:$0xff]
    %v326 = vld [vmem:[#allocation5 + $0x510] sm:$0xf]
    %v327 = vld [vmem:[#allocation5 + $0x514] sm:$0xff]
    %v328 = vld [vmem:[#allocation5 + $0x51c] sm:$0xff]
    %v329 = vld [vmem:[#allocation5 + $0x524] sm:$0xf]
    %v330 = vld [vmem:[#allocation5 + $0x528] sm:$0xff]
    %v331 = vld [vmem:[#allocation5 + $0x530] sm:$0xff]
    %v332 = vld [vmem:[#allocation5 + $0x538] sm:$0xf]
    %v333 = vld [vmem:[#allocation5 + $0x53c] sm:$0xff]
    %v334 = vld [vmem:[#allocation5 + $0x544] sm:$0xff]
    %v335 = vld [vmem:[#allocation5 + $0x54c] sm:$0xf]
    %v336 = vld [vmem:[#allocation5 + $0x550] sm:$0xff]
    %v337 = vld [vmem:[#allocation5 + $0x558] sm:$0xff]
    %v338 = vld [vmem:[#allocation5 + $0x560] sm:$0xf]
    %v339 = vld [vmem:[#allocation5 + $0x564] sm:$0xff]
    %v340 = vld [vmem:[#allocation5 + $0x56c] sm:$0xff]
    %v341 = vld [vmem:[#allocation5 + $0x574] sm:$0xf]
    %v342 = vld [vmem:[#allocation5 + $0x578] sm:$0xff]
    %v343 = vld [vmem:[#allocation5 + $0x580] sm:$0xff]
    %v344 = vld [vmem:[#allocation5 + $0x588] sm:$0xf]
    %v345 = vld [vmem:[#allocation5 + $0x58c] sm:$0xff]
    %v346 = vld [vmem:[#allocation5 + $0x594] sm:$0xff]
    %v347 = vld [vmem:[#allocation5 + $0x59c] sm:$0xf]
    %v348 = vld [vmem:[#allocation5 + $0x5a0] sm:$0xff]
    %v349 = vld [vmem:[#allocation5 + $0x5a8] sm:$0xff]
    %v350 = vld [vmem:[#allocation5 + $0x5b0] sm:$0xf]
    %v351 = vld [vmem:[#allocation5 + $0x5b4] sm:$0xff]
    %v352 = vld [vmem:[#allocation5 + $0x5bc] sm:$0xff]
    %v353 = vld [vmem:[#allocation5 + $0x5c4] sm:$0xf]
    %v354 = vld [vmem:[#allocation5 + $0x5c8] sm:$0xff]
    %v355 = vld [vmem:[#allocation5 + $0x5d0] sm:$0xff]
    %v356 = vld [vmem:[#allocation5 + $0x5d8] sm:$0xf]
    %v357 = vld [vmem:[#allocation5 + $0x5dc] sm:$0xff]
    %v358 = vld [vmem:[#allocation5 + $0x5e4] sm:$0xff]
    %v359 = vld [vmem:[#allocation5 + $0x5ec] sm:$0xf]
    %v360 = vld [vmem:[#allocation5 + $0x5f0] sm:$0xff]
    %v361 = vld [vmem:[#allocation5 + $0x5f8] sm:$0xff]
    %v362 = vld [vmem:[#allocation5 + $0x600] sm:$0xf]
    %v363 = vld [vmem:[#allocation5 + $0x604] sm:$0xff]
    %v364 = vld [vmem:[#allocation5 + $0x60c] sm:$0xff]
    %v365 = vld [vmem:[#allocation5 + $0x614] sm:$0xf]
    %v366 = vld [vmem:[#allocation5 + $0x618] sm:$0xff]
    %v367 = vld [vmem:[#allocation5 + $0x620] sm:$0xff]
    %v368 = vld [vmem:[#allocation5 + $0x628] sm:$0xf]
    %v369 = vld [vmem:[#allocation5 + $0x62c] sm:$0xff]
    %v370 = vld [vmem:[#allocation5 + $0x634] sm:$0xff]
    %v371 = vld [vmem:[#allocation5 + $0x63c] sm:$0xf]
    %v372 = vld [vmem:[#allocation5 + $0x640] sm:$0xff]
    %v373 = vld [vmem:[#allocation5 + $0x648] sm:$0xff]
    %v374 = vld [vmem:[#allocation5 + $0x650] sm:$0xf]
    %v375 = vld [vmem:[#allocation5 + $0x654] sm:$0xff]
    %v376 = vld [vmem:[#allocation5 + $0x65c] sm:$0xff]
    %v377 = vld [vmem:[#allocation5 + $0x664] sm:$0xf]
    %v378 = vld [vmem:[#allocation5 + $0x668] sm:$0xff]
    %v379 = vld [vmem:[#allocation5 + $0x670] sm:$0xff]
    %v380 = vld [vmem:[#allocation5 + $0x678] sm:$0xf]
    %v381 = vld [vmem:[#allocation5 + $0x67c] sm:$0xff]
    %v382 = vld [vmem:[#allocation5 + $0x684] sm:$0xff]
    %v383 = vld [vmem:[#allocation5 + $0x68c] sm:$0xf]
    %v384 = vld [vmem:[#allocation5 + $0x690] sm:$0xff]
    %v385 = vld [vmem:[#allocation5 + $0x698] sm:$0xff]
    %v386 = vld [vmem:[#allocation5 + $0x6a0] sm:$0xf]
    %v387 = vld [vmem:[#allocation5 + $0x6a4] sm:$0xff]
    %v388 = vld [vmem:[#allocation5 + $0x6ac] sm:$0xff]
    %v389 = vld [vmem:[#allocation5 + $0x6b4] sm:$0xf]
    %v390 = vld [vmem:[#allocation5 + $0x6b8] sm:$0xff]
    %v391 = vld [vmem:[#allocation5 + $0x6c0] sm:$0xff]
    %v392 = vld [vmem:[#allocation5 + $0x6c8] sm:$0xf]
    %v393 = vld [vmem:[#allocation5 + $0x6cc] sm:$0xff]
    %v394 = vld [vmem:[#allocation5 + $0x6d4] sm:$0xff]
    %v395 = vld [vmem:[#allocation5 + $0x6dc] sm:$0xf]
    %v396 = vld [vmem:[#allocation5 + $0x6e0] sm:$0xff]
    %v397 = vld [vmem:[#allocation5 + $0x6e8] sm:$0xff]
    %v398 = vld [vmem:[#allocation5 + $0x6f0] sm:$0xf]
    %v399 = vld [vmem:[#allocation5 + $0x6f4] sm:$0xff]
    %v400 = vld [vmem:[#allocation5 + $0x6fc] sm:$0xff]
    %v401 = vld [vmem:[#allocation5 + $0x704] sm:$0xf]
    %v402 = vld [vmem:[#allocation5 + $0x708] sm:$0xff]
    %v403 = vld [vmem:[#allocation5 + $0x710] sm:$0xff]
    %v404 = vld [vmem:[#allocation5 + $0x718] sm:$0xf]
    %v405 = vld [vmem:[#allocation5 + $0x71c] sm:$0xff]
    %v406 = vld [vmem:[#allocation5 + $0x724] sm:$0xff]
    %v407 = vld [vmem:[#allocation5 + $0x72c] sm:$0xf]
    %v408 = vld [vmem:[#allocation5 + $0x730] sm:$0xff]
    %v409 = vld [vmem:[#allocation5 + $0x738] sm:$0xff]
    %v410 = vld [vmem:[#allocation5 + $0x740] sm:$0xf]
    %v411 = vld [vmem:[#allocation5 + $0x744] sm:$0xff]
    %v412 = vld [vmem:[#allocation5 + $0x74c] sm:$0xff]
    %v413 = vld [vmem:[#allocation5 + $0x754] sm:$0xf]
    %v414 = vld [vmem:[#allocation5 + $0x758] sm:$0xff]
    %v415 = vld [vmem:[#allocation5 + $0x760] sm:$0xff]
    %v416 = vld [vmem:[#allocation5 + $0x768] sm:$0xf]
    %v417 = vld [vmem:[#allocation5 + $0x76c] sm:$0xff]
    %v418 = vld [vmem:[#allocation5 + $0x774] sm:$0xff]
    %v419 = vld [vmem:[#allocation5 + $0x77c] sm:$0xf]
    %v420 = vld [vmem:[%s2] sm:$0x1f]
    %v422 = vlaneseq
    %v423 = vshrl.u32 %v422, 7
    %v424 = vsub.s32 0, %v423
    %v425 = vrot.slane %v420, %v424
    %v426 = vlaneseq
    %v427 = vshrl.u32 %v426, 7
    %v428 = vsub.s32 1, %v427
    %v429 = vrot.slane %v420, %v428
    %v430 = vlaneseq
    %v431 = vshrl.u32 %v430, 7
    %v432 = vsub.s32 2, %v431
    %v433 = vrot.slane %v420, %v432
    %v434 = vlaneseq
    %v435 = vshrl.u32 %v434, 7
    %v436 = vsub.s32 3, %v435
    %v437 = vrot.slane %v420, %v436
    %v438 = vlaneseq
    %v439 = vshrl.u32 %v438, 7
    %v440 = vsub.s32 4, %v439
    %v441 = vrot.slane %v420, %v440
    %v735 = vunpack.c.l.b16 %v132
    %v736 = vunpack.c.h.b16 %v132
    %v737 = vunpack.c.l.b16 %v133
    %v738 = vunpack.c.h.b16 %v133
    %v739 = vunpack.c.l.b16 %v134
    %v740 = vunpack.c.l.b16 %v135
    %v741 = vunpack.c.h.b16 %v135
    %v742 = vunpack.c.l.b16 %v136
    %v743 = vunpack.c.h.b16 %v136
    %v744 = vunpack.c.l.b16 %v137
    %v745 = vunpack.c.l.b16 %v138
    %v746 = vunpack.c.h.b16 %v138
    %v747 = vunpack.c.l.b16 %v139
    %v748 = vunpack.c.h.b16 %v139
    %v749 = vunpack.c.l.b16 %v140
    %v750 = vunpack.c.l.b16 %v141
    %v751 = vunpack.c.h.b16 %v141
    %v752 = vunpack.c.l.b16 %v142
    %v753 = vunpack.c.h.b16 %v142
    %v754 = vunpack.c.l.b16 %v143
    %v755 = vunpack.c.l.b16 %v144
    %v756 = vunpack.c.h.b16 %v144
    %v757 = vunpack.c.l.b16 %v145
    %v758 = vunpack.c.h.b16 %v145
    %v759 = vunpack.c.l.b16 %v146
    %v760 = vunpack.c.l.b16 %v147
    %v761 = vunpack.c.h.b16 %v147
    %v762 = vunpack.c.l.b16 %v148
    %v763 = vunpack.c.h.b16 %v148
    %v764 = vunpack.c.l.b16 %v149
    %v765 = vunpack.c.l.b16 %v150
    %v766 = vunpack.c.h.b16 %v150
    %v767 = vunpack.c.l.b16 %v151
    %v768 = vunpack.c.h.b16 %v151
    %v769 = vunpack.c.l.b16 %v152
    %v770 = vunpack.c.l.b16 %v153
    %v771 = vunpack.c.h.b16 %v153
    %v772 = vunpack.c.l.b16 %v154
    %v773 = vunpack.c.h.b16 %v154
    %v774 = vunpack.c.l.b16 %v155
    %v775 = vunpack.c.l.b16 %v156
    %v776 = vunpack.c.h.b16 %v156
    %v777 = vunpack.c.l.b16 %v157
    %v778 = vunpack.c.h.b16 %v157
    %v779 = vunpack.c.l.b16 %v158
    %v780 = vunpack.c.l.b16 %v159
    %v781 = vunpack.c.h.b16 %v159
    %v782 = vunpack.c.l.b16 %v160
    %v783 = vunpack.c.h.b16 %v160
    %v784 = vunpack.c.l.b16 %v161
    %v785 = vunpack.c.l.b16 %v162
    %v786 = vunpack.c.h.b16 %v162
    %v787 = vunpack.c.l.b16 %v163
    %v788 = vunpack.c.h.b16 %v163
    %v789 = vunpack.c.l.b16 %v164
    %v790 = vunpack.c.l.b16 %v165
    %v791 = vunpack.c.h.b16 %v165
    %v792 = vunpack.c.l.b16 %v166
    %v793 = vunpack.c.h.b16 %v166
    %v794 = vunpack.c.l.b16 %v167
    %v795 = vunpack.c.l.b16 %v168
    %v796 = vunpack.c.h.b16 %v168
    %v797 = vunpack.c.l.b16 %v169
    %v798 = vunpack.c.h.b16 %v169
    %v799 = vunpack.c.l.b16 %v170
    %v800 = vunpack.c.l.b16 %v171
    %v801 = vunpack.c.h.b16 %v171
    %v802 = vunpack.c.l.b16 %v172
    %v803 = vunpack.c.h.b16 %v172
    %v804 = vunpack.c.l.b16 %v173
    %v805 = vunpack.c.l.b16 %v174
    %v806 = vunpack.c.h.b16 %v174
    %v807 = vunpack.c.l.b16 %v175
    %v808 = vunpack.c.h.b16 %v175
    %v809 = vunpack.c.l.b16 %v176
    %v810 = vunpack.c.l.b16 %v177
    %v811 = vunpack.c.h.b16 %v177
    %v812 = vunpack.c.l.b16 %v178
    %v813 = vunpack.c.h.b16 %v178
    %v814 = vunpack.c.l.b16 %v179
    %v815 = vunpack.c.l.b16 %v180
    %v816 = vunpack.c.h.b16 %v180
    %v817 = vunpack.c.l.b16 %v181
    %v818 = vunpack.c.h.b16 %v181
    %v819 = vunpack.c.l.b16 %v182
    %v820 = vunpack.c.l.b16 %v183
    %v821 = vunpack.c.h.b16 %v183
    %v822 = vunpack.c.l.b16 %v184
    %v823 = vunpack.c.h.b16 %v184
    %v824 = vunpack.c.l.b16 %v185
    %v825 = vunpack.c.l.b16 %v186
    %v826 = vunpack.c.h.b16 %v186
    %v827 = vunpack.c.l.b16 %v187
    %v828 = vunpack.c.h.b16 %v187
    %v829 = vunpack.c.l.b16 %v188
    %v830 = vunpack.c.l.b16 %v189
    %v831 = vunpack.c.h.b16 %v189
    %v832 = vunpack.c.l.b16 %v190
    %v833 = vunpack.c.h.b16 %v190
    %v834 = vunpack.c.l.b16 %v191
    %v835 = vunpack.c.l.b16 %v192
    %v836 = vunpack.c.h.b16 %v192
    %v837 = vunpack.c.l.b16 %v193
    %v838 = vunpack.c.h.b16 %v193
    %v839 = vunpack.c.l.b16 %v194
    %v840 = vunpack.c.l.b16 %v195
    %v841 = vunpack.c.h.b16 %v195
    %v842 = vunpack.c.l.b16 %v196
    %v843 = vunpack.c.h.b16 %v196
    %v844 = vunpack.c.l.b16 %v197
    %v845 = vunpack.c.l.b16 %v198
    %v846 = vunpack.c.h.b16 %v198
    %v847 = vunpack.c.l.b16 %v199
    %v848 = vunpack.c.h.b16 %v199
    %v849 = vunpack.c.l.b16 %v200
    %v850 = vunpack.c.l.b16 %v201
    %v851 = vunpack.c.h.b16 %v201
    %v852 = vunpack.c.l.b16 %v202
    %v853 = vunpack.c.h.b16 %v202
    %v854 = vunpack.c.l.b16 %v203
    %v855 = vunpack.c.l.b16 %v204
    %v856 = vunpack.c.h.b16 %v204
    %v857 = vunpack.c.l.b16 %v205
    %v858 = vunpack.c.h.b16 %v205
    %v859 = vunpack.c.l.b16 %v206
    %v860 = vunpack.c.l.b16 %v207
    %v861 = vunpack.c.h.b16 %v207
    %v862 = vunpack.c.l.b16 %v208
    %v863 = vunpack.c.h.b16 %v208
    %v864 = vunpack.c.l.b16 %v209
    %v865 = vunpack.c.l.b16 %v210
    %v866 = vunpack.c.h.b16 %v210
    %v867 = vunpack.c.l.b16 %v211
    %v868 = vunpack.c.h.b16 %v211
    %v869 = vunpack.c.l.b16 %v212
    %v870 = vunpack.c.l.b16 %v213
    %v871 = vunpack.c.h.b16 %v213
    %v872 = vunpack.c.l.b16 %v214
    %v873 = vunpack.c.h.b16 %v214
    %v874 = vunpack.c.l.b16 %v215
    %v875 = vunpack.c.l.b16 %v216
    %v876 = vunpack.c.h.b16 %v216
    %v877 = vunpack.c.l.b16 %v217
    %v878 = vunpack.c.h.b16 %v217
    %v879 = vunpack.c.l.b16 %v218
    %v880 = vunpack.c.l.b16 %v219
    %v881 = vunpack.c.h.b16 %v219
    %v882 = vunpack.c.l.b16 %v220
    %v883 = vunpack.c.h.b16 %v220
    %v884 = vunpack.c.l.b16 %v221
    %v885 = vunpack.c.l.b16 %v222
    %v886 = vunpack.c.h.b16 %v222
    %v887 = vunpack.c.l.b16 %v223
    %v888 = vunpack.c.h.b16 %v223
    %v889 = vunpack.c.l.b16 %v224
    %v890 = vunpack.c.l.b16 %v225
    %v891 = vunpack.c.h.b16 %v225
    %v892 = vunpack.c.l.b16 %v226
    %v893 = vunpack.c.h.b16 %v226
    %v894 = vunpack.c.l.b16 %v227
    %v895 = vunpack.c.l.b16 %v228
    %v896 = vunpack.c.h.b16 %v228
    %v897 = vunpack.c.l.b16 %v229
    %v898 = vunpack.c.h.b16 %v229
    %v899 = vunpack.c.l.b16 %v230
    %v900 = vunpack.c.l.b16 %v231
    %v901 = vunpack.c.h.b16 %v231
    %v902 = vunpack.c.l.b16 %v232
    %v903 = vunpack.c.h.b16 %v232
    %v904 = vunpack.c.l.b16 %v233
    %v905 = vunpack.c.l.b16 %v234
    %v906 = vunpack.c.h.b16 %v234
    %v907 = vunpack.c.l.b16 %v235
    %v908 = vunpack.c.h.b16 %v235
    %v909 = vunpack.c.l.b16 %v236
    %v910 = vunpack.c.l.b16 %v237
    %v911 = vunpack.c.h.b16 %v237
    %v912 = vunpack.c.l.b16 %v238
    %v913 = vunpack.c.h.b16 %v238
    %v914 = vunpack.c.l.b16 %v239
    %v915 = vunpack.c.l.b16 %v240
    %v916 = vunpack.c.h.b16 %v240
    %v917 = vunpack.c.l.b16 %v241
    %v918 = vunpack.c.h.b16 %v241
    %v919 = vunpack.c.l.b16 %v242
    %v920 = vunpack.c.l.b16 %v243
    %v921 = vunpack.c.h.b16 %v243
    %v922 = vunpack.c.l.b16 %v244
    %v923 = vunpack.c.h.b16 %v244
    %v924 = vunpack.c.l.b16 %v245
    %v925 = vunpack.c.l.b16 %v246
    %v926 = vunpack.c.h.b16 %v246
    %v927 = vunpack.c.l.b16 %v247
    %v928 = vunpack.c.h.b16 %v247
    %v929 = vunpack.c.l.b16 %v248
    %v930 = vunpack.c.l.b16 %v249
    %v931 = vunpack.c.h.b16 %v249
    %v932 = vunpack.c.l.b16 %v250
    %v933 = vunpack.c.h.b16 %v250
    %v934 = vunpack.c.l.b16 %v251
    %v935 = vunpack.c.l.b16 %v252
    %v936 = vunpack.c.h.b16 %v252
    %v937 = vunpack.c.l.b16 %v253
    %v938 = vunpack.c.h.b16 %v253
    %v939 = vunpack.c.l.b16 %v254
    %v940 = vunpack.c.l.b16 %v255
    %v941 = vunpack.c.h.b16 %v255
    %v942 = vunpack.c.l.b16 %v256
    %v943 = vunpack.c.h.b16 %v256
    %v944 = vunpack.c.l.b16 %v257
    %v945 = vunpack.c.l.b16 %v258
    %v946 = vunpack.c.h.b16 %v258
    %v947 = vunpack.c.l.b16 %v259
    %v948 = vunpack.c.h.b16 %v259
    %v949 = vunpack.c.l.b16 %v260
    %v950 = vunpack.c.l.b16 %v261
    %v951 = vunpack.c.h.b16 %v261
    %v952 = vunpack.c.l.b16 %v262
    %v953 = vunpack.c.h.b16 %v262
    %v954 = vunpack.c.l.b16 %v263
    %v955 = vunpack.c.l.b16 %v264
    %v956 = vunpack.c.h.b16 %v264
    %v957 = vunpack.c.l.b16 %v265
    %v958 = vunpack.c.h.b16 %v265
    %v959 = vunpack.c.l.b16 %v266
    %v960 = vunpack.c.l.b16 %v267
    %v961 = vunpack.c.h.b16 %v267
    %v962 = vunpack.c.l.b16 %v268
    %v963 = vunpack.c.h.b16 %v268
    %v964 = vunpack.c.l.b16 %v269
    %v965 = vunpack.c.l.b16 %v270
    %v966 = vunpack.c.h.b16 %v270
    %v967 = vunpack.c.l.b16 %v271
    %v968 = vunpack.c.h.b16 %v271
    %v969 = vunpack.c.l.b16 %v272
    %v970 = vunpack.c.l.b16 %v273
    %v971 = vunpack.c.h.b16 %v273
    %v972 = vunpack.c.l.b16 %v274
    %v973 = vunpack.c.h.b16 %v274
    %v974 = vunpack.c.l.b16 %v275
    %v975 = vunpack.c.l.b16 %v276
    %v976 = vunpack.c.h.b16 %v276
    %v977 = vunpack.c.l.b16 %v277
    %v978 = vunpack.c.h.b16 %v277
    %v979 = vunpack.c.l.b16 %v278
    %v980 = vunpack.c.l.b16 %v279
    %v981 = vunpack.c.h.b16 %v279
    %v982 = vunpack.c.l.b16 %v280
    %v983 = vunpack.c.h.b16 %v280
    %v984 = vunpack.c.l.b16 %v281
    %v985 = vunpack.c.l.b16 %v282
    %v986 = vunpack.c.h.b16 %v282
    %v987 = vunpack.c.l.b16 %v283
    %v988 = vunpack.c.h.b16 %v283
    %v989 = vunpack.c.l.b16 %v284
    %v990 = vunpack.c.l.b16 %v285
    %v991 = vunpack.c.h.b16 %v285
    %v992 = vunpack.c.l.b16 %v286
    %v993 = vunpack.c.h.b16 %v286
    %v994 = vunpack.c.l.b16 %v287
    %v995 = vunpack.c.l.b16 %v288
    %v996 = vunpack.c.h.b16 %v288
    %v997 = vunpack.c.l.b16 %v289
    %v998 = vunpack.c.h.b16 %v289
    %v999 = vunpack.c.l.b16 %v290
    %v1000 = vunpack.c.l.b16 %v291
    %v1001 = vunpack.c.h.b16 %v291
    %v1002 = vunpack.c.l.b16 %v292
    %v1003 = vunpack.c.h.b16 %v292
    %v1004 = vunpack.c.l.b16 %v293
    %v1005 = vunpack.c.l.b16 %v294
    %v1006 = vunpack.c.h.b16 %v294
    %v1007 = vunpack.c.l.b16 %v295
    %v1008 = vunpack.c.h.b16 %v295
    %v1009 = vunpack.c.l.b16 %v296
    %v1010 = vunpack.c.l.b16 %v297
    %v1011 = vunpack.c.h.b16 %v297
    %v1012 = vunpack.c.l.b16 %v298
    %v1013 = vunpack.c.h.b16 %v298
    %v1014 = vunpack.c.l.b16 %v299
    %v1015 = vunpack.c.l.b16 %v300
    %v1016 = vunpack.c.h.b16 %v300
    %v1017 = vunpack.c.l.b16 %v301
    %v1018 = vunpack.c.h.b16 %v301
    %v1019 = vunpack.c.l.b16 %v302
    %v1020 = vunpack.c.l.b16 %v303
    %v1021 = vunpack.c.h.b16 %v303
    %v1022 = vunpack.c.l.b16 %v304
    %v1023 = vunpack.c.h.b16 %v304
    %v1024 = vunpack.c.l.b16 %v305
    %v1025 = vunpack.c.l.b16 %v306
    %v1026 = vunpack.c.h.b16 %v306
    %v1027 = vunpack.c.l.b16 %v307
    %v1028 = vunpack.c.h.b16 %v307
    %v1029 = vunpack.c.l.b16 %v308
    %v1030 = vunpack.c.l.b16 %v309
    %v1031 = vunpack.c.h.b16 %v309
    %v1032 = vunpack.c.l.b16 %v310
    %v1033 = vunpack.c.h.b16 %v310
    %v1034 = vunpack.c.l.b16 %v311
    %v1035 = vunpack.c.l.b16 %v312
    %v1036 = vunpack.c.h.b16 %v312
    %v1037 = vunpack.c.l.b16 %v313
    %v1038 = vunpack.c.h.b16 %v313
    %v1039 = vunpack.c.l.b16 %v314
    %v1040 = vunpack.c.l.b16 %v315
    %v1041 = vunpack.c.h.b16 %v315
    %v1042 = vunpack.c.l.b16 %v316
    %v1043 = vunpack.c.h.b16 %v316
    %v1044 = vunpack.c.l.b16 %v317
    %v1045 = vunpack.c.l.b16 %v318
    %v1046 = vunpack.c.h.b16 %v318
    %v1047 = vunpack.c.l.b16 %v319
    %v1048 = vunpack.c.h.b16 %v319
    %v1049 = vunpack.c.l.b16 %v320
    %v1050 = vunpack.c.l.b16 %v321
    %v1051 = vunpack.c.h.b16 %v321
    %v1052 = vunpack.c.l.b16 %v322
    %v1053 = vunpack.c.h.b16 %v322
    %v1054 = vunpack.c.l.b16 %v323
    %v1055 = vunpack.c.l.b16 %v324
    %v1056 = vunpack.c.h.b16 %v324
    %v1057 = vunpack.c.l.b16 %v325
    %v1058 = vunpack.c.h.b16 %v325
    %v1059 = vunpack.c.l.b16 %v326
    %v1060 = vunpack.c.l.b16 %v327
    %v1061 = vunpack.c.h.b16 %v327
    %v1062 = vunpack.c.l.b16 %v328
    %v1063 = vunpack.c.h.b16 %v328
    %v1064 = vunpack.c.l.b16 %v329
    %v1065 = vunpack.c.l.b16 %v330
    %v1066 = vunpack.c.h.b16 %v330
    %v1067 = vunpack.c.l.b16 %v331
    %v1068 = vunpack.c.h.b16 %v331
    %v1069 = vunpack.c.l.b16 %v332
    %v1070 = vunpack.c.l.b16 %v333
    %v1071 = vunpack.c.h.b16 %v333
    %v1072 = vunpack.c.l.b16 %v334
    %v1073 = vunpack.c.h.b16 %v334
    %v1074 = vunpack.c.l.b16 %v335
    %v1075 = vunpack.c.l.b16 %v336
    %v1076 = vunpack.c.h.b16 %v336
    %v1077 = vunpack.c.l.b16 %v337
    %v1078 = vunpack.c.h.b16 %v337
    %v1079 = vunpack.c.l.b16 %v338
    %v1080 = vunpack.c.l.b16 %v339
    %v1081 = vunpack.c.h.b16 %v339
    %v1082 = vunpack.c.l.b16 %v340
    %v1083 = vunpack.c.h.b16 %v340
    %v1084 = vunpack.c.l.b16 %v341
    %v1085 = vunpack.c.l.b16 %v342
    %v1086 = vunpack.c.h.b16 %v342
    %v1087 = vunpack.c.l.b16 %v343
    %v1088 = vunpack.c.h.b16 %v343
    %v1089 = vunpack.c.l.b16 %v344
    %v1090 = vunpack.c.l.b16 %v345
    %v1091 = vunpack.c.h.b16 %v345
    %v1092 = vunpack.c.l.b16 %v346
    %v1093 = vunpack.c.h.b16 %v346
    %v1094 = vunpack.c.l.b16 %v347
    %v1095 = vunpack.c.l.b16 %v348
    %v1096 = vunpack.c.h.b16 %v348
    %v1097 = vunpack.c.l.b16 %v349
    %v1098 = vunpack.c.h.b16 %v349
    %v1099 = vunpack.c.l.b16 %v350
    %v1100 = vunpack.c.l.b16 %v351
    %v1101 = vunpack.c.h.b16 %v351
    %v1102 = vunpack.c.l.b16 %v352
    %v1103 = vunpack.c.h.b16 %v352
    %v1104 = vunpack.c.l.b16 %v353
    %v1105 = vunpack.c.l.b16 %v354
    %v1106 = vunpack.c.h.b16 %v354
    %v1107 = vunpack.c.l.b16 %v355
    %v1108 = vunpack.c.h.b16 %v355
    %v1109 = vunpack.c.l.b16 %v356
    %v1110 = vunpack.c.l.b16 %v357
    %v1111 = vunpack.c.h.b16 %v357
    %v1112 = vunpack.c.l.b16 %v358
    %v1113 = vunpack.c.h.b16 %v358
    %v1114 = vunpack.c.l.b16 %v359
    %v1115 = vunpack.c.l.b16 %v360
    %v1116 = vunpack.c.h.b16 %v360
    %v1117 = vunpack.c.l.b16 %v361
    %v1118 = vunpack.c.h.b16 %v361
    %v1119 = vunpack.c.l.b16 %v362
    %v1120 = vunpack.c.l.b16 %v363
    %v1121 = vunpack.c.h.b16 %v363
    %v1122 = vunpack.c.l.b16 %v364
    %v1123 = vunpack.c.h.b16 %v364
    %v1124 = vunpack.c.l.b16 %v365
    %v1125 = vunpack.c.l.b16 %v366
    %v1126 = vunpack.c.h.b16 %v366
    %v1127 = vunpack.c.l.b16 %v367
    %v1128 = vunpack.c.h.b16 %v367
    %v1129 = vunpack.c.l.b16 %v368
    %v1130 = vunpack.c.l.b16 %v369
    %v1131 = vunpack.c.h.b16 %v369
    %v1132 = vunpack.c.l.b16 %v370
    %v1133 = vunpack.c.h.b16 %v370
    %v1134 = vunpack.c.l.b16 %v371
    %v1135 = vunpack.c.l.b16 %v372
    %v1136 = vunpack.c.h.b16 %v372
    %v1137 = vunpack.c.l.b16 %v373
    %v1138 = vunpack.c.h.b16 %v373
    %v1139 = vunpack.c.l.b16 %v374
    %v1140 = vunpack.c.l.b16 %v375
    %v1141 = vunpack.c.h.b16 %v375
    %v1142 = vunpack.c.l.b16 %v376
    %v1143 = vunpack.c.h.b16 %v376
    %v1144 = vunpack.c.l.b16 %v377
    %v1145 = vunpack.c.l.b16 %v378
    %v1146 = vunpack.c.h.b16 %v378
    %v1147 = vunpack.c.l.b16 %v379
    %v1148 = vunpack.c.h.b16 %v379
    %v1149 = vunpack.c.l.b16 %v380
    %v1150 = vunpack.c.l.b16 %v381
    %v1151 = vunpack.c.h.b16 %v381
    %v1152 = vunpack.c.l.b16 %v382
    %v1153 = vunpack.c.h.b16 %v382
    %v1154 = vunpack.c.l.b16 %v383
    %v1155 = vunpack.c.l.b16 %v384
    %v1156 = vunpack.c.h.b16 %v384
    %v1157 = vunpack.c.l.b16 %v385
    %v1158 = vunpack.c.h.b16 %v385
    %v1159 = vunpack.c.l.b16 %v386
    %v1160 = vunpack.c.l.b16 %v387
    %v1161 = vunpack.c.h.b16 %v387
    %v1162 = vunpack.c.l.b16 %v388
    %v1163 = vunpack.c.h.b16 %v388
    %v1164 = vunpack.c.l.b16 %v389
    %v1165 = vunpack.c.l.b16 %v390
    %v1166 = vunpack.c.h.b16 %v390
    %v1167 = vunpack.c.l.b16 %v391
    %v1168 = vunpack.c.h.b16 %v391
    %v1169 = vunpack.c.l.b16 %v392
    %v1170 = vunpack.c.l.b16 %v393
    %v1171 = vunpack.c.h.b16 %v393
    %v1172 = vunpack.c.l.b16 %v394
    %v1173 = vunpack.c.h.b16 %v394
    %v1174 = vunpack.c.l.b16 %v395
    %v1175 = vunpack.c.l.b16 %v396
    %v1176 = vunpack.c.h.b16 %v396
    %v1177 = vunpack.c.l.b16 %v397
    %v1178 = vunpack.c.h.b16 %v397
    %v1179 = vunpack.c.l.b16 %v398
    %v1180 = vunpack.c.l.b16 %v399
    %v1181 = vunpack.c.h.b16 %v399
    %v1182 = vunpack.c.l.b16 %v400
    %v1183 = vunpack.c.h.b16 %v400
    %v1184 = vunpack.c.l.b16 %v401
    %v1185 = vunpack.c.l.b16 %v402
    %v1186 = vunpack.c.h.b16 %v402
    %v1187 = vunpack.c.l.b16 %v403
    %v1188 = vunpack.c.h.b16 %v403
    %v1189 = vunpack.c.l.b16 %v404
    %v1190 = vunpack.c.l.b16 %v405
    %v1191 = vunpack.c.h.b16 %v405
    %v1192 = vunpack.c.l.b16 %v406
    %v1193 = vunpack.c.h.b16 %v406
    %v1194 = vunpack.c.l.b16 %v407
    %v1195 = vunpack.c.l.b16 %v408
    %v1196 = vunpack.c.h.b16 %v408
    %v1197 = vunpack.c.l.b16 %v409
    %v1198 = vunpack.c.h.b16 %v409
    %v1199 = vunpack.c.l.b16 %v410
    %v1200 = vunpack.c.l.b16 %v411
    %v1201 = vunpack.c.h.b16 %v411
    %v1202 = vunpack.c.l.b16 %v412
    %v1203 = vunpack.c.h.b16 %v412
    %v1204 = vunpack.c.l.b16 %v413
    %v1205 = vunpack.c.l.b16 %v414
    %v1206 = vunpack.c.h.b16 %v414
    %v1207 = vunpack.c.l.b16 %v415
    %v1208 = vunpack.c.h.b16 %v415
    %v1209 = vunpack.c.l.b16 %v416
    %v1210 = vunpack.c.l.b16 %v417
    %v1211 = vunpack.c.h.b16 %v417
    %v1212 = vunpack.c.l.b16 %v418
    %v1213 = vunpack.c.h.b16 %v418
    %v1214 = vunpack.c.l.b16 %v419
    %v1215 = vpack.c.b16 %v740, %v735
    %v1216 = vpack.c.b16 %v741, %v736
    %v1217 = vpack.c.b16 %v742, %v737
    %v1218 = vpack.c.b16 %v743, %v738
    %v1219 = vpack.c.b16 %v744, %v739
    %v1220 = vpack.c.b16 %v750, %v745
    %v1221 = vpack.c.b16 %v751, %v746
    %v1222 = vpack.c.b16 %v752, %v747
    %v1223 = vpack.c.b16 %v753, %v748
    %v1224 = vpack.c.b16 %v754, %v749
    %v1225 = vpack.c.b16 %v760, %v755
    %v1226 = vpack.c.b16 %v761, %v756
    %v1227 = vpack.c.b16 %v762, %v757
    %v1228 = vpack.c.b16 %v763, %v758
    %v1229 = vpack.c.b16 %v764, %v759
    %v1230 = vpack.c.b16 %v770, %v765
    %v1231 = vpack.c.b16 %v771, %v766
    %v1232 = vpack.c.b16 %v772, %v767
    %v1233 = vpack.c.b16 %v773, %v768
    %v1234 = vpack.c.b16 %v774, %v769
    %v1235 = vpack.c.b16 %v780, %v775
    %v1236 = vpack.c.b16 %v781, %v776
    %v1237 = vpack.c.b16 %v782, %v777
    %v1238 = vpack.c.b16 %v783, %v778
    %v1239 = vpack.c.b16 %v784, %v779
    %v1240 = vpack.c.b16 %v790, %v785
    %v1241 = vpack.c.b16 %v791, %v786
    %v1242 = vpack.c.b16 %v792, %v787
    %v1243 = vpack.c.b16 %v793, %v788
    %v1244 = vpack.c.b16 %v794, %v789
    %v1245 = vpack.c.b16 %v800, %v795
    %v1246 = vpack.c.b16 %v801, %v796
    %v1247 = vpack.c.b16 %v802, %v797
    %v1248 = vpack.c.b16 %v803, %v798
    %v1249 = vpack.c.b16 %v804, %v799
    %v1250 = vpack.c.b16 %v810, %v805
    %v1251 = vpack.c.b16 %v811, %v806
    %v1252 = vpack.c.b16 %v812, %v807
    %v1253 = vpack.c.b16 %v813, %v808
    %v1254 = vpack.c.b16 %v814, %v809
    %v1255 = vpack.c.b16 %v820, %v815
    %v1256 = vpack.c.b16 %v821, %v816
    %v1257 = vpack.c.b16 %v822, %v817
    %v1258 = vpack.c.b16 %v823, %v818
    %v1259 = vpack.c.b16 %v824, %v819
    %v1260 = vpack.c.b16 %v830, %v825
    %v1261 = vpack.c.b16 %v831, %v826
    %v1262 = vpack.c.b16 %v832, %v827
    %v1263 = vpack.c.b16 %v833, %v828
    %v1264 = vpack.c.b16 %v834, %v829
    %v1265 = vpack.c.b16 %v840, %v835
    %v1266 = vpack.c.b16 %v841, %v836
    %v1267 = vpack.c.b16 %v842, %v837
    %v1268 = vpack.c.b16 %v843, %v838
    %v1269 = vpack.c.b16 %v844, %v839
    %v1270 = vpack.c.b16 %v850, %v845
    %v1271 = vpack.c.b16 %v851, %v846
    %v1272 = vpack.c.b16 %v852, %v847
    %v1273 = vpack.c.b16 %v853, %v848
    %v1274 = vpack.c.b16 %v854, %v849
    %v1275 = vpack.c.b16 %v860, %v855
    %v1276 = vpack.c.b16 %v861, %v856
    %v1277 = vpack.c.b16 %v862, %v857
    %v1278 = vpack.c.b16 %v863, %v858
    %v1279 = vpack.c.b16 %v864, %v859
    %v1280 = vpack.c.b16 %v870, %v865
    %v1281 = vpack.c.b16 %v871, %v866
    %v1282 = vpack.c.b16 %v872, %v867
    %v1283 = vpack.c.b16 %v873, %v868
    %v1284 = vpack.c.b16 %v874, %v869
    %v1285 = vpack.c.b16 %v880, %v875
    %v1286 = vpack.c.b16 %v881, %v876
    %v1287 = vpack.c.b16 %v882, %v877
    %v1288 = vpack.c.b16 %v883, %v878
    %v1289 = vpack.c.b16 %v884, %v879
    %v1290 = vpack.c.b16 %v890, %v885
    %v1291 = vpack.c.b16 %v891, %v886
    %v1292 = vpack.c.b16 %v892, %v887
    %v1293 = vpack.c.b16 %v893, %v888
    %v1294 = vpack.c.b16 %v894, %v889
    %v1295 = vpack.c.b16 %v900, %v895
    %v1296 = vpack.c.b16 %v901, %v896
    %v1297 = vpack.c.b16 %v902, %v897
    %v1298 = vpack.c.b16 %v903, %v898
    %v1299 = vpack.c.b16 %v904, %v899
    %v1300 = vpack.c.b16 %v910, %v905
    %v1301 = vpack.c.b16 %v911, %v906
    %v1302 = vpack.c.b16 %v912, %v907
    %v1303 = vpack.c.b16 %v913, %v908
    %v1304 = vpack.c.b16 %v914, %v909
    %v1305 = vpack.c.b16 %v920, %v915
    %v1306 = vpack.c.b16 %v921, %v916
    %v1307 = vpack.c.b16 %v922, %v917
    %v1308 = vpack.c.b16 %v923, %v918
    %v1309 = vpack.c.b16 %v924, %v919
    %v1310 = vpack.c.b16 %v930, %v925
    %v1311 = vpack.c.b16 %v931, %v926
    %v1312 = vpack.c.b16 %v932, %v927
    %v1313 = vpack.c.b16 %v933, %v928
    %v1314 = vpack.c.b16 %v934, %v929
    %v1315 = vpack.c.b16 %v940, %v935
    %v1316 = vpack.c.b16 %v941, %v936
    %v1317 = vpack.c.b16 %v942, %v937
    %v1318 = vpack.c.b16 %v943, %v938
    %v1319 = vpack.c.b16 %v944, %v939
    %v1320 = vpack.c.b16 %v950, %v945
    %v1321 = vpack.c.b16 %v951, %v946
    %v1322 = vpack.c.b16 %v952, %v947
    %v1323 = vpack.c.b16 %v953, %v948
    %v1324 = vpack.c.b16 %v954, %v949
    %v1325 = vpack.c.b16 %v960, %v955
    %v1326 = vpack.c.b16 %v961, %v956
    %v1327 = vpack.c.b16 %v962, %v957
    %v1328 = vpack.c.b16 %v963, %v958
    %v1329 = vpack.c.b16 %v964, %v959
    %v1330 = vpack.c.b16 %v970, %v965
    %v1331 = vpack.c.b16 %v971, %v966
    %v1332 = vpack.c.b16 %v972, %v967
    %v1333 = vpack.c.b16 %v973, %v968
    %v1334 = vpack.c.b16 %v974, %v969
    %v1335 = vpack.c.b16 %v980, %v975
    %v1336 = vpack.c.b16 %v981, %v976
    %v1337 = vpack.c.b16 %v982, %v977
    %v1338 = vpack.c.b16 %v983, %v978
    %v1339 = vpack.c.b16 %v984, %v979
    %v1340 = vpack.c.b16 %v990, %v985
    %v1341 = vpack.c.b16 %v991, %v986
    %v1342 = vpack.c.b16 %v992, %v987
    %v1343 = vpack.c.b16 %v993, %v988
    %v1344 = vpack.c.b16 %v994, %v989
    %v1345 = vpack.c.b16 %v1000, %v995
    %v1346 = vpack.c.b16 %v1001, %v996
    %v1347 = vpack.c.b16 %v1002, %v997
    %v1348 = vpack.c.b16 %v1003, %v998
    %v1349 = vpack.c.b16 %v1004, %v999
    %v1350 = vpack.c.b16 %v1010, %v1005
    %v1351 = vpack.c.b16 %v1011, %v1006
    %v1352 = vpack.c.b16 %v1012, %v1007
    %v1353 = vpack.c.b16 %v1013, %v1008
    %v1354 = vpack.c.b16 %v1014, %v1009
    %v1355 = vpack.c.b16 %v1020, %v1015
    %v1356 = vpack.c.b16 %v1021, %v1016
    %v1357 = vpack.c.b16 %v1022, %v1017
    %v1358 = vpack.c.b16 %v1023, %v1018
    %v1359 = vpack.c.b16 %v1024, %v1019
    %v1360 = vpack.c.b16 %v1030, %v1025
    %v1361 = vpack.c.b16 %v1031, %v1026
    %v1362 = vpack.c.b16 %v1032, %v1027
    %v1363 = vpack.c.b16 %v1033, %v1028
    %v1364 = vpack.c.b16 %v1034, %v1029
    %v1365 = vpack.c.b16 %v1040, %v1035
    %v1366 = vpack.c.b16 %v1041, %v1036
    %v1367 = vpack.c.b16 %v1042, %v1037
    %v1368 = vpack.c.b16 %v1043, %v1038
    %v1369 = vpack.c.b16 %v1044, %v1039
    %v1370 = vpack.c.b16 %v1050, %v1045
    %v1371 = vpack.c.b16 %v1051, %v1046
    %v1372 = vpack.c.b16 %v1052, %v1047
    %v1373 = vpack.c.b16 %v1053, %v1048
    %v1374 = vpack.c.b16 %v1054, %v1049
    %v1375 = vpack.c.b16 %v1060, %v1055
    %v1376 = vpack.c.b16 %v1061, %v1056
    %v1377 = vpack.c.b16 %v1062, %v1057
    %v1378 = vpack.c.b16 %v1063, %v1058
    %v1379 = vpack.c.b16 %v1064, %v1059
    %v1380 = vpack.c.b16 %v1070, %v1065
    %v1381 = vpack.c.b16 %v1071, %v1066
    %v1382 = vpack.c.b16 %v1072, %v1067
    %v1383 = vpack.c.b16 %v1073, %v1068
    %v1384 = vpack.c.b16 %v1074, %v1069
    %v1385 = vpack.c.b16 %v1080, %v1075
    %v1386 = vpack.c.b16 %v1081, %v1076
    %v1387 = vpack.c.b16 %v1082, %v1077
    %v1388 = vpack.c.b16 %v1083, %v1078
    %v1389 = vpack.c.b16 %v1084, %v1079
    %v1390 = vpack.c.b16 %v1090, %v1085
    %v1391 = vpack.c.b16 %v1091, %v1086
    %v1392 = vpack.c.b16 %v1092, %v1087
    %v1393 = vpack.c.b16 %v1093, %v1088
    %v1394 = vpack.c.b16 %v1094, %v1089
    %v1395 = vpack.c.b16 %v1100, %v1095
    %v1396 = vpack.c.b16 %v1101, %v1096
    %v1397 = vpack.c.b16 %v1102, %v1097
    %v1398 = vpack.c.b16 %v1103, %v1098
    %v1399 = vpack.c.b16 %v1104, %v1099
    %v1400 = vpack.c.b16 %v1110, %v1105
    %v1401 = vpack.c.b16 %v1111, %v1106
    %v1402 = vpack.c.b16 %v1112, %v1107
    %v1403 = vpack.c.b16 %v1113, %v1108
    %v1404 = vpack.c.b16 %v1114, %v1109
    %v1405 = vpack.c.b16 %v1120, %v1115
    %v1406 = vpack.c.b16 %v1121, %v1116
    %v1407 = vpack.c.b16 %v1122, %v1117
    %v1408 = vpack.c.b16 %v1123, %v1118
    %v1409 = vpack.c.b16 %v1124, %v1119
    %v1410 = vpack.c.b16 %v1130, %v1125
    %v1411 = vpack.c.b16 %v1131, %v1126
    %v1412 = vpack.c.b16 %v1132, %v1127
    %v1413 = vpack.c.b16 %v1133, %v1128
    %v1414 = vpack.c.b16 %v1134, %v1129
    %v1415 = vpack.c.b16 %v1140, %v1135
    %v1416 = vpack.c.b16 %v1141, %v1136
    %v1417 = vpack.c.b16 %v1142, %v1137
    %v1418 = vpack.c.b16 %v1143, %v1138
    %v1419 = vpack.c.b16 %v1144, %v1139
    %v1420 = vpack.c.b16 %v1150, %v1145
    %v1421 = vpack.c.b16 %v1151, %v1146
    %v1422 = vpack.c.b16 %v1152, %v1147
    %v1423 = vpack.c.b16 %v1153, %v1148
    %v1424 = vpack.c.b16 %v1154, %v1149
    %v1425 = vpack.c.b16 %v1160, %v1155
    %v1426 = vpack.c.b16 %v1161, %v1156
    %v1427 = vpack.c.b16 %v1162, %v1157
    %v1428 = vpack.c.b16 %v1163, %v1158
    %v1429 = vpack.c.b16 %v1164, %v1159
    %v1430 = vpack.c.b16 %v1170, %v1165
    %v1431 = vpack.c.b16 %v1171, %v1166
    %v1432 = vpack.c.b16 %v1172, %v1167
    %v1433 = vpack.c.b16 %v1173, %v1168
    %v1434 = vpack.c.b16 %v1174, %v1169
    %v1435 = vpack.c.b16 %v1180, %v1175
    %v1436 = vpack.c.b16 %v1181, %v1176
    %v1437 = vpack.c.b16 %v1182, %v1177
    %v1438 = vpack.c.b16 %v1183, %v1178
    %v1439 = vpack.c.b16 %v1184, %v1179
    %v1440 = vpack.c.b16 %v1190, %v1185
    %v1441 = vpack.c.b16 %v1191, %v1186
    %v1442 = vpack.c.b16 %v1192, %v1187
    %v1443 = vpack.c.b16 %v1193, %v1188
    %v1444 = vpack.c.b16 %v1194, %v1189
    %v1445 = vpack.c.b16 %v1200, %v1195
    %v1446 = vpack.c.b16 %v1201, %v1196
    %v1447 = vpack.c.b16 %v1202, %v1197
    %v1448 = vpack.c.b16 %v1203, %v1198
    %v1449 = vpack.c.b16 %v1204, %v1199
    %v1450 = vpack.c.b16 %v1210, %v1205
    %v1451 = vpack.c.b16 %v1211, %v1206
    %v1452 = vpack.c.b16 %v1212, %v1207
    %v1453 = vpack.c.b16 %v1213, %v1208
    %v1454 = vpack.c.b16 %v1214, %v1209
    %1695 = vmatprep.subr.bf16.mxu0 %v1216
    %1696 = vmatpush1.bf16.msra.mxu0 %v1215
    %1697 = vmatprep.subr.bf16.mxu0 %v1221
    %1698 = vmatpush1.bf16.msra.mxu0 %v1220
    %1699 = vmatprep.subr.bf16.mxu0 %v1226
    %1700 = vmatpush1.bf16.msra.mxu0 %v1225
    %1701 = vmatprep.subr.bf16.mxu0 %v1231
    %1702 = vmatpush1.bf16.msra.mxu0 %v1230
    %1703 = vmatprep.subr.bf16.mxu0 %v1236
    %1704 = vmatpush1.bf16.msra.mxu0 %v1235
    %1705 = vmatprep.subr.bf16.mxu0 %v1241
    %1706 = vmatpush1.bf16.msra.mxu0 %v1240
    %1707 = vmatprep.subr.bf16.mxu0 %v1246
    %1708 = vmatpush1.bf16.msra.mxu0 %v1245
    %1709 = vmatprep.subr.bf16.mxu0 %v1251
    %1710 = vmatpush1.bf16.msra.mxu0 %v1250
    %1711 = vmatprep.subr.bf16.mxu0 %v1256
    %1712 = vmatpush1.bf16.msra.mxu0 %v1255
    %1713 = vmatprep.subr.bf16.mxu0 %v1261
    %1714 = vmatpush1.bf16.msra.mxu0 %v1260
    %1715 = vmatprep.subr.bf16.mxu0 %v1266
    %1716 = vmatpush1.bf16.msra.mxu0 %v1265
    %1717 = vmatprep.subr.bf16.mxu0 %v1271
    %1718 = vmatpush1.bf16.msra.mxu0 %v1270
    %1719 = vmatprep.subr.bf16.mxu0 %v1276
    %1720 = vmatpush1.bf16.msra.mxu0 %v1275
    %1721 = vmatprep.subr.bf16.mxu0 %v1281
    %1722 = vmatpush1.bf16.msra.mxu0 %v1280
    %1723 = vmatprep.subr.bf16.mxu0 %v1286
    %1724 = vmatpush1.bf16.msra.mxu0 %v1285
    %1725 = vmatprep.subr.bf16.mxu0 %v1291
    %1726 = vmatpush1.bf16.msra.mxu0 %v1290
    %1727 = vmatprep.mubr.bf16.mxu0 %v127
    %1728 = vmatmul.mubr.bf16.gmra.mrb[0].mxu0 %v126
    %v1729 = vpop.f32.mrb[0].mxu0
    %v1730 = vadd.f32 %v425, %v1729
    %v1731 = vpop.f32.mrb[0].mxu0
    %v1732 = vadd.f32 %v429, %v1731
    %v1733 = vpop.f32.mrb[0].mxu0
    %v1734 = vpop.f32.mrb[0].mxu0
    %1735 = vdwg.mxu0
    %1736 = vmatprep.subr.bf16.mxu0 %v1296
    %1737 = vmatpush1.bf16.msra.mxu0 %v1295
    %1738 = vmatprep.subr.bf16.mxu0 %v1301
    %1739 = vmatpush1.bf16.msra.mxu0 %v1300
    %1740 = vmatprep.subr.bf16.mxu0 %v1306
    %1741 = vmatpush1.bf16.msra.mxu0 %v1305
    %1742 = vmatprep.subr.bf16.mxu0 %v1311
    %1743 = vmatpush1.bf16.msra.mxu0 %v1310
    %1744 = vmatprep.subr.bf16.mxu0 %v1316
    %1745 = vmatpush1.bf16.msra.mxu0 %v1315
    %1746 = vmatprep.subr.bf16.mxu0 %v1321
    %1747 = vmatpush1.bf16.msra.mxu0 %v1320
    %1748 = vmatprep.subr.bf16.mxu0 %v1326
    %1749 = vmatpush1.bf16.msra.mxu0 %v1325
    %1750 = vmatprep.subr.bf16.mxu0 %v1331
    %1751 = vmatpush1.bf16.msra.mxu0 %v1330
    %1752 = vmatprep.subr.bf16.mxu0 %v1336
    %1753 = vmatpush1.bf16.msra.mxu0 %v1335
    %1754 = vmatprep.subr.bf16.mxu0 %v1341
    %1755 = vmatpush1.bf16.msra.mxu0 %v1340
    %1756 = vmatprep.subr.bf16.mxu0 %v1346
    %1757 = vmatpush1.bf16.msra.mxu0 %v1345
    %1758 = vmatprep.subr.bf16.mxu0 %v1351
    %1759 = vmatpush1.bf16.msra.mxu0 %v1350
    %1760 = vmatprep.subr.bf16.mxu0 %v1356
    %1761 = vmatpush1.bf16.msra.mxu0 %v1355
    %1762 = vmatprep.subr.bf16.mxu0 %v1361
    %1763 = vmatpush1.bf16.msra.mxu0 %v1360
    %1764 = vmatprep.subr.bf16.mxu0 %v1366
    %1765 = vmatpush1.bf16.msra.mxu0 %v1365
    %1766 = vmatprep.subr.bf16.mxu0 %v1371
    %1767 = vmatpush1.bf16.msra.mxu0 %v1370
    %1768 = vmatprep.mubr.bf16.mxu0 %v129
    %1769 = vmatmul.mubr.bf16.gmra.mrb[0].mxu0 %v128
    %v1770 = vpop.f32.mrb[0].mxu0
    %v1771 = vadd.f32 %v1730, %v1770
    %v1772 = vpop.f32.mrb[0].mxu0
    %v1773 = vadd.f32 %v1732, %v1772
    %v1774 = vpop.f32.mrb[0].mxu0
    %v1775 = vpop.f32.mrb[0].mxu0
    %1776 = vdwg.mxu0
    %1777 = vmatprep.subr.bf16.mxu0 %v1376
    %1778 = vmatpush1.bf16.msra.mxu0 %v1375
    %1779 = vmatprep.subr.bf16.mxu0 %v1381
    %1780 = vmatpush1.bf16.msra.mxu0 %v1380
    %1781 = vmatprep.subr.bf16.mxu0 %v1386
    %1782 = vmatpush1.bf16.msra.mxu0 %v1385
    %1783 = vmatprep.subr.bf16.mxu0 %v1391
    %1784 = vmatpush1.bf16.msra.mxu0 %v1390
    %1785 = vmatprep.subr.bf16.mxu0 %v1396
    %1786 = vmatpush1.bf16.msra.mxu0 %v1395
    %1787 = vmatprep.subr.bf16.mxu0 %v1401
    %1788 = vmatpush1.bf16.msra.mxu0 %v1400
    %1789 = vmatprep.subr.bf16.mxu0 %v1406
    %1790 = vmatpush1.bf16.msra.mxu0 %v1405
    %1791 = vmatprep.subr.bf16.mxu0 %v1411
    %1792 = vmatpush1.bf16.msra.mxu0 %v1410
    %1793 = vmatprep.subr.bf16.mxu0 %v1416
    %1794 = vmatpush1.bf16.msra.mxu0 %v1415
    %1795 = vmatprep.subr.bf16.mxu0 %v1421
    %1796 = vmatpush1.bf16.msra.mxu0 %v1420
    %1797 = vmatprep.subr.bf16.mxu0 %v1426
    %1798 = vmatpush1.bf16.msra.mxu0 %v1425
    %1799 = vmatprep.subr.bf16.mxu0 %v1431
    %1800 = vmatpush1.bf16.msra.mxu0 %v1430
    %1801 = vmatprep.subr.bf16.mxu0 %v1436
    %1802 = vmatpush1.bf16.msra.mxu0 %v1435
    %1803 = vmatprep.subr.bf16.mxu0 %v1441
    %1804 = vmatpush1.bf16.msra.mxu0 %v1440
    %1805 = vmatprep.subr.bf16.mxu0 %v1446
    %1806 = vmatpush1.bf16.msra.mxu0 %v1445
    %1807 = vmatprep.subr.bf16.mxu0 %v1451
    %1808 = vmatpush1.bf16.msra.mxu0 %v1450
    %1809 = vmatprep.mubr.bf16.mxu0 %v131
    %1810 = vmatmul.mubr.bf16.gmra.mrb[0].mxu0 %v130
    %v1811 = vpop.f32.mrb[0].mxu0
    %v1812 = vadd.f32 %v1771, %v1811
    %v1813 = vpop.f32.mrb[0].mxu0
    %v1814 = vadd.f32 %v1773, %v1813
    %v1815 = vpop.f32.mrb[0].mxu0
    %v1816 = vpop.f32.mrb[0].mxu0
    %1817 = vdwg.mxu0
    %1818 = vmatprep.subr.bf16.mxu0 %v1218
    %1819 = vmatpush1.bf16.msra.mxu0 %v1217
    %1820 = vmatprep.subr.bf16.mxu0 %v1223
    %1821 = vmatpush1.bf16.msra.mxu0 %v1222
    %1822 = vmatprep.subr.bf16.mxu0 %v1228
    %1823 = vmatpush1.bf16.msra.mxu0 %v1227
    %1824 = vmatprep.subr.bf16.mxu0 %v1233
    %1825 = vmatpush1.bf16.msra.mxu0 %v1232
    %1826 = vmatprep.subr.bf16.mxu0 %v1238
    %1827 = vmatpush1.bf16.msra.mxu0 %v1237
    %1828 = vmatprep.subr.bf16.mxu0 %v1243
    %1829 = vmatpush1.bf16.msra.mxu0 %v1242
    %1830 = vmatprep.subr.bf16.mxu0 %v1248
    %1831 = vmatpush1.bf16.msra.mxu0 %v1247
    %1832 = vmatprep.subr.bf16.mxu0 %v1253
    %1833 = vmatpush1.bf16.msra.mxu0 %v1252
    %1834 = vmatprep.subr.bf16.mxu0 %v1258
    %1835 = vmatpush1.bf16.msra.mxu0 %v1257
    %1836 = vmatprep.subr.bf16.mxu0 %v1263
    %1837 = vmatpush1.bf16.msra.mxu0 %v1262
    %1838 = vmatprep.subr.bf16.mxu0 %v1268
    %1839 = vmatpush1.bf16.msra.mxu0 %v1267
    %1840 = vmatprep.subr.bf16.mxu0 %v1273
    %1841 = vmatpush1.bf16.msra.mxu0 %v1272
    %1842 = vmatprep.subr.bf16.mxu0 %v1278
    %1843 = vmatpush1.bf16.msra.mxu0 %v1277
    %1844 = vmatprep.subr.bf16.mxu0 %v1283
    %1845 = vmatpush1.bf16.msra.mxu0 %v1282
    %1846 = vmatprep.subr.bf16.mxu0 %v1288
    %1847 = vmatpush1.bf16.msra.mxu0 %v1287
    %1848 = vmatprep.subr.bf16.mxu0 %v1293
    %1849 = vmatpush1.bf16.msra.mxu0 %v1292
    %1850 = vmatprep.mubr.bf16.mxu0 %v127
    %1851 = vmatmul.mubr.bf16.gmra.mrb[0].mxu0 %v126
    %v1852 = vpop.f32.mrb[0].mxu0
    %v1853 = vadd.f32 %v433, %v1852
    %v1854 = vpop.f32.mrb[0].mxu0
    %v1855 = vadd.f32 %v437, %v1854
    %v1856 = vpop.f32.mrb[0].mxu0
    %v1857 = vpop.f32.mrb[0].mxu0
    %1858 = vdwg.mxu0
    %1859 = vmatprep.subr.bf16.mxu0 %v1298
    %1860 = vmatpush1.bf16.msra.mxu0 %v1297
    %1861 = vmatprep.subr.bf16.mxu0 %v1303
    %1862 = vmatpush1.bf16.msra.mxu0 %v1302
    %1863 = vmatprep.subr.bf16.mxu0 %v1308
    %1864 = vmatpush1.bf16.msra.mxu0 %v1307
    %1865 = vmatprep.subr.bf16.mxu0 %v1313
    %1866 = vmatpush1.bf16.msra.mxu0 %v1312
    %1867 = vmatprep.subr.bf16.mxu0 %v1318
    %1868 = vmatpush1.bf16.msra.mxu0 %v1317
    %1869 = vmatprep.subr.bf16.mxu0 %v1323
    %1870 = vmatpush1.bf16.msra.mxu0 %v1322
    %1871 = vmatprep.subr.bf16.mxu0 %v1328
    %1872 = vmatpush1.bf16.msra.mxu0 %v1327
    %1873 = vmatprep.subr.bf16.mxu0 %v1333
    %1874 = vmatpush1.bf16.msra.mxu0 %v1332
    %1875 = vmatprep.subr.bf16.mxu0 %v1338
    %1876 = vmatpush1.bf16.msra.mxu0 %v1337
    %1877 = vmatprep.subr.bf16.mxu0 %v1343
    %1878 = vmatpush1.bf16.msra.mxu0 %v1342
    %1879 = vmatprep.subr.bf16.mxu0 %v1348
    %1880 = vmatpush1.bf16.msra.mxu0 %v1347
    %1881 = vmatprep.subr.bf16.mxu0 %v1353
    %1882 = vmatpush1.bf16.msra.mxu0 %v1352
    %1883 = vmatprep.subr.bf16.mxu0 %v1358
    %1884 = vmatpush1.bf16.msra.mxu0 %v1357
    %1885 = vmatprep.subr.bf16.mxu0 %v1363
    %1886 = vmatpush1.bf16.msra.mxu0 %v1362
    %1887 = vmatprep.subr.bf16.mxu0 %v1368
    %1888 = vmatpush1.bf16.msra.mxu0 %v1367
    %1889 = vmatprep.subr.bf16.mxu0 %v1373
    %1890 = vmatpush1.bf16.msra.mxu0 %v1372
    %1891 = vmatprep.mubr.bf16.mxu0 %v129
    %1892 = vmatmul.mubr.bf16.gmra.mrb[0].mxu0 %v128
    %v1893 = vpop.f32.mrb[0].mxu0
    %v1894 = vadd.f32 %v1853, %v1893
    %v1895 = vpop.f32.mrb[0].mxu0
    %v1896 = vadd.f32 %v1855, %v1895
    %v1897 = vpop.f32.mrb[0].mxu0
    %v1898 = vpop.f32.mrb[0].mxu0
    %1899 = vdwg.mxu0
    %1900 = vmatprep.subr.bf16.mxu0 %v1378
    %1901 = vmatpush1.bf16.msra.mxu0 %v1377
    %1902 = vmatprep.subr.bf16.mxu0 %v1383
    %1903 = vmatpush1.bf16.msra.mxu0 %v1382
    %1904 = vmatprep.subr.bf16.mxu0 %v1388
    %1905 = vmatpush1.bf16.msra.mxu0 %v1387
    %1906 = vmatprep.subr.bf16.mxu0 %v1393
    %1907 = vmatpush1.bf16.msra.mxu0 %v1392
    %1908 = vmatprep.subr.bf16.mxu0 %v1398
    %1909 = vmatpush1.bf16.msra.mxu0 %v1397
    %1910 = vmatprep.subr.bf16.mxu0 %v1403
    %1911 = vmatpush1.bf16.msra.mxu0 %v1402
    %1912 = vmatprep.subr.bf16.mxu0 %v1408
    %1913 = vmatpush1.bf16.msra.mxu0 %v1407
    %1914 = vmatprep.subr.bf16.mxu0 %v1413
    %1915 = vmatpush1.bf16.msra.mxu0 %v1412
    %1916 = vmatprep.subr.bf16.mxu0 %v1418
    %1917 = vmatpush1.bf16.msra.mxu0 %v1417
    %1918 = vmatprep.subr.bf16.mxu0 %v1423
    %1919 = vmatpush1.bf16.msra.mxu0 %v1422
    %1920 = vmatprep.subr.bf16.mxu0 %v1428
    %1921 = vmatpush1.bf16.msra.mxu0 %v1427
    %1922 = vmatprep.subr.bf16.mxu0 %v1433
    %1923 = vmatpush1.bf16.msra.mxu0 %v1432
    %1924 = vmatprep.subr.bf16.mxu0 %v1438
    %1925 = vmatpush1.bf16.msra.mxu0 %v1437
    %1926 = vmatprep.subr.bf16.mxu0 %v1443
    %1927 = vmatpush1.bf16.msra.mxu0 %v1442
    %1928 = vmatprep.subr.bf16.mxu0 %v1448
    %1929 = vmatpush1.bf16.msra.mxu0 %v1447
    %1930 = vmatprep.subr.bf16.mxu0 %v1453
    %1931 = vmatpush1.bf16.msra.mxu0 %v1452
    %1932 = vmatprep.mubr.bf16.mxu0 %v131
    %1933 = vmatmul.mubr.bf16.gmra.mrb[0].mxu0 %v130
    %v1934 = vpop.f32.mrb[0].mxu0
    %v1935 = vadd.f32 %v1894, %v1934
    %v1936 = vpop.f32.mrb[0].mxu0
    %v1937 = vadd.f32 %v1896, %v1936
    %v1938 = vpop.f32.mrb[0].mxu0
    %v1939 = vpop.f32.mrb[0].mxu0
    %1940 = vdwg.mxu0
    %1941 = vmatprep.subr.bf16.mxu0 0
    %1942 = vmatpush1.bf16.msra.mxu0 %v1219
    %1943 = vmatprep.subr.bf16.mxu0 0
    %1944 = vmatpush1.bf16.msra.mxu0 %v1224
    %1945 = vmatprep.subr.bf16.mxu0 0
    %1946 = vmatpush1.bf16.msra.mxu0 %v1229
    %1947 = vmatprep.subr.bf16.mxu0 0
    %1948 = vmatpush1.bf16.msra.mxu0 %v1234
    %1949 = vmatprep.subr.bf16.mxu0 0
    %1950 = vmatpush1.bf16.msra.mxu0 %v1239
    %1951 = vmatprep.subr.bf16.mxu0 0
    %1952 = vmatpush1.bf16.msra.mxu0 %v1244
    %1953 = vmatprep.subr.bf16.mxu0 0
    %1954 = vmatpush1.bf16.msra.mxu0 %v1249
    %1955 = vmatprep.subr.bf16.mxu0 0
    %1956 = vmatpush1.bf16.msra.mxu0 %v1254
    %1957 = vmatprep.subr.bf16.mxu0 0
    %1958 = vmatpush1.bf16.msra.mxu0 %v1259
    %1959 = vmatprep.subr.bf16.mxu0 0
    %1960 = vmatpush1.bf16.msra.mxu0 %v1264
    %1961 = vmatprep.subr.bf16.mxu0 0
    %1962 = vmatpush1.bf16.msra.mxu0 %v1269
    %1963 = vmatprep.subr.bf16.mxu0 0
    %1964 = vmatpush1.bf16.msra.mxu0 %v1274
    %1965 = vmatprep.subr.bf16.mxu0 0
    %1966 = vmatpush1.bf16.msra.mxu0 %v1279
    %1967 = vmatprep.subr.bf16.mxu0 0
    %1968 = vmatpush1.bf16.msra.mxu0 %v1284
    %1969 = vmatprep.subr.bf16.mxu0 0
    %1970 = vmatpush1.bf16.msra.mxu0 %v1289
    %1971 = vmatprep.subr.bf16.mxu0 0
    %1972 = vmatpush1.bf16.msra.mxu0 %v1294
    %1973 = vmatprep.mubr.bf16.mxu0 %v127
    %1974 = vmatmul.mubr.bf16.gmra.mrb[0].mxu0 %v126
    %v1975 = vpop.f32.mrb[0].mxu0
    %v1976 = vadd.f32 %v441, %v1975
    %v1977 = vpop.f32.mrb[0].mxu0
    %v1978 = vpop.f32.mrb[0].mxu0
    %v1979 = vpop.f32.mrb[0].mxu0
    %1980 = vdwg.mxu0
    %1981 = vmatprep.subr.bf16.mxu0 0
    %1982 = vmatpush1.bf16.msra.mxu0 %v1299
    %1983 = vmatprep.subr.bf16.mxu0 0
    %1984 = vmatpush1.bf16.msra.mxu0 %v1304
    %1985 = vmatprep.subr.bf16.mxu0 0
    %1986 = vmatpush1.bf16.msra.mxu0 %v1309
    %1987 = vmatprep.subr.bf16.mxu0 0
    %1988 = vmatpush1.bf16.msra.mxu0 %v1314
    %1989 = vmatprep.subr.bf16.mxu0 0
    %1990 = vmatpush1.bf16.msra.mxu0 %v1319
    %1991 = vmatprep.subr.bf16.mxu0 0
    %1992 = vmatpush1.bf16.msra.mxu0 %v1324
    %1993 = vmatprep.subr.bf16.mxu0 0
    %1994 = vmatpush1.bf16.msra.mxu0 %v1329
    %1995 = vmatprep.subr.bf16.mxu0 0
    %1996 = vmatpush1.bf16.msra.mxu0 %v1334
    %1997 = vmatprep.subr.bf16.mxu0 0
    %1998 = vmatpush1.bf16.msra.mxu0 %v1339
    %1999 = vmatprep.subr.bf16.mxu0 0
    %2000 = vmatpush1.bf16.msra.mxu0 %v1344
    %2001 = vmatprep.subr.bf16.mxu0 0
    %2002 = vmatpush1.bf16.msra.mxu0 %v1349
    %2003 = vmatprep.subr.bf16.mxu0 0
    %2004 = vmatpush1.bf16.msra.mxu0 %v1354
    %2005 = vmatprep.subr.bf16.mxu0 0
    %2006 = vmatpush1.bf16.msra.mxu0 %v1359
    %2007 = vmatprep.subr.bf16.mxu0 0
    %2008 = vmatpush1.bf16.msra.mxu0 %v1364
    %2009 = vmatprep.subr.bf16.mxu0 0
    %2010 = vmatpush1.bf16.msra.mxu0 %v1369
    %2011 = vmatprep.subr.bf16.mxu0 0
    %2012 = vmatpush1.bf16.msra.mxu0 %v1374
    %2013 = vmatprep.mubr.bf16.mxu0 %v129
    %2014 = vmatmul.mubr.bf16.gmra.mrb[0].mxu0 %v128
    %v2015 = vpop.f32.mrb[0].mxu0
    %v2016 = vadd.f32 %v1976, %v2015
    %v2017 = vpop.f32.mrb[0].mxu0
    %v2018 = vpop.f32.mrb[0].mxu0
    %v2019 = vpop.f32.mrb[0].mxu0
    %2020 = vdwg.mxu0
    %2021 = vmatprep.subr.bf16.mxu0 0
    %2022 = vmatpush1.bf16.msra.mxu0 %v1379
    %2023 = vmatprep.subr.bf16.mxu0 0
    %2024 = vmatpush1.bf16.msra.mxu0 %v1384
    %2025 = vmatprep.subr.bf16.mxu0 0
    %2026 = vmatpush1.bf16.msra.mxu0 %v1389
    %2027 = vmatprep.subr.bf16.mxu0 0
    %2028 = vmatpush1.bf16.msra.mxu0 %v1394
    %2029 = vmatprep.subr.bf16.mxu0 0
    %2030 = vmatpush1.bf16.msra.mxu0 %v1399
    %2031 = vmatprep.subr.bf16.mxu0 0
    %2032 = vmatpush1.bf16.msra.mxu0 %v1404
    %2033 = vmatprep.subr.bf16.mxu0 0
    %2034 = vmatpush1.bf16.msra.mxu0 %v1409
    %2035 = vmatprep.subr.bf16.mxu0 0
    %2036 = vmatpush1.bf16.msra.mxu0 %v1414
    %2037 = vmatprep.subr.bf16.mxu0 0
    %2038 = vmatpush1.bf16.msra.mxu0 %v1419
    %2039 = vmatprep.subr.bf16.mxu0 0
    %2040 = vmatpush1.bf16.msra.mxu0 %v1424
    %2041 = vmatprep.subr.bf16.mxu0 0
    %2042 = vmatpush1.bf16.msra.mxu0 %v1429
    %2043 = vmatprep.subr.bf16.mxu0 0
    %2044 = vmatpush1.bf16.msra.mxu0 %v1434
    %2045 = vmatprep.subr.bf16.mxu0 0
    %2046 = vmatpush1.bf16.msra.mxu0 %v1439
    %2047 = vmatprep.subr.bf16.mxu0 0
    %2048 = vmatpush1.bf16.msra.mxu0 %v1444
    %2049 = vmatprep.subr.bf16.mxu0 0
    %2050 = vmatpush1.bf16.msra.mxu0 %v1449
    %2051 = vmatprep.subr.bf16.mxu0 0
    %2052 = vmatpush1.bf16.msra.mxu0 %v1454
    %2053 = vmatprep.mubr.bf16.mxu0 %v131
    %2054 = vmatmul.mubr.bf16.gmra.mrb[0].mxu0 %v130
    %v2055 = vpop.f32.mrb[0].mxu0
    %v2056 = vadd.f32 %v2016, %v2055
    %v2057 = vpop.f32.mrb[0].mxu0
    %v2058 = vpop.f32.mrb[0].mxu0
    %v2059 = vpop.f32.mrb[0].mxu0
    %2060 = vdwg.mxu0
    %v2061 = vmul.f32 %v1812, 0.5
    %v2062 = vmul.f32 %v1814, 0.5
    %v2063 = vmul.f32 %v1935, 0.5
    %v2064 = vmul.f32 %v1937, 0.5
    %v2065 = vmul.f32 %v2056, 0.5
    %v2066 = vmul.f32 %v1812, 0.70710677
    %v2067 = vmul.f32 %v1814, 0.70710677
    %v2068 = vmul.f32 %v1935, 0.70710677
    %v2069 = vmul.f32 %v1937, 0.70710677
    %v2070 = vmul.f32 %v2056, 0.70710677
    %v2071 = verf.f32.pop %v2066
    %v2072 = verf.f32.pop %v2067
    %v2073 = verf.f32.pop %v2068
    %v2074 = verf.f32.pop %v2069
    %v2075 = verf.f32.pop %v2070
    %v2076 = vadd.f32 %v2071, 1.0
    %v2077 = vadd.f32 %v2072, 1.0
    %v2078 = vadd.f32 %v2073, 1.0
    %v2079 = vadd.f32 %v2074, 1.0
    %v2080 = vadd.f32 %v2075, 1.0
    %v2081 = vmul.f32 %v2061, %v2076
    %v2082 = vmul.f32 %v2062, %v2077
    %v2083 = vmul.f32 %v2063, %v2078
    %v2084 = vmul.f32 %v2064, %v2079
    %v2085 = vmul.f32 %v2065, %v2080
    %v2086 = vpack.c.bf16 %v2081, %v2081
    %v2087 = vpack.c.bf16 %v2082, %v2082
    %v2088 = vpack.c.bf16 %v2083, %v2083
    %v2089 = vpack.c.bf16 %v2084, %v2084
    %v2090 = vpack.c.bf16 %v2085, %v2085
    %v2091 = vld [vmem:[#allocation7] sm:$0xff]
    %v2092 = vld [vmem:[#allocation7 + $0x8] sm:$0xff]
    %v2093 = vld [vmem:[#allocation7 + $0x10] sm:$0xf]
    %v2094 = vld [vmem:[#allocation7 + $0x14] sm:$0xff]
    %v2095 = vld [vmem:[#allocation7 + $0x1c] sm:$0xff]
    %v2096 = vld [vmem:[#allocation7 + $0x24] sm:$0xf]
    %v2097 = vld [vmem:[#allocation7 + $0x28] sm:$0xff]
    %v2098 = vld [vmem:[#allocation7 + $0x30] sm:$0xff]
    %v2099 = vld [vmem:[#allocation7 + $0x38] sm:$0xf]
    %v2100 = vld [vmem:[#allocation7 + $0x3c] sm:$0xff]
    %v2101 = vld [vmem:[#allocation7 + $0x44] sm:$0xff]
    %v2102 = vld [vmem:[#allocation7 + $0x4c] sm:$0xf]
    %v2103 = vld [vmem:[#allocation7 + $0x50] sm:$0xff]
    %v2104 = vld [vmem:[#allocation7 + $0x58] sm:$0xff]
    %v2105 = vld [vmem:[#allocation7 + $0x60] sm:$0xf]
    %v2106 = vld [vmem:[#allocation7 + $0x64] sm:$0xff]
    %v2107 = vld [vmem:[#allocation7 + $0x6c] sm:$0xff]
    %v2108 = vld [vmem:[#allocation7 + $0x74] sm:$0xf]
    %v2109 = vld [vmem:[#allocation7 + $0x78] sm:$0xff]
    %v2110 = vld [vmem:[#allocation7 + $0x80] sm:$0xff]
    %v2111 = vld [vmem:[#allocation7 + $0x88] sm:$0xf]
    %v2112 = vld [vmem:[#allocation7 + $0x8c] sm:$0xff]
    %v2113 = vld [vmem:[#allocation7 + $0x94] sm:$0xff]
    %v2114 = vld [vmem:[#allocation7 + $0x9c] sm:$0xf]
    %v2115 = vld [vmem:[#allocation7 + $0xa0] sm:$0xff]
    %v2116 = vld [vmem:[#allocation7 + $0xa8] sm:$0xff]
    %v2117 = vld [vmem:[#allocation7 + $0xb0] sm:$0xf]
    %v2118 = vld [vmem:[#allocation7 + $0xb4] sm:$0xff]
    %v2119 = vld [vmem:[#allocation7 + $0xbc] sm:$0xff]
    %v2120 = vld [vmem:[#allocation7 + $0xc4] sm:$0xf]
    %v2121 = vld [vmem:[#allocation7 + $0xc8] sm:$0xff]
    %v2122 = vld [vmem:[#allocation7 + $0xd0] sm:$0xff]
    %v2123 = vld [vmem:[#allocation7 + $0xd8] sm:$0xf]
    %v2124 = vld [vmem:[#allocation7 + $0xdc] sm:$0xff]
    %v2125 = vld [vmem:[#allocation7 + $0xe4] sm:$0xff]
    %v2126 = vld [vmem:[#allocation7 + $0xec] sm:$0xf]
    %v2127 = vld [vmem:[#allocation7 + $0xf0] sm:$0xff]
    %v2128 = vld [vmem:[#allocation7 + $0xf8] sm:$0xff]
    %v2129 = vld [vmem:[#allocation7 + $0x100] sm:$0xf]
    %v2130 = vld [vmem:[#allocation7 + $0x104] sm:$0xff]
    %v2131 = vld [vmem:[#allocation7 + $0x10c] sm:$0xff]
    %v2132 = vld [vmem:[#allocation7 + $0x114] sm:$0xf]
    %v2133 = vld [vmem:[#allocation7 + $0x118] sm:$0xff]
    %v2134 = vld [vmem:[#allocation7 + $0x120] sm:$0xff]
    %v2135 = vld [vmem:[#allocation7 + $0x128] sm:$0xf]
    %v2136 = vld [vmem:[#allocation7 + $0x12c] sm:$0xff]
    %v2137 = vld [vmem:[#allocation7 + $0x134] sm:$0xff]
    %v2138 = vld [vmem:[#allocation7 + $0x13c] sm:$0xf]
    %v2139 = vld [vmem:[#allocation7 + $0x140] sm:$0xff]
    %v2140 = vld [vmem:[#allocation7 + $0x148] sm:$0xff]
    %v2141 = vld [vmem:[#allocation7 + $0x150] sm:$0xf]
    %v2142 = vld [vmem:[#allocation7 + $0x154] sm:$0xff]
    %v2143 = vld [vmem:[#allocation7 + $0x15c] sm:$0xff]
    %v2144 = vld [vmem:[#allocation7 + $0x164] sm:$0xf]
    %v2145 = vld [vmem:[#allocation7 + $0x168] sm:$0xff]
    %v2146 = vld [vmem:[#allocation7 + $0x170] sm:$0xff]
    %v2147 = vld [vmem:[#allocation7 + $0x178] sm:$0xf]
    %v2148 = vld [vmem:[#allocation7 + $0x17c] sm:$0xff]
    %v2149 = vld [vmem:[#allocation7 + $0x184] sm:$0xff]
    %v2150 = vld [vmem:[#allocation7 + $0x18c] sm:$0xf]
    %v2151 = vld [vmem:[#allocation7 + $0x190] sm:$0xff]
    %v2152 = vld [vmem:[#allocation7 + $0x198] sm:$0xff]
    %v2153 = vld [vmem:[#allocation7 + $0x1a0] sm:$0xf]
    %v2154 = vld [vmem:[#allocation7 + $0x1a4] sm:$0xff]
    %v2155 = vld [vmem:[#allocation7 + $0x1ac] sm:$0xff]
    %v2156 = vld [vmem:[#allocation7 + $0x1b4] sm:$0xf]
    %v2157 = vld [vmem:[#allocation7 + $0x1b8] sm:$0xff]
    %v2158 = vld [vmem:[#allocation7 + $0x1c0] sm:$0xff]
    %v2159 = vld [vmem:[#allocation7 + $0x1c8] sm:$0xf]
    %v2160 = vld [vmem:[#allocation7 + $0x1cc] sm:$0xff]
    %v2161 = vld [vmem:[#allocation7 + $0x1d4] sm:$0xff]
    %v2162 = vld [vmem:[#allocation7 + $0x1dc] sm:$0xf]
    %v2163 = vld [vmem:[#allocation7 + $0x1e0] sm:$0xff]
    %v2164 = vld [vmem:[#allocation7 + $0x1e8] sm:$0xff]
    %v2165 = vld [vmem:[#allocation7 + $0x1f0] sm:$0xf]
    %v2166 = vld [vmem:[#allocation7 + $0x1f4] sm:$0xff]
    %v2167 = vld [vmem:[#allocation7 + $0x1fc] sm:$0xff]
    %v2168 = vld [vmem:[#allocation7 + $0x204] sm:$0xf]
    %v2169 = vld [vmem:[#allocation7 + $0x208] sm:$0xff]
    %v2170 = vld [vmem:[#allocation7 + $0x210] sm:$0xff]
    %v2171 = vld [vmem:[#allocation7 + $0x218] sm:$0xf]
    %v2172 = vld [vmem:[#allocation7 + $0x21c] sm:$0xff]
    %v2173 = vld [vmem:[#allocation7 + $0x224] sm:$0xff]
    %v2174 = vld [vmem:[#allocation7 + $0x22c] sm:$0xf]
    %v2175 = vld [vmem:[#allocation7 + $0x230] sm:$0xff]
    %v2176 = vld [vmem:[#allocation7 + $0x238] sm:$0xff]
    %v2177 = vld [vmem:[#allocation7 + $0x240] sm:$0xf]
    %v2178 = vld [vmem:[#allocation7 + $0x244] sm:$0xff]
    %v2179 = vld [vmem:[#allocation7 + $0x24c] sm:$0xff]
    %v2180 = vld [vmem:[#allocation7 + $0x254] sm:$0xf]
    %v2181 = vld [vmem:[#allocation7 + $0x258] sm:$0xff]
    %v2182 = vld [vmem:[#allocation7 + $0x260] sm:$0xff]
    %v2183 = vld [vmem:[#allocation7 + $0x268] sm:$0xf]
    %v2184 = vld [vmem:[#allocation7 + $0x26c] sm:$0xff]
    %v2185 = vld [vmem:[#allocation7 + $0x274] sm:$0xff]
    %v2186 = vld [vmem:[#allocation7 + $0x27c] sm:$0xf]
    %v2187 = vld [vmem:[#allocation7 + $0x280] sm:$0xff]
    %v2188 = vld [vmem:[#allocation7 + $0x288] sm:$0xff]
    %v2189 = vld [vmem:[#allocation7 + $0x290] sm:$0xf]
    %v2190 = vld [vmem:[#allocation7 + $0x294] sm:$0xff]
    %v2191 = vld [vmem:[#allocation7 + $0x29c] sm:$0xff]
    %v2192 = vld [vmem:[#allocation7 + $0x2a4] sm:$0xf]
    %v2193 = vld [vmem:[#allocation7 + $0x2a8] sm:$0xff]
    %v2194 = vld [vmem:[#allocation7 + $0x2b0] sm:$0xff]
    %v2195 = vld [vmem:[#allocation7 + $0x2b8] sm:$0xf]
    %v2196 = vld [vmem:[#allocation7 + $0x2bc] sm:$0xff]
    %v2197 = vld [vmem:[#allocation7 + $0x2c4] sm:$0xff]
    %v2198 = vld [vmem:[#allocation7 + $0x2cc] sm:$0xf]
    %v2199 = vld [vmem:[#allocation7 + $0x2d0] sm:$0xff]
    %v2200 = vld [vmem:[#allocation7 + $0x2d8] sm:$0xff]
    %v2201 = vld [vmem:[#allocation7 + $0x2e0] sm:$0xf]
    %v2202 = vld [vmem:[#allocation7 + $0x2e4] sm:$0xff]
    %v2203 = vld [vmem:[#allocation7 + $0x2ec] sm:$0xff]
    %v2204 = vld [vmem:[#allocation7 + $0x2f4] sm:$0xf]
    %v2205 = vld [vmem:[#allocation7 + $0x2f8] sm:$0xff]
    %v2206 = vld [vmem:[#allocation7 + $0x300] sm:$0xff]
    %v2207 = vld [vmem:[#allocation7 + $0x308] sm:$0xf]
    %v2208 = vld [vmem:[#allocation7 + $0x30c] sm:$0xff]
    %v2209 = vld [vmem:[#allocation7 + $0x314] sm:$0xff]
    %v2210 = vld [vmem:[#allocation7 + $0x31c] sm:$0xf]
    %v2211 = vld [vmem:[#allocation7 + $0x320] sm:$0xff]
    %v2212 = vld [vmem:[#allocation7 + $0x328] sm:$0xff]
    %v2213 = vld [vmem:[#allocation7 + $0x330] sm:$0xf]
    %v2214 = vld [vmem:[#allocation7 + $0x334] sm:$0xff]
    %v2215 = vld [vmem:[#allocation7 + $0x33c] sm:$0xff]
    %v2216 = vld [vmem:[#allocation7 + $0x344] sm:$0xf]
    %v2217 = vld [vmem:[#allocation7 + $0x348] sm:$0xff]
    %v2218 = vld [vmem:[#allocation7 + $0x350] sm:$0xff]
    %v2219 = vld [vmem:[#allocation7 + $0x358] sm:$0xf]
    %v2220 = vld [vmem:[#allocation7 + $0x35c] sm:$0xff]
    %v2221 = vld [vmem:[#allocation7 + $0x364] sm:$0xff]
    %v2222 = vld [vmem:[#allocation7 + $0x36c] sm:$0xf]
    %v2223 = vld [vmem:[#allocation7 + $0x370] sm:$0xff]
    %v2224 = vld [vmem:[#allocation7 + $0x378] sm:$0xff]
    %v2225 = vld [vmem:[#allocation7 + $0x380] sm:$0xf]
    %v2226 = vld [vmem:[#allocation7 + $0x384] sm:$0xff]
    %v2227 = vld [vmem:[#allocation7 + $0x38c] sm:$0xff]
    %v2228 = vld [vmem:[#allocation7 + $0x394] sm:$0xf]
    %v2229 = vld [vmem:[#allocation7 + $0x398] sm:$0xff]
    %v2230 = vld [vmem:[#allocation7 + $0x3a0] sm:$0xff]
    %v2231 = vld [vmem:[#allocation7 + $0x3a8] sm:$0xf]
    %v2232 = vld [vmem:[#allocation7 + $0x3ac] sm:$0xff]
    %v2233 = vld [vmem:[#allocation7 + $0x3b4] sm:$0xff]
    %v2234 = vld [vmem:[#allocation7 + $0x3bc] sm:$0xf]
    %v2235 = vld [vmem:[#allocation7 + $0x3c0] sm:$0xff]
    %v2236 = vld [vmem:[#allocation7 + $0x3c8] sm:$0xff]
    %v2237 = vld [vmem:[#allocation7 + $0x3d0] sm:$0xf]
    %v2238 = vld [vmem:[#allocation7 + $0x3d4] sm:$0xff]
    %v2239 = vld [vmem:[#allocation7 + $0x3dc] sm:$0xff]
    %v2240 = vld [vmem:[#allocation7 + $0x3e4] sm:$0xf]
    %v2241 = vld [vmem:[#allocation7 + $0x3e8] sm:$0xff]
    %v2242 = vld [vmem:[#allocation7 + $0x3f0] sm:$0xff]
    %v2243 = vld [vmem:[#allocation7 + $0x3f8] sm:$0xf]
    %v2244 = vld [vmem:[#allocation7 + $0x3fc] sm:$0xff]
    %v2245 = vld [vmem:[#allocation7 + $0x404] sm:$0xff]
    %v2246 = vld [vmem:[#allocation7 + $0x40c] sm:$0xf]
    %v2247 = vld [vmem:[#allocation7 + $0x410] sm:$0xff]
    %v2248 = vld [vmem:[#allocation7 + $0x418] sm:$0xff]
    %v2249 = vld [vmem:[#allocation7 + $0x420] sm:$0xf]
    %v2250 = vld [vmem:[#allocation7 + $0x424] sm:$0xff]
    %v2251 = vld [vmem:[#allocation7 + $0x42c] sm:$0xff]
    %v2252 = vld [vmem:[#allocation7 + $0x434] sm:$0xf]
    %v2253 = vld [vmem:[#allocation7 + $0x438] sm:$0xff]
    %v2254 = vld [vmem:[#allocation7 + $0x440] sm:$0xff]
    %v2255 = vld [vmem:[#allocation7 + $0x448] sm:$0xf]
    %v2256 = vld [vmem:[#allocation7 + $0x44c] sm:$0xff]
    %v2257 = vld [vmem:[#allocation7 + $0x454] sm:$0xff]
    %v2258 = vld [vmem:[#allocation7 + $0x45c] sm:$0xf]
    %v2259 = vld [vmem:[#allocation7 + $0x460] sm:$0xff]
    %v2260 = vld [vmem:[#allocation7 + $0x468] sm:$0xff]
    %v2261 = vld [vmem:[#allocation7 + $0x470] sm:$0xf]
    %v2262 = vld [vmem:[#allocation7 + $0x474] sm:$0xff]
    %v2263 = vld [vmem:[#allocation7 + $0x47c] sm:$0xff]
    %v2264 = vld [vmem:[#allocation7 + $0x484] sm:$0xf]
    %v2265 = vld [vmem:[#allocation7 + $0x488] sm:$0xff]
    %v2266 = vld [vmem:[#allocation7 + $0x490] sm:$0xff]
    %v2267 = vld [vmem:[#allocation7 + $0x498] sm:$0xf]
    %v2268 = vld [vmem:[#allocation7 + $0x49c] sm:$0xff]
    %v2269 = vld [vmem:[#allocation7 + $0x4a4] sm:$0xff]
    %v2270 = vld [vmem:[#allocation7 + $0x4ac] sm:$0xf]
    %v2271 = vld [vmem:[#allocation7 + $0x4b0] sm:$0xff]
    %v2272 = vld [vmem:[#allocation7 + $0x4b8] sm:$0xff]
    %v2273 = vld [vmem:[#allocation7 + $0x4c0] sm:$0xf]
    %v2274 = vld [vmem:[#allocation7 + $0x4c4] sm:$0xff]
    %v2275 = vld [vmem:[#allocation7 + $0x4cc] sm:$0xff]
    %v2276 = vld [vmem:[#allocation7 + $0x4d4] sm:$0xf]
    %v2277 = vld [vmem:[#allocation7 + $0x4d8] sm:$0xff]
    %v2278 = vld [vmem:[#allocation7 + $0x4e0] sm:$0xff]
    %v2279 = vld [vmem:[#allocation7 + $0x4e8] sm:$0xf]
    %v2280 = vld [vmem:[#allocation7 + $0x4ec] sm:$0xff]
    %v2281 = vld [vmem:[#allocation7 + $0x4f4] sm:$0xff]
    %v2282 = vld [vmem:[#allocation7 + $0x4fc] sm:$0xf]
    %v2283 = vld [vmem:[#allocation7 + $0x500] sm:$0xff]
    %v2284 = vld [vmem:[#allocation7 + $0x508] sm:$0xff]
    %v2285 = vld [vmem:[#allocation7 + $0x510] sm:$0xf]
    %v2286 = vld [vmem:[#allocation7 + $0x514] sm:$0xff]
    %v2287 = vld [vmem:[#allocation7 + $0x51c] sm:$0xff]
    %v2288 = vld [vmem:[#allocation7 + $0x524] sm:$0xf]
    %v2289 = vld [vmem:[#allocation7 + $0x528] sm:$0xff]
    %v2290 = vld [vmem:[#allocation7 + $0x530] sm:$0xff]
    %v2291 = vld [vmem:[#allocation7 + $0x538] sm:$0xf]
    %v2292 = vld [vmem:[#allocation7 + $0x53c] sm:$0xff]
    %v2293 = vld [vmem:[#allocation7 + $0x544] sm:$0xff]
    %v2294 = vld [vmem:[#allocation7 + $0x54c] sm:$0xf]
    %v2295 = vld [vmem:[#allocation7 + $0x550] sm:$0xff]
    %v2296 = vld [vmem:[#allocation7 + $0x558] sm:$0xff]
    %v2297 = vld [vmem:[#allocation7 + $0x560] sm:$0xf]
    %v2298 = vld [vmem:[#allocation7 + $0x564] sm:$0xff]
    %v2299 = vld [vmem:[#allocation7 + $0x56c] sm:$0xff]
    %v2300 = vld [vmem:[#allocation7 + $0x574] sm:$0xf]
    %v2301 = vld [vmem:[#allocation7 + $0x578] sm:$0xff]
    %v2302 = vld [vmem:[#allocation7 + $0x580] sm:$0xff]
    %v2303 = vld [vmem:[#allocation7 + $0x588] sm:$0xf]
    %v2304 = vld [vmem:[#allocation7 + $0x58c] sm:$0xff]
    %v2305 = vld [vmem:[#allocation7 + $0x594] sm:$0xff]
    %v2306 = vld [vmem:[#allocation7 + $0x59c] sm:$0xf]
    %v2307 = vld [vmem:[#allocation7 + $0x5a0] sm:$0xff]
    %v2308 = vld [vmem:[#allocation7 + $0x5a8] sm:$0xff]
    %v2309 = vld [vmem:[#allocation7 + $0x5b0] sm:$0xf]
    %v2310 = vld [vmem:[#allocation7 + $0x5b4] sm:$0xff]
    %v2311 = vld [vmem:[#allocation7 + $0x5bc] sm:$0xff]
    %v2312 = vld [vmem:[#allocation7 + $0x5c4] sm:$0xf]
    %v2313 = vld [vmem:[#allocation7 + $0x5c8] sm:$0xff]
    %v2314 = vld [vmem:[#allocation7 + $0x5d0] sm:$0xff]
    %v2315 = vld [vmem:[#allocation7 + $0x5d8] sm:$0xf]
    %v2316 = vld [vmem:[#allocation7 + $0x5dc] sm:$0xff]
    %v2317 = vld [vmem:[#allocation7 + $0x5e4] sm:$0xff]
    %v2318 = vld [vmem:[#allocation7 + $0x5ec] sm:$0xf]
    %v2319 = vld [vmem:[#allocation7 + $0x5f0] sm:$0xff]
    %v2320 = vld [vmem:[#allocation7 + $0x5f8] sm:$0xff]
    %v2321 = vld [vmem:[#allocation7 + $0x600] sm:$0xf]
    %v2322 = vld [vmem:[#allocation7 + $0x604] sm:$0xff]
    %v2323 = vld [vmem:[#allocation7 + $0x60c] sm:$0xff]
    %v2324 = vld [vmem:[#allocation7 + $0x614] sm:$0xf]
    %v2325 = vld [vmem:[#allocation7 + $0x618] sm:$0xff]
    %v2326 = vld [vmem:[#allocation7 + $0x620] sm:$0xff]
    %v2327 = vld [vmem:[#allocation7 + $0x628] sm:$0xf]
    %v2328 = vld [vmem:[#allocation7 + $0x62c] sm:$0xff]
    %v2329 = vld [vmem:[#allocation7 + $0x634] sm:$0xff]
    %v2330 = vld [vmem:[#allocation7 + $0x63c] sm:$0xf]
    %v2331 = vld [vmem:[%s4] sm:$0x1f]
    %v2333 = vlaneseq
    %v2334 = vshrl.u32 %v2333, 7
    %v2335 = vsub.s32 0, %v2334
    %v2336 = vrot.slane %v2331, %v2335
    %v2337 = vlaneseq
    %v2338 = vshrl.u32 %v2337, 7
    %v2339 = vsub.s32 1, %v2338
    %v2340 = vrot.slane %v2331, %v2339
    %v2341 = vlaneseq
    %v2342 = vshrl.u32 %v2341, 7
    %v2343 = vsub.s32 2, %v2342
    %v2344 = vrot.slane %v2331, %v2343
    %v2345 = vlaneseq
    %v2346 = vshrl.u32 %v2345, 7
    %v2347 = vsub.s32 3, %v2346
    %v2348 = vrot.slane %v2331, %v2347
    %v2349 = vlaneseq
    %v2350 = vshrl.u32 %v2349, 7
    %v2351 = vsub.s32 4, %v2350
    %v2352 = vrot.slane %v2331, %v2351
    %v2598 = vunpack.c.l.b16 %v2091
    %v2599 = vunpack.c.h.b16 %v2091
    %v2600 = vunpack.c.l.b16 %v2092
    %v2601 = vunpack.c.h.b16 %v2092
    %v2602 = vunpack.c.l.b16 %v2093
    %v2603 = vunpack.c.l.b16 %v2094
    %v2604 = vunpack.c.h.b16 %v2094
    %v2605 = vunpack.c.l.b16 %v2095
    %v2606 = vunpack.c.h.b16 %v2095
    %v2607 = vunpack.c.l.b16 %v2096
    %v2608 = vunpack.c.l.b16 %v2097
    %v2609 = vunpack.c.h.b16 %v2097
    %v2610 = vunpack.c.l.b16 %v2098
    %v2611 = vunpack.c.h.b16 %v2098
    %v2612 = vunpack.c.l.b16 %v2099
    %v2613 = vunpack.c.l.b16 %v2100
    %v2614 = vunpack.c.h.b16 %v2100
    %v2615 = vunpack.c.l.b16 %v2101
    %v2616 = vunpack.c.h.b16 %v2101
    %v2617 = vunpack.c.l.b16 %v2102
    %v2618 = vunpack.c.l.b16 %v2103
    %v2619 = vunpack.c.h.b16 %v2103
    %v2620 = vunpack.c.l.b16 %v2104
    %v2621 = vunpack.c.h.b16 %v2104
    %v2622 = vunpack.c.l.b16 %v2105
    %v2623 = vunpack.c.l.b16 %v2106
    %v2624 = vunpack.c.h.b16 %v2106
    %v2625 = vunpack.c.l.b16 %v2107
    %v2626 = vunpack.c.h.b16 %v2107
    %v2627 = vunpack.c.l.b16 %v2108
    %v2628 = vunpack.c.l.b16 %v2109
    %v2629 = vunpack.c.h.b16 %v2109
    %v2630 = vunpack.c.l.b16 %v2110
    %v2631 = vunpack.c.h.b16 %v2110
    %v2632 = vunpack.c.l.b16 %v2111
    %v2633 = vunpack.c.l.b16 %v2112
    %v2634 = vunpack.c.h.b16 %v2112
    %v2635 = vunpack.c.l.b16 %v2113
    %v2636 = vunpack.c.h.b16 %v2113
    %v2637 = vunpack.c.l.b16 %v2114
    %v2638 = vunpack.c.l.b16 %v2115
    %v2639 = vunpack.c.h.b16 %v2115
    %v2640 = vunpack.c.l.b16 %v2116
    %v2641 = vunpack.c.h.b16 %v2116
    %v2642 = vunpack.c.l.b16 %v2117
    %v2643 = vunpack.c.l.b16 %v2118
    %v2644 = vunpack.c.h.b16 %v2118
    %v2645 = vunpack.c.l.b16 %v2119
    %v2646 = vunpack.c.h.b16 %v2119
    %v2647 = vunpack.c.l.b16 %v2120
    %v2648 = vunpack.c.l.b16 %v2121
    %v2649 = vunpack.c.h.b16 %v2121
    %v2650 = vunpack.c.l.b16 %v2122
    %v2651 = vunpack.c.h.b16 %v2122
    %v2652 = vunpack.c.l.b16 %v2123
    %v2653 = vunpack.c.l.b16 %v2124
    %v2654 = vunpack.c.h.b16 %v2124
    %v2655 = vunpack.c.l.b16 %v2125
    %v2656 = vunpack.c.h.b16 %v2125
    %v2657 = vunpack.c.l.b16 %v2126
    %v2658 = vunpack.c.l.b16 %v2127
    %v2659 = vunpack.c.h.b16 %v2127
    %v2660 = vunpack.c.l.b16 %v2128
    %v2661 = vunpack.c.h.b16 %v2128
    %v2662 = vunpack.c.l.b16 %v2129
    %v2663 = vunpack.c.l.b16 %v2130
    %v2664 = vunpack.c.h.b16 %v2130
    %v2665 = vunpack.c.l.b16 %v2131
    %v2666 = vunpack.c.h.b16 %v2131
    %v2667 = vunpack.c.l.b16 %v2132
    %v2668 = vunpack.c.l.b16 %v2133
    %v2669 = vunpack.c.h.b16 %v2133
    %v2670 = vunpack.c.l.b16 %v2134
    %v2671 = vunpack.c.h.b16 %v2134
    %v2672 = vunpack.c.l.b16 %v2135
    %v2673 = vunpack.c.l.b16 %v2136
    %v2674 = vunpack.c.h.b16 %v2136
    %v2675 = vunpack.c.l.b16 %v2137
    %v2676 = vunpack.c.h.b16 %v2137
    %v2677 = vunpack.c.l.b16 %v2138
    %v2678 = vunpack.c.l.b16 %v2139
    %v2679 = vunpack.c.h.b16 %v2139
    %v2680 = vunpack.c.l.b16 %v2140
    %v2681 = vunpack.c.h.b16 %v2140
    %v2682 = vunpack.c.l.b16 %v2141
    %v2683 = vunpack.c.l.b16 %v2142
    %v2684 = vunpack.c.h.b16 %v2142
    %v2685 = vunpack.c.l.b16 %v2143
    %v2686 = vunpack.c.h.b16 %v2143
    %v2687 = vunpack.c.l.b16 %v2144
    %v2688 = vunpack.c.l.b16 %v2145
    %v2689 = vunpack.c.h.b16 %v2145
    %v2690 = vunpack.c.l.b16 %v2146
    %v2691 = vunpack.c.h.b16 %v2146
    %v2692 = vunpack.c.l.b16 %v2147
    %v2693 = vunpack.c.l.b16 %v2148
    %v2694 = vunpack.c.h.b16 %v2148
    %v2695 = vunpack.c.l.b16 %v2149
    %v2696 = vunpack.c.h.b16 %v2149
    %v2697 = vunpack.c.l.b16 %v2150
    %v2698 = vunpack.c.l.b16 %v2151
    %v2699 = vunpack.c.h.b16 %v2151
    %v2700 = vunpack.c.l.b16 %v2152
    %v2701 = vunpack.c.h.b16 %v2152
    %v2702 = vunpack.c.l.b16 %v2153
    %v2703 = vunpack.c.l.b16 %v2154
    %v2704 = vunpack.c.h.b16 %v2154
    %v2705 = vunpack.c.l.b16 %v2155
    %v2706 = vunpack.c.h.b16 %v2155
    %v2707 = vunpack.c.l.b16 %v2156
    %v2708 = vunpack.c.l.b16 %v2157
    %v2709 = vunpack.c.h.b16 %v2157
    %v2710 = vunpack.c.l.b16 %v2158
    %v2711 = vunpack.c.h.b16 %v2158
    %v2712 = vunpack.c.l.b16 %v2159
    %v2713 = vunpack.c.l.b16 %v2160
    %v2714 = vunpack.c.h.b16 %v2160
    %v2715 = vunpack.c.l.b16 %v2161
    %v2716 = vunpack.c.h.b16 %v2161
    %v2717 = vunpack.c.l.b16 %v2162
    %v2718 = vunpack.c.l.b16 %v2163
    %v2719 = vunpack.c.h.b16 %v2163
    %v2720 = vunpack.c.l.b16 %v2164
    %v2721 = vunpack.c.h.b16 %v2164
    %v2722 = vunpack.c.l.b16 %v2165
    %v2723 = vunpack.c.l.b16 %v2166
    %v2724 = vunpack.c.h.b16 %v2166
    %v2725 = vunpack.c.l.b16 %v2167
    %v2726 = vunpack.c.h.b16 %v2167
    %v2727 = vunpack.c.l.b16 %v2168
    %v2728 = vunpack.c.l.b16 %v2169
    %v2729 = vunpack.c.h.b16 %v2169
    %v2730 = vunpack.c.l.b16 %v2170
    %v2731 = vunpack.c.h.b16 %v2170
    %v2732 = vunpack.c.l.b16 %v2171
    %v2733 = vunpack.c.l.b16 %v2172
    %v2734 = vunpack.c.h.b16 %v2172
    %v2735 = vunpack.c.l.b16 %v2173
    %v2736 = vunpack.c.h.b16 %v2173
    %v2737 = vunpack.c.l.b16 %v2174
    %v2738 = vunpack.c.l.b16 %v2175
    %v2739 = vunpack.c.h.b16 %v2175
    %v2740 = vunpack.c.l.b16 %v2176
    %v2741 = vunpack.c.h.b16 %v2176
    %v2742 = vunpack.c.l.b16 %v2177
    %v2743 = vunpack.c.l.b16 %v2178
    %v2744 = vunpack.c.h.b16 %v2178
    %v2745 = vunpack.c.l.b16 %v2179
    %v2746 = vunpack.c.h.b16 %v2179
    %v2747 = vunpack.c.l.b16 %v2180
    %v2748 = vunpack.c.l.b16 %v2181
    %v2749 = vunpack.c.h.b16 %v2181
    %v2750 = vunpack.c.l.b16 %v2182
    %v2751 = vunpack.c.h.b16 %v2182
    %v2752 = vunpack.c.l.b16 %v2183
    %v2753 = vunpack.c.l.b16 %v2184
    %v2754 = vunpack.c.h.b16 %v2184
    %v2755 = vunpack.c.l.b16 %v2185
    %v2756 = vunpack.c.h.b16 %v2185
    %v2757 = vunpack.c.l.b16 %v2186
    %v2758 = vunpack.c.l.b16 %v2187
    %v2759 = vunpack.c.h.b16 %v2187
    %v2760 = vunpack.c.l.b16 %v2188
    %v2761 = vunpack.c.h.b16 %v2188
    %v2762 = vunpack.c.l.b16 %v2189
    %v2763 = vunpack.c.l.b16 %v2190
    %v2764 = vunpack.c.h.b16 %v2190
    %v2765 = vunpack.c.l.b16 %v2191
    %v2766 = vunpack.c.h.b16 %v2191
    %v2767 = vunpack.c.l.b16 %v2192
    %v2768 = vunpack.c.l.b16 %v2193
    %v2769 = vunpack.c.h.b16 %v2193
    %v2770 = vunpack.c.l.b16 %v2194
    %v2771 = vunpack.c.h.b16 %v2194
    %v2772 = vunpack.c.l.b16 %v2195
    %v2773 = vunpack.c.l.b16 %v2196
    %v2774 = vunpack.c.h.b16 %v2196
    %v2775 = vunpack.c.l.b16 %v2197
    %v2776 = vunpack.c.h.b16 %v2197
    %v2777 = vunpack.c.l.b16 %v2198
    %v2778 = vunpack.c.l.b16 %v2199
    %v2779 = vunpack.c.h.b16 %v2199
    %v2780 = vunpack.c.l.b16 %v2200
    %v2781 = vunpack.c.h.b16 %v2200
    %v2782 = vunpack.c.l.b16 %v2201
    %v2783 = vunpack.c.l.b16 %v2202
    %v2784 = vunpack.c.h.b16 %v2202
    %v2785 = vunpack.c.l.b16 %v2203
    %v2786 = vunpack.c.h.b16 %v2203
    %v2787 = vunpack.c.l.b16 %v2204
    %v2788 = vunpack.c.l.b16 %v2205
    %v2789 = vunpack.c.h.b16 %v2205
    %v2790 = vunpack.c.l.b16 %v2206
    %v2791 = vunpack.c.h.b16 %v2206
    %v2792 = vunpack.c.l.b16 %v2207
    %v2793 = vunpack.c.l.b16 %v2208
    %v2794 = vunpack.c.h.b16 %v2208
    %v2795 = vunpack.c.l.b16 %v2209
    %v2796 = vunpack.c.h.b16 %v2209
    %v2797 = vunpack.c.l.b16 %v2210
    %v2798 = vunpack.c.l.b16 %v2211
    %v2799 = vunpack.c.h.b16 %v2211
    %v2800 = vunpack.c.l.b16 %v2212
    %v2801 = vunpack.c.h.b16 %v2212
    %v2802 = vunpack.c.l.b16 %v2213
    %v2803 = vunpack.c.l.b16 %v2214
    %v2804 = vunpack.c.h.b16 %v2214
    %v2805 = vunpack.c.l.b16 %v2215
    %v2806 = vunpack.c.h.b16 %v2215
    %v2807 = vunpack.c.l.b16 %v2216
    %v2808 = vunpack.c.l.b16 %v2217
    %v2809 = vunpack.c.h.b16 %v2217
    %v2810 = vunpack.c.l.b16 %v2218
    %v2811 = vunpack.c.h.b16 %v2218
    %v2812 = vunpack.c.l.b16 %v2219
    %v2813 = vunpack.c.l.b16 %v2220
    %v2814 = vunpack.c.h.b16 %v2220
    %v2815 = vunpack.c.l.b16 %v2221
    %v2816 = vunpack.c.h.b16 %v2221
    %v2817 = vunpack.c.l.b16 %v2222
    %v2818 = vunpack.c.l.b16 %v2223
    %v2819 = vunpack.c.h.b16 %v2223
    %v2820 = vunpack.c.l.b16 %v2224
    %v2821 = vunpack.c.h.b16 %v2224
    %v2822 = vunpack.c.l.b16 %v2225
    %v2823 = vunpack.c.l.b16 %v2226
    %v2824 = vunpack.c.h.b16 %v2226
    %v2825 = vunpack.c.l.b16 %v2227
    %v2826 = vunpack.c.h.b16 %v2227
    %v2827 = vunpack.c.l.b16 %v2228
    %v2828 = vunpack.c.l.b16 %v2229
    %v2829 = vunpack.c.h.b16 %v2229
    %v2830 = vunpack.c.l.b16 %v2230
    %v2831 = vunpack.c.h.b16 %v2230
    %v2832 = vunpack.c.l.b16 %v2231
    %v2833 = vunpack.c.l.b16 %v2232
    %v2834 = vunpack.c.h.b16 %v2232
    %v2835 = vunpack.c.l.b16 %v2233
    %v2836 = vunpack.c.h.b16 %v2233
    %v2837 = vunpack.c.l.b16 %v2234
    %v2838 = vunpack.c.l.b16 %v2235
    %v2839 = vunpack.c.h.b16 %v2235
    %v2840 = vunpack.c.l.b16 %v2236
    %v2841 = vunpack.c.h.b16 %v2236
    %v2842 = vunpack.c.l.b16 %v2237
    %v2843 = vunpack.c.l.b16 %v2238
    %v2844 = vunpack.c.h.b16 %v2238
    %v2845 = vunpack.c.l.b16 %v2239
    %v2846 = vunpack.c.h.b16 %v2239
    %v2847 = vunpack.c.l.b16 %v2240
    %v2848 = vunpack.c.l.b16 %v2241
    %v2849 = vunpack.c.h.b16 %v2241
    %v2850 = vunpack.c.l.b16 %v2242
    %v2851 = vunpack.c.h.b16 %v2242
    %v2852 = vunpack.c.l.b16 %v2243
    %v2853 = vunpack.c.l.b16 %v2244
    %v2854 = vunpack.c.h.b16 %v2244
    %v2855 = vunpack.c.l.b16 %v2245
    %v2856 = vunpack.c.h.b16 %v2245
    %v2857 = vunpack.c.l.b16 %v2246
    %v2858 = vunpack.c.l.b16 %v2247
    %v2859 = vunpack.c.h.b16 %v2247
    %v2860 = vunpack.c.l.b16 %v2248
    %v2861 = vunpack.c.h.b16 %v2248
    %v2862 = vunpack.c.l.b16 %v2249
    %v2863 = vunpack.c.l.b16 %v2250
    %v2864 = vunpack.c.h.b16 %v2250
    %v2865 = vunpack.c.l.b16 %v2251
    %v2866 = vunpack.c.h.b16 %v2251
    %v2867 = vunpack.c.l.b16 %v2252
    %v2868 = vunpack.c.l.b16 %v2253
    %v2869 = vunpack.c.h.b16 %v2253
    %v2870 = vunpack.c.l.b16 %v2254
    %v2871 = vunpack.c.h.b16 %v2254
    %v2872 = vunpack.c.l.b16 %v2255
    %v2873 = vunpack.c.l.b16 %v2256
    %v2874 = vunpack.c.h.b16 %v2256
    %v2875 = vunpack.c.l.b16 %v2257
    %v2876 = vunpack.c.h.b16 %v2257
    %v2877 = vunpack.c.l.b16 %v2258
    %v2878 = vunpack.c.l.b16 %v2259
    %v2879 = vunpack.c.h.b16 %v2259
    %v2880 = vunpack.c.l.b16 %v2260
    %v2881 = vunpack.c.h.b16 %v2260
    %v2882 = vunpack.c.l.b16 %v2261
    %v2883 = vunpack.c.l.b16 %v2262
    %v2884 = vunpack.c.h.b16 %v2262
    %v2885 = vunpack.c.l.b16 %v2263
    %v2886 = vunpack.c.h.b16 %v2263
    %v2887 = vunpack.c.l.b16 %v2264
    %v2888 = vunpack.c.l.b16 %v2265
    %v2889 = vunpack.c.h.b16 %v2265
    %v2890 = vunpack.c.l.b16 %v2266
    %v2891 = vunpack.c.h.b16 %v2266
    %v2892 = vunpack.c.l.b16 %v2267
    %v2893 = vunpack.c.l.b16 %v2268
    %v2894 = vunpack.c.h.b16 %v2268
    %v2895 = vunpack.c.l.b16 %v2269
    %v2896 = vunpack.c.h.b16 %v2269
    %v2897 = vunpack.c.l.b16 %v2270
    %v2898 = vunpack.c.l.b16 %v2271
    %v2899 = vunpack.c.h.b16 %v2271
    %v2900 = vunpack.c.l.b16 %v2272
    %v2901 = vunpack.c.h.b16 %v2272
    %v2902 = vunpack.c.l.b16 %v2273
    %v2903 = vunpack.c.l.b16 %v2274
    %v2904 = vunpack.c.h.b16 %v2274
    %v2905 = vunpack.c.l.b16 %v2275
    %v2906 = vunpack.c.h.b16 %v2275
    %v2907 = vunpack.c.l.b16 %v2276
    %v2908 = vunpack.c.l.b16 %v2277
    %v2909 = vunpack.c.h.b16 %v2277
    %v2910 = vunpack.c.l.b16 %v2278
    %v2911 = vunpack.c.h.b16 %v2278
    %v2912 = vunpack.c.l.b16 %v2279
    %v2913 = vunpack.c.l.b16 %v2280
    %v2914 = vunpack.c.h.b16 %v2280
    %v2915 = vunpack.c.l.b16 %v2281
    %v2916 = vunpack.c.h.b16 %v2281
    %v2917 = vunpack.c.l.b16 %v2282
    %v2918 = vunpack.c.l.b16 %v2283
    %v2919 = vunpack.c.h.b16 %v2283
    %v2920 = vunpack.c.l.b16 %v2284
    %v2921 = vunpack.c.h.b16 %v2284
    %v2922 = vunpack.c.l.b16 %v2285
    %v2923 = vunpack.c.l.b16 %v2286
    %v2924 = vunpack.c.h.b16 %v2286
    %v2925 = vunpack.c.l.b16 %v2287
    %v2926 = vunpack.c.h.b16 %v2287
    %v2927 = vunpack.c.l.b16 %v2288
    %v2928 = vunpack.c.l.b16 %v2289
    %v2929 = vunpack.c.h.b16 %v2289
    %v2930 = vunpack.c.l.b16 %v2290
    %v2931 = vunpack.c.h.b16 %v2290
    %v2932 = vunpack.c.l.b16 %v2291
    %v2933 = vunpack.c.l.b16 %v2292
    %v2934 = vunpack.c.h.b16 %v2292
    %v2935 = vunpack.c.l.b16 %v2293
    %v2936 = vunpack.c.h.b16 %v2293
    %v2937 = vunpack.c.l.b16 %v2294
    %v2938 = vunpack.c.l.b16 %v2295
    %v2939 = vunpack.c.h.b16 %v2295
    %v2940 = vunpack.c.l.b16 %v2296
    %v2941 = vunpack.c.h.b16 %v2296
    %v2942 = vunpack.c.l.b16 %v2297
    %v2943 = vunpack.c.l.b16 %v2298
    %v2944 = vunpack.c.h.b16 %v2298
    %v2945 = vunpack.c.l.b16 %v2299
    %v2946 = vunpack.c.h.b16 %v2299
    %v2947 = vunpack.c.l.b16 %v2300
    %v2948 = vunpack.c.l.b16 %v2301
    %v2949 = vunpack.c.h.b16 %v2301
    %v2950 = vunpack.c.l.b16 %v2302
    %v2951 = vunpack.c.h.b16 %v2302
    %v2952 = vunpack.c.l.b16 %v2303
    %v2953 = vunpack.c.l.b16 %v2304
    %v2954 = vunpack.c.h.b16 %v2304
    %v2955 = vunpack.c.l.b16 %v2305
    %v2956 = vunpack.c.h.b16 %v2305
    %v2957 = vunpack.c.l.b16 %v2306
    %v2958 = vunpack.c.l.b16 %v2307
    %v2959 = vunpack.c.h.b16 %v2307
    %v2960 = vunpack.c.l.b16 %v2308
    %v2961 = vunpack.c.h.b16 %v2308
    %v2962 = vunpack.c.l.b16 %v2309
    %v2963 = vunpack.c.l.b16 %v2310
    %v2964 = vunpack.c.h.b16 %v2310
    %v2965 = vunpack.c.l.b16 %v2311
    %v2966 = vunpack.c.h.b16 %v2311
    %v2967 = vunpack.c.l.b16 %v2312
    %v2968 = vunpack.c.l.b16 %v2313
    %v2969 = vunpack.c.h.b16 %v2313
    %v2970 = vunpack.c.l.b16 %v2314
    %v2971 = vunpack.c.h.b16 %v2314
    %v2972 = vunpack.c.l.b16 %v2315
    %v2973 = vunpack.c.l.b16 %v2316
    %v2974 = vunpack.c.h.b16 %v2316
    %v2975 = vunpack.c.l.b16 %v2317
    %v2976 = vunpack.c.h.b16 %v2317
    %v2977 = vunpack.c.l.b16 %v2318
    %v2978 = vunpack.c.l.b16 %v2319
    %v2979 = vunpack.c.h.b16 %v2319
    %v2980 = vunpack.c.l.b16 %v2320
    %v2981 = vunpack.c.h.b16 %v2320
    %v2982 = vunpack.c.l.b16 %v2321
    %v2983 = vunpack.c.l.b16 %v2322
    %v2984 = vunpack.c.h.b16 %v2322
    %v2985 = vunpack.c.l.b16 %v2323
    %v2986 = vunpack.c.h.b16 %v2323
    %v2987 = vunpack.c.l.b16 %v2324
    %v2988 = vunpack.c.l.b16 %v2325
    %v2989 = vunpack.c.h.b16 %v2325
    %v2990 = vunpack.c.l.b16 %v2326
    %v2991 = vunpack.c.h.b16 %v2326
    %v2992 = vunpack.c.l.b16 %v2327
    %v2993 = vunpack.c.l.b16 %v2328
    %v2994 = vunpack.c.h.b16 %v2328
    %v2995 = vunpack.c.l.b16 %v2329
    %v2996 = vunpack.c.h.b16 %v2329
    %v2997 = vunpack.c.l.b16 %v2330
    %v2998 = vpack.c.b16 %v2603, %v2598
    %v2999 = vpack.c.b16 %v2604, %v2599
    %v3000 = vpack.c.b16 %v2605, %v2600
    %v3001 = vpack.c.b16 %v2606, %v2601
    %v3002 = vpack.c.b16 %v2607, %v2602
    %v3003 = vpack.c.b16 %v2613, %v2608
    %v3004 = vpack.c.b16 %v2614, %v2609
    %v3005 = vpack.c.b16 %v2615, %v2610
    %v3006 = vpack.c.b16 %v2616, %v2611
    %v3007 = vpack.c.b16 %v2617, %v2612
    %v3008 = vpack.c.b16 %v2623, %v2618
    %v3009 = vpack.c.b16 %v2624, %v2619
    %v3010 = vpack.c.b16 %v2625, %v2620
    %v3011 = vpack.c.b16 %v2626, %v2621
    %v3012 = vpack.c.b16 %v2627, %v2622
    %v3013 = vpack.c.b16 %v2633, %v2628
    %v3014 = vpack.c.b16 %v2634, %v2629
    %v3015 = vpack.c.b16 %v2635, %v2630
    %v3016 = vpack.c.b16 %v2636, %v2631
    %v3017 = vpack.c.b16 %v2637, %v2632
    %v3018 = vpack.c.b16 %v2643, %v2638
    %v3019 = vpack.c.b16 %v2644, %v2639
    %v3020 = vpack.c.b16 %v2645, %v2640
    %v3021 = vpack.c.b16 %v2646, %v2641
    %v3022 = vpack.c.b16 %v2647, %v2642
    %v3023 = vpack.c.b16 %v2653, %v2648
    %v3024 = vpack.c.b16 %v2654, %v2649
    %v3025 = vpack.c.b16 %v2655, %v2650
    %v3026 = vpack.c.b16 %v2656, %v2651
    %v3027 = vpack.c.b16 %v2657, %v2652
    %v3028 = vpack.c.b16 %v2663, %v2658
    %v3029 = vpack.c.b16 %v2664, %v2659
    %v3030 = vpack.c.b16 %v2665, %v2660
    %v3031 = vpack.c.b16 %v2666, %v2661
    %v3032 = vpack.c.b16 %v2667, %v2662
    %v3033 = vpack.c.b16 %v2673, %v2668
    %v3034 = vpack.c.b16 %v2674, %v2669
    %v3035 = vpack.c.b16 %v2675, %v2670
    %v3036 = vpack.c.b16 %v2676, %v2671
    %v3037 = vpack.c.b16 %v2677, %v2672
    %v3038 = vpack.c.b16 %v2683, %v2678
    %v3039 = vpack.c.b16 %v2684, %v2679
    %v3040 = vpack.c.b16 %v2685, %v2680
    %v3041 = vpack.c.b16 %v2686, %v2681
    %v3042 = vpack.c.b16 %v2687, %v2682
    %v3043 = vpack.c.b16 %v2693, %v2688
    %v3044 = vpack.c.b16 %v2694, %v2689
    %v3045 = vpack.c.b16 %v2695, %v2690
    %v3046 = vpack.c.b16 %v2696, %v2691
    %v3047 = vpack.c.b16 %v2697, %v2692
    %v3048 = vpack.c.b16 %v2703, %v2698
    %v3049 = vpack.c.b16 %v2704, %v2699
    %v3050 = vpack.c.b16 %v2705, %v2700
    %v3051 = vpack.c.b16 %v2706, %v2701
    %v3052 = vpack.c.b16 %v2707, %v2702
    %v3053 = vpack.c.b16 %v2713, %v2708
    %v3054 = vpack.c.b16 %v2714, %v2709
    %v3055 = vpack.c.b16 %v2715, %v2710
    %v3056 = vpack.c.b16 %v2716, %v2711
    %v3057 = vpack.c.b16 %v2717, %v2712
    %v3058 = vpack.c.b16 %v2723, %v2718
    %v3059 = vpack.c.b16 %v2724, %v2719
    %v3060 = vpack.c.b16 %v2725, %v2720
    %v3061 = vpack.c.b16 %v2726, %v2721
    %v3062 = vpack.c.b16 %v2727, %v2722
    %v3063 = vpack.c.b16 %v2733, %v2728
    %v3064 = vpack.c.b16 %v2734, %v2729
    %v3065 = vpack.c.b16 %v2735, %v2730
    %v3066 = vpack.c.b16 %v2736, %v2731
    %v3067 = vpack.c.b16 %v2737, %v2732
    %v3068 = vpack.c.b16 %v2743, %v2738
    %v3069 = vpack.c.b16 %v2744, %v2739
    %v3070 = vpack.c.b16 %v2745, %v2740
    %v3071 = vpack.c.b16 %v2746, %v2741
    %v3072 = vpack.c.b16 %v2747, %v2742
    %v3073 = vpack.c.b16 %v2753, %v2748
    %v3074 = vpack.c.b16 %v2754, %v2749
    %v3075 = vpack.c.b16 %v2755, %v2750
    %v3076 = vpack.c.b16 %v2756, %v2751
    %v3077 = vpack.c.b16 %v2757, %v2752
    %v3078 = vpack.c.b16 %v2763, %v2758
    %v3079 = vpack.c.b16 %v2764, %v2759
    %v3080 = vpack.c.b16 %v2765, %v2760
    %v3081 = vpack.c.b16 %v2766, %v2761
    %v3082 = vpack.c.b16 %v2767, %v2762
    %v3083 = vpack.c.b16 %v2773, %v2768
    %v3084 = vpack.c.b16 %v2774, %v2769
    %v3085 = vpack.c.b16 %v2775, %v2770
    %v3086 = vpack.c.b16 %v2776, %v2771
    %v3087 = vpack.c.b16 %v2777, %v2772
    %v3088 = vpack.c.b16 %v2783, %v2778
    %v3089 = vpack.c.b16 %v2784, %v2779
    %v3090 = vpack.c.b16 %v2785, %v2780
    %v3091 = vpack.c.b16 %v2786, %v2781
    %v3092 = vpack.c.b16 %v2787, %v2782
    %v3093 = vpack.c.b16 %v2793, %v2788
    %v3094 = vpack.c.b16 %v2794, %v2789
    %v3095 = vpack.c.b16 %v2795, %v2790
    %v3096 = vpack.c.b16 %v2796, %v2791
    %v3097 = vpack.c.b16 %v2797, %v2792
    %v3098 = vpack.c.b16 %v2803, %v2798
    %v3099 = vpack.c.b16 %v2804, %v2799
    %v3100 = vpack.c.b16 %v2805, %v2800
    %v3101 = vpack.c.b16 %v2806, %v2801
    %v3102 = vpack.c.b16 %v2807, %v2802
    %v3103 = vpack.c.b16 %v2813, %v2808
    %v3104 = vpack.c.b16 %v2814, %v2809
    %v3105 = vpack.c.b16 %v2815, %v2810
    %v3106 = vpack.c.b16 %v2816, %v2811
    %v3107 = vpack.c.b16 %v2817, %v2812
    %v3108 = vpack.c.b16 %v2823, %v2818
    %v3109 = vpack.c.b16 %v2824, %v2819
    %v3110 = vpack.c.b16 %v2825, %v2820
    %v3111 = vpack.c.b16 %v2826, %v2821
    %v3112 = vpack.c.b16 %v2827, %v2822
    %v3113 = vpack.c.b16 %v2833, %v2828
    %v3114 = vpack.c.b16 %v2834, %v2829
    %v3115 = vpack.c.b16 %v2835, %v2830
    %v3116 = vpack.c.b16 %v2836, %v2831
    %v3117 = vpack.c.b16 %v2837, %v2832
    %v3118 = vpack.c.b16 %v2843, %v2838
    %v3119 = vpack.c.b16 %v2844, %v2839
    %v3120 = vpack.c.b16 %v2845, %v2840
    %v3121 = vpack.c.b16 %v2846, %v2841
    %v3122 = vpack.c.b16 %v2847, %v2842
    %v3123 = vpack.c.b16 %v2853, %v2848
    %v3124 = vpack.c.b16 %v2854, %v2849
    %v3125 = vpack.c.b16 %v2855, %v2850
    %v3126 = vpack.c.b16 %v2856, %v2851
    %v3127 = vpack.c.b16 %v2857, %v2852
    %v3128 = vpack.c.b16 %v2863, %v2858
    %v3129 = vpack.c.b16 %v2864, %v2859
    %v3130 = vpack.c.b16 %v2865, %v2860
    %v3131 = vpack.c.b16 %v2866, %v2861
    %v3132 = vpack.c.b16 %v2867, %v2862
    %v3133 = vpack.c.b16 %v2873, %v2868
    %v3134 = vpack.c.b16 %v2874, %v2869
    %v3135 = vpack.c.b16 %v2875, %v2870
    %v3136 = vpack.c.b16 %v2876, %v2871
    %v3137 = vpack.c.b16 %v2877, %v2872
    %v3138 = vpack.c.b16 %v2883, %v2878
    %v3139 = vpack.c.b16 %v2884, %v2879
    %v3140 = vpack.c.b16 %v2885, %v2880
    %v3141 = vpack.c.b16 %v2886, %v2881
    %v3142 = vpack.c.b16 %v2887, %v2882
    %v3143 = vpack.c.b16 %v2893, %v2888
    %v3144 = vpack.c.b16 %v2894, %v2889
    %v3145 = vpack.c.b16 %v2895, %v2890
    %v3146 = vpack.c.b16 %v2896, %v2891
    %v3147 = vpack.c.b16 %v2897, %v2892
    %v3148 = vpack.c.b16 %v2903, %v2898
    %v3149 = vpack.c.b16 %v2904, %v2899
    %v3150 = vpack.c.b16 %v2905, %v2900
    %v3151 = vpack.c.b16 %v2906, %v2901
    %v3152 = vpack.c.b16 %v2907, %v2902
    %v3153 = vpack.c.b16 %v2913, %v2908
    %v3154 = vpack.c.b16 %v2914, %v2909
    %v3155 = vpack.c.b16 %v2915, %v2910
    %v3156 = vpack.c.b16 %v2916, %v2911
    %v3157 = vpack.c.b16 %v2917, %v2912
    %v3158 = vpack.c.b16 %v2923, %v2918
    %v3159 = vpack.c.b16 %v2924, %v2919
    %v3160 = vpack.c.b16 %v2925, %v2920
    %v3161 = vpack.c.b16 %v2926, %v2921
    %v3162 = vpack.c.b16 %v2927, %v2922
    %v3163 = vpack.c.b16 %v2933, %v2928
    %v3164 = vpack.c.b16 %v2934, %v2929
    %v3165 = vpack.c.b16 %v2935, %v2930
    %v3166 = vpack.c.b16 %v2936, %v2931
    %v3167 = vpack.c.b16 %v2937, %v2932
    %v3168 = vpack.c.b16 %v2943, %v2938
    %v3169 = vpack.c.b16 %v2944, %v2939
    %v3170 = vpack.c.b16 %v2945, %v2940
    %v3171 = vpack.c.b16 %v2946, %v2941
    %v3172 = vpack.c.b16 %v2947, %v2942
    %v3173 = vpack.c.b16 %v2953, %v2948
    %v3174 = vpack.c.b16 %v2954, %v2949
    %v3175 = vpack.c.b16 %v2955, %v2950
    %v3176 = vpack.c.b16 %v2956, %v2951
    %v3177 = vpack.c.b16 %v2957, %v2952
    %v3178 = vpack.c.b16 %v2963, %v2958
    %v3179 = vpack.c.b16 %v2964, %v2959
    %v3180 = vpack.c.b16 %v2965, %v2960
    %v3181 = vpack.c.b16 %v2966, %v2961
    %v3182 = vpack.c.b16 %v2967, %v2962
    %v3183 = vpack.c.b16 %v2973, %v2968
    %v3184 = vpack.c.b16 %v2974, %v2969
    %v3185 = vpack.c.b16 %v2975, %v2970
    %v3186 = vpack.c.b16 %v2976, %v2971
    %v3187 = vpack.c.b16 %v2977, %v2972
    %v3188 = vpack.c.b16 %v2983, %v2978
    %v3189 = vpack.c.b16 %v2984, %v2979
    %v3190 = vpack.c.b16 %v2985, %v2980
    %v3191 = vpack.c.b16 %v2986, %v2981
    %v3192 = vpack.c.b16 %v2987, %v2982
    %v3193 = vpack.c.b16 %v2993, %v2988
    %v3194 = vpack.c.b16 %v2994, %v2989
    %v3195 = vpack.c.b16 %v2995, %v2990
    %v3196 = vpack.c.b16 %v2996, %v2991
    %v3197 = vpack.c.b16 %v2997, %v2992
    %3398 = vmatprep.subr.bf16.mxu0 %v2999
    %3399 = vmatpush1.bf16.msra.mxu0 %v2998
    %3400 = vmatprep.subr.bf16.mxu0 %v3004
    %3401 = vmatpush1.bf16.msra.mxu0 %v3003
    %3402 = vmatprep.subr.bf16.mxu0 %v3009
    %3403 = vmatpush1.bf16.msra.mxu0 %v3008
    %3404 = vmatprep.subr.bf16.mxu0 %v3014
    %3405 = vmatpush1.bf16.msra.mxu0 %v3013
    %3406 = vmatprep.subr.bf16.mxu0 %v3019
    %3407 = vmatpush1.bf16.msra.mxu0 %v3018
    %3408 = vmatprep.subr.bf16.mxu0 %v3024
    %3409 = vmatpush1.bf16.msra.mxu0 %v3023
    %3410 = vmatprep.subr.bf16.mxu0 %v3029
    %3411 = vmatpush1.bf16.msra.mxu0 %v3028
    %3412 = vmatprep.subr.bf16.mxu0 %v3034
    %3413 = vmatpush1.bf16.msra.mxu0 %v3033
    %3414 = vmatprep.subr.bf16.mxu0 %v3039
    %3415 = vmatpush1.bf16.msra.mxu0 %v3038
    %3416 = vmatprep.subr.bf16.mxu0 %v3044
    %3417 = vmatpush1.bf16.msra.mxu0 %v3043
    %3418 = vmatprep.subr.bf16.mxu0 %v3049
    %3419 = vmatpush1.bf16.msra.mxu0 %v3048
    %3420 = vmatprep.subr.bf16.mxu0 %v3054
    %3421 = vmatpush1.bf16.msra.mxu0 %v3053
    %3422 = vmatprep.subr.bf16.mxu0 %v3059
    %3423 = vmatpush1.bf16.msra.mxu0 %v3058
    %3424 = vmatprep.subr.bf16.mxu0 %v3064
    %3425 = vmatpush1.bf16.msra.mxu0 %v3063
    %3426 = vmatprep.subr.bf16.mxu0 %v3069
    %3427 = vmatpush1.bf16.msra.mxu0 %v3068
    %3428 = vmatprep.subr.bf16.mxu0 %v3074
    %3429 = vmatpush1.bf16.msra.mxu0 %v3073
    %3430 = vmatprep.mubr.bf16.mxu0 %v2087
    %3431 = vmatmul.mubr.bf16.gmra.mrb[0].mxu0 %v2086
    %v3432 = vpop.f32.mrb[0].mxu0
    %v3433 = vadd.f32 %v2336, %v3432
    %v3434 = vpop.f32.mrb[0].mxu0
    %v3435 = vadd.f32 %v2340, %v3434
    %v3436 = vpop.f32.mrb[0].mxu0
    %v3437 = vpop.f32.mrb[0].mxu0
    %3438 = vdwg.mxu0
    %3439 = vmatprep.subr.bf16.mxu0 %v3079
    %3440 = vmatpush1.bf16.msra.mxu0 %v3078
    %3441 = vmatprep.subr.bf16.mxu0 %v3084
    %3442 = vmatpush1.bf16.msra.mxu0 %v3083
    %3443 = vmatprep.subr.bf16.mxu0 %v3089
    %3444 = vmatpush1.bf16.msra.mxu0 %v3088
    %3445 = vmatprep.subr.bf16.mxu0 %v3094
    %3446 = vmatpush1.bf16.msra.mxu0 %v3093
    %3447 = vmatprep.subr.bf16.mxu0 %v3099
    %3448 = vmatpush1.bf16.msra.mxu0 %v3098
    %3449 = vmatprep.subr.bf16.mxu0 %v3104
    %3450 = vmatpush1.bf16.msra.mxu0 %v3103
    %3451 = vmatprep.subr.bf16.mxu0 %v3109
    %3452 = vmatpush1.bf16.msra.mxu0 %v3108
    %3453 = vmatprep.subr.bf16.mxu0 %v3114
    %3454 = vmatpush1.bf16.msra.mxu0 %v3113
    %3455 = vmatprep.subr.bf16.mxu0 %v3119
    %3456 = vmatpush1.bf16.msra.mxu0 %v3118
    %3457 = vmatprep.subr.bf16.mxu0 %v3124
    %3458 = vmatpush1.bf16.msra.mxu0 %v3123
    %3459 = vmatprep.subr.bf16.mxu0 %v3129
    %3460 = vmatpush1.bf16.msra.mxu0 %v3128
    %3461 = vmatprep.subr.bf16.mxu0 %v3134
    %3462 = vmatpush1.bf16.msra.mxu0 %v3133
    %3463 = vmatprep.subr.bf16.mxu0 %v3139
    %3464 = vmatpush1.bf16.msra.mxu0 %v3138
    %3465 = vmatprep.subr.bf16.mxu0 %v3144
    %3466 = vmatpush1.bf16.msra.mxu0 %v3143
    %3467 = vmatprep.subr.bf16.mxu0 %v3149
    %3468 = vmatpush1.bf16.msra.mxu0 %v3148
    %3469 = vmatprep.subr.bf16.mxu0 %v3154
    %3470 = vmatpush1.bf16.msra.mxu0 %v3153
    %3471 = vmatprep.mubr.bf16.mxu0 %v2089
    %3472 = vmatmul.mubr.bf16.gmra.mrb[0].mxu0 %v2088
    %v3473 = vpop.f32.mrb[0].mxu0
    %v3474 = vadd.f32 %v3433, %v3473
    %v3475 = vpop.f32.mrb[0].mxu0
    %v3476 = vadd.f32 %v3435, %v3475
    %v3477 = vpop.f32.mrb[0].mxu0
    %v3478 = vpop.f32.mrb[0].mxu0
    %3479 = vdwg.mxu0
    %3480 = vmatprep.subr.bf16.mxu0 %v3159
    %3481 = vmatpush1.bf16.msra.mxu0 %v3158
    %3482 = vmatprep.subr.bf16.mxu0 %v3164
    %3483 = vmatpush1.bf16.msra.mxu0 %v3163
    %3484 = vmatprep.subr.bf16.mxu0 %v3169
    %3485 = vmatpush1.bf16.msra.mxu0 %v3168
    %3486 = vmatprep.subr.bf16.mxu0 %v3174
    %3487 = vmatpush1.bf16.msra.mxu0 %v3173
    %3488 = vmatprep.subr.bf16.mxu0 %v3179
    %3489 = vmatpush1.bf16.msra.mxu0 %v3178
    %3490 = vmatprep.subr.bf16.mxu0 %v3184
    %3491 = vmatpush1.bf16.msra.mxu0 %v3183
    %3492 = vmatprep.subr.bf16.mxu0 %v3189
    %3493 = vmatpush1.bf16.msra.mxu0 %v3188
    %3494 = vmatprep.subr.bf16.mxu0 %v3194
    %3495 = vmatpush1.bf16.msra.mxu0 %v3193
    %3496 = vmatprep.subr.bf16.mxu0 0
    %3497 = vmatpush1.bf16.msra.mxu0 0
    %3498 = vmatprep.subr.bf16.mxu0 0
    %3499 = vmatpush1.bf16.msra.mxu0 0
    %3500 = vmatprep.subr.bf16.mxu0 0
    %3501 = vmatpush1.bf16.msra.mxu0 0
    %3502 = vmatprep.subr.bf16.mxu0 0
    %3503 = vmatpush1.bf16.msra.mxu0 0
    %3504 = vmatprep.subr.bf16.mxu0 0
    %3505 = vmatpush1.bf16.msra.mxu0 0
    %3506 = vmatprep.subr.bf16.mxu0 0
    %3507 = vmatpush1.bf16.msra.mxu0 0
    %3508 = vmatprep.subr.bf16.mxu0 0
    %3509 = vmatpush1.bf16.msra.mxu0 0
    %3510 = vmatprep.subr.bf16.mxu0 0
    %3511 = vmatpush1.bf16.msra.mxu0 0
    %3512 = vmatprep.mubr.bf16.mxu0 0
    %3513 = vmatmul.mubr.bf16.gmra.mrb[0].mxu0 %v2090
    %v3514 = vpop.f32.mrb[0].mxu0
    %v3515 = vadd.f32 %v3474, %v3514
    %v3516 = vpop.f32.mrb[0].mxu0
    %v3517 = vadd.f32 %v3476, %v3516
    %v3518 = vpop.f32.mrb[0].mxu0
    %v3519 = vpop.f32.mrb[0].mxu0
    %3520 = vdwg.mxu0
    %3521 = vmatprep.subr.bf16.mxu0 %v3001
    %3522 = vmatpush1.bf16.msra.mxu0 %v3000
    %3523 = vmatprep.subr.bf16.mxu0 %v3006
    %3524 = vmatpush1.bf16.msra.mxu0 %v3005
    %3525 = vmatprep.subr.bf16.mxu0 %v3011
    %3526 = vmatpush1.bf16.msra.mxu0 %v3010
    %3527 = vmatprep.subr.bf16.mxu0 %v3016
    %3528 = vmatpush1.bf16.msra.mxu0 %v3015
    %3529 = vmatprep.subr.bf16.mxu0 %v3021
    %3530 = vmatpush1.bf16.msra.mxu0 %v3020
    %3531 = vmatprep.subr.bf16.mxu0 %v3026
    %3532 = vmatpush1.bf16.msra.mxu0 %v3025
    %3533 = vmatprep.subr.bf16.mxu0 %v3031
    %3534 = vmatpush1.bf16.msra.mxu0 %v3030
    %3535 = vmatprep.subr.bf16.mxu0 %v3036
    %3536 = vmatpush1.bf16.msra.mxu0 %v3035
    %3537 = vmatprep.subr.bf16.mxu0 %v3041
    %3538 = vmatpush1.bf16.msra.mxu0 %v3040
    %3539 = vmatprep.subr.bf16.mxu0 %v3046
    %3540 = vmatpush1.bf16.msra.mxu0 %v3045
    %3541 = vmatprep.subr.bf16.mxu0 %v3051
    %3542 = vmatpush1.bf16.msra.mxu0 %v3050
    %3543 = vmatprep.subr.bf16.mxu0 %v3056
    %3544 = vmatpush1.bf16.msra.mxu0 %v3055
    %3545 = vmatprep.subr.bf16.mxu0 %v3061
    %3546 = vmatpush1.bf16.msra.mxu0 %v3060
    %3547 = vmatprep.subr.bf16.mxu0 %v3066
    %3548 = vmatpush1.bf16.msra.mxu0 %v3065
    %3549 = vmatprep.subr.bf16.mxu0 %v3071
    %3550 = vmatpush1.bf16.msra.mxu0 %v3070
    %3551 = vmatprep.subr.bf16.mxu0 %v3076
    %3552 = vmatpush1.bf16.msra.mxu0 %v3075
    %3553 = vmatprep.mubr.bf16.mxu0 %v2087
    %3554 = vmatmul.mubr.bf16.gmra.mrb[0].mxu0 %v2086
    %v3555 = vpop.f32.mrb[0].mxu0
    %v3556 = vadd.f32 %v2344, %v3555
    %v3557 = vpop.f32.mrb[0].mxu0
    %v3558 = vadd.f32 %v2348, %v3557
    %v3559 = vpop.f32.mrb[0].mxu0
    %v3560 = vpop.f32.mrb[0].mxu0
    %3561 = vdwg.mxu0
    %3562 = vmatprep.subr.bf16.mxu0 %v3081
    %3563 = vmatpush1.bf16.msra.mxu0 %v3080
    %3564 = vmatprep.subr.bf16.mxu0 %v3086
    %3565 = vmatpush1.bf16.msra.mxu0 %v3085
    %3566 = vmatprep.subr.bf16.mxu0 %v3091
    %3567 = vmatpush1.bf16.msra.mxu0 %v3090
    %3568 = vmatprep.subr.bf16.mxu0 %v3096
    %3569 = vmatpush1.bf16.msra.mxu0 %v3095
    %3570 = vmatprep.subr.bf16.mxu0 %v3101
    %3571 = vmatpush1.bf16.msra.mxu0 %v3100
    %3572 = vmatprep.subr.bf16.mxu0 %v3106
    %3573 = vmatpush1.bf16.msra.mxu0 %v3105
    %3574 = vmatprep.subr.bf16.mxu0 %v3111
    %3575 = vmatpush1.bf16.msra.mxu0 %v3110
    %3576 = vmatprep.subr.bf16.mxu0 %v3116
    %3577 = vmatpush1.bf16.msra.mxu0 %v3115
    %3578 = vmatprep.subr.bf16.mxu0 %v3121
    %3579 = vmatpush1.bf16.msra.mxu0 %v3120
    %3580 = vmatprep.subr.bf16.mxu0 %v3126
    %3581 = vmatpush1.bf16.msra.mxu0 %v3125
    %3582 = vmatprep.subr.bf16.mxu0 %v3131
    %3583 = vmatpush1.bf16.msra.mxu0 %v3130
    %3584 = vmatprep.subr.bf16.mxu0 %v3136
    %3585 = vmatpush1.bf16.msra.mxu0 %v3135
    %3586 = vmatprep.subr.bf16.mxu0 %v3141
    %3587 = vmatpush1.bf16.msra.mxu0 %v3140
    %3588 = vmatprep.subr.bf16.mxu0 %v3146
    %3589 = vmatpush1.bf16.msra.mxu0 %v3145
    %3590 = vmatprep.subr.bf16.mxu0 %v3151
    %3591 = vmatpush1.bf16.msra.mxu0 %v3150
    %3592 = vmatprep.subr.bf16.mxu0 %v3156
    %3593 = vmatpush1.bf16.msra.mxu0 %v3155
    %3594 = vmatprep.mubr.bf16.mxu0 %v2089
    %3595 = vmatmul.mubr.bf16.gmra.mrb[0].mxu0 %v2088
    %v3596 = vpop.f32.mrb[0].mxu0
    %v3597 = vadd.f32 %v3556, %v3596
    %v3598 = vpop.f32.mrb[0].mxu0
    %v3599 = vadd.f32 %v3558, %v3598
    %v3600 = vpop.f32.mrb[0].mxu0
    %v3601 = vpop.f32.mrb[0].mxu0
    %3602 = vdwg.mxu0
    %3603 = vmatprep.subr.bf16.mxu0 %v3161
    %3604 = vmatpush1.bf16.msra.mxu0 %v3160
    %3605 = vmatprep.subr.bf16.mxu0 %v3166
    %3606 = vmatpush1.bf16.msra.mxu0 %v3165
    %3607 = vmatprep.subr.bf16.mxu0 %v3171
    %3608 = vmatpush1.bf16.msra.mxu0 %v3170
    %3609 = vmatprep.subr.bf16.mxu0 %v3176
    %3610 = vmatpush1.bf16.msra.mxu0 %v3175
    %3611 = vmatprep.subr.bf16.mxu0 %v3181
    %3612 = vmatpush1.bf16.msra.mxu0 %v3180
    %3613 = vmatprep.subr.bf16.mxu0 %v3186
    %3614 = vmatpush1.bf16.msra.mxu0 %v3185
    %3615 = vmatprep.subr.bf16.mxu0 %v3191
    %3616 = vmatpush1.bf16.msra.mxu0 %v3190
    %3617 = vmatprep.subr.bf16.mxu0 %v3196
    %3618 = vmatpush1.bf16.msra.mxu0 %v3195
    %3619 = vmatprep.subr.bf16.mxu0 0
    %3620 = vmatpush1.bf16.msra.mxu0 0
    %3621 = vmatprep.subr.bf16.mxu0 0
    %3622 = vmatpush1.bf16.msra.mxu0 0
    %3623 = vmatprep.subr.bf16.mxu0 0
    %3624 = vmatpush1.bf16.msra.mxu0 0
    %3625 = vmatprep.subr.bf16.mxu0 0
    %3626 = vmatpush1.bf16.msra.mxu0 0
    %3627 = vmatprep.subr.bf16.mxu0 0
    %3628 = vmatpush1.bf16.msra.mxu0 0
    %3629 = vmatprep.subr.bf16.mxu0 0
    %3630 = vmatpush1.bf16.msra.mxu0 0
    %3631 = vmatprep.subr.bf16.mxu0 0
    %3632 = vmatpush1.bf16.msra.mxu0 0
    %3633 = vmatprep.subr.bf16.mxu0 0
    %3634 = vmatpush1.bf16.msra.mxu0 0
    %3635 = vmatprep.mubr.bf16.mxu0 0
    %3636 = vmatmul.mubr.bf16.gmra.mrb[0].mxu0 %v2090
    %v3637 = vpop.f32.mrb[0].mxu0
    %v3638 = vadd.f32 %v3597, %v3637
    %v3639 = vpop.f32.mrb[0].mxu0
    %v3640 = vadd.f32 %v3599, %v3639
    %v3641 = vpop.f32.mrb[0].mxu0
    %v3642 = vpop.f32.mrb[0].mxu0
    %3643 = vdwg.mxu0
    %3644 = vmatprep.subr.bf16.mxu0 0
    %3645 = vmatpush1.bf16.msra.mxu0 %v3002
    %3646 = vmatprep.subr.bf16.mxu0 0
    %3647 = vmatpush1.bf16.msra.mxu0 %v3007
    %3648 = vmatprep.subr.bf16.mxu0 0
    %3649 = vmatpush1.bf16.msra.mxu0 %v3012
    %3650 = vmatprep.subr.bf16.mxu0 0
    %3651 = vmatpush1.bf16.msra.mxu0 %v3017
    %3652 = vmatprep.subr.bf16.mxu0 0
    %3653 = vmatpush1.bf16.msra.mxu0 %v3022
    %3654 = vmatprep.subr.bf16.mxu0 0
    %3655 = vmatpush1.bf16.msra.mxu0 %v3027
    %3656 = vmatprep.subr.bf16.mxu0 0
    %3657 = vmatpush1.bf16.msra.mxu0 %v3032
    %3658 = vmatprep.subr.bf16.mxu0 0
    %3659 = vmatpush1.bf16.msra.mxu0 %v3037
    %3660 = vmatprep.subr.bf16.mxu0 0
    %3661 = vmatpush1.bf16.msra.mxu0 %v3042
    %3662 = vmatprep.subr.bf16.mxu0 0
    %3663 = vmatpush1.bf16.msra.mxu0 %v3047
    %3664 = vmatprep.subr.bf16.mxu0 0
    %3665 = vmatpush1.bf16.msra.mxu0 %v3052
    %3666 = vmatprep.subr.bf16.mxu0 0
    %3667 = vmatpush1.bf16.msra.mxu0 %v3057
    %3668 = vmatprep.subr.bf16.mxu0 0
    %3669 = vmatpush1.bf16.msra.mxu0 %v3062
    %3670 = vmatprep.subr.bf16.mxu0 0
    %3671 = vmatpush1.bf16.msra.mxu0 %v3067
    %3672 = vmatprep.subr.bf16.mxu0 0
    %3673 = vmatpush1.bf16.msra.mxu0 %v3072
    %3674 = vmatprep.subr.bf16.mxu0 0
    %3675 = vmatpush1.bf16.msra.mxu0 %v3077
    %3676 = vmatprep.mubr.bf16.mxu0 %v2087
    %3677 = vmatmul.mubr.bf16.gmra.mrb[0].mxu0 %v2086
    %v3678 = vpop.f32.mrb[0].mxu0
    %v3679 = vadd.f32 %v2352, %v3678
    %v3680 = vpop.f32.mrb[0].mxu0
    %v3681 = vpop.f32.mrb[0].mxu0
    %v3682 = vpop.f32.mrb[0].mxu0
    %3683 = vdwg.mxu0
    %3684 = vmatprep.subr.bf16.mxu0 0
    %3685 = vmatpush1.bf16.msra.mxu0 %v3082
    %3686 = vmatprep.subr.bf16.mxu0 0
    %3687 = vmatpush1.bf16.msra.mxu0 %v3087
    %3688 = vmatprep.subr.bf16.mxu0 0
    %3689 = vmatpush1.bf16.msra.mxu0 %v3092
    %3690 = vmatprep.subr.bf16.mxu0 0
    %3691 = vmatpush1.bf16.msra.mxu0 %v3097
    %3692 = vmatprep.subr.bf16.mxu0 0
    %3693 = vmatpush1.bf16.msra.mxu0 %v3102
    %3694 = vmatprep.subr.bf16.mxu0 0
    %3695 = vmatpush1.bf16.msra.mxu0 %v3107
    %3696 = vmatprep.subr.bf16.mxu0 0
    %3697 = vmatpush1.bf16.msra.mxu0 %v3112
    %3698 = vmatprep.subr.bf16.mxu0 0
    %3699 = vmatpush1.bf16.msra.mxu0 %v3117
    %3700 = vmatprep.subr.bf16.mxu0 0
    %3701 = vmatpush1.bf16.msra.mxu0 %v3122
    %3702 = vmatprep.subr.bf16.mxu0 0
    %3703 = vmatpush1.bf16.msra.mxu0 %v3127
    %3704 = vmatprep.subr.bf16.mxu0 0
    %3705 = vmatpush1.bf16.msra.mxu0 %v3132
    %3706 = vmatprep.subr.bf16.mxu0 0
    %3707 = vmatpush1.bf16.msra.mxu0 %v3137
    %3708 = vmatprep.subr.bf16.mxu0 0
    %3709 = vmatpush1.bf16.msra.mxu0 %v3142
    %3710 = vmatprep.subr.bf16.mxu0 0
    %3711 = vmatpush1.bf16.msra.mxu0 %v3147
    %3712 = vmatprep.subr.bf16.mxu0 0
    %3713 = vmatpush1.bf16.msra.mxu0 %v3152
    %3714 = vmatprep.subr.bf16.mxu0 0
    %3715 = vmatpush1.bf16.msra.mxu0 %v3157
    %3716 = vmatprep.mubr.bf16.mxu0 %v2089
    %3717 = vmatmul.mubr.bf16.gmra.mrb[0].mxu0 %v2088
    %v3718 = vpop.f32.mrb[0].mxu0
    %v3719 = vadd.f32 %v3679, %v3718
    %v3720 = vpop.f32.mrb[0].mxu0
    %v3721 = vpop.f32.mrb[0].mxu0
    %v3722 = vpop.f32.mrb[0].mxu0
    %3723 = vdwg.mxu0
    %3724 = vmatprep.subr.bf16.mxu0 0
    %3725 = vmatpush1.bf16.msra.mxu0 %v3162
    %3726 = vmatprep.subr.bf16.mxu0 0
    %3727 = vmatpush1.bf16.msra.mxu0 %v3167
    %3728 = vmatprep.subr.bf16.mxu0 0
    %3729 = vmatpush1.bf16.msra.mxu0 %v3172
    %3730 = vmatprep.subr.bf16.mxu0 0
    %3731 = vmatpush1.bf16.msra.mxu0 %v3177
    %3732 = vmatprep.subr.bf16.mxu0 0
    %3733 = vmatpush1.bf16.msra.mxu0 %v3182
    %3734 = vmatprep.subr.bf16.mxu0 0
    %3735 = vmatpush1.bf16.msra.mxu0 %v3187
    %3736 = vmatprep.subr.bf16.mxu0 0
    %3737 = vmatpush1.bf16.msra.mxu0 %v3192
    %3738 = vmatprep.subr.bf16.mxu0 0
    %3739 = vmatpush1.bf16.msra.mxu0 %v3197
    %3740 = vmatprep.subr.bf16.mxu0 0
    %3741 = vmatpush1.bf16.msra.mxu0 0
    %3742 = vmatprep.subr.bf16.mxu0 0
    %3743 = vmatpush1.bf16.msra.mxu0 0
    %3744 = vmatprep.subr.bf16.mxu0 0
    %3745 = vmatpush1.bf16.msra.mxu0 0
    %3746 = vmatprep.subr.bf16.mxu0 0
    %3747 = vmatpush1.bf16.msra.mxu0 0
    %3748 = vmatprep.subr.bf16.mxu0 0
    %3749 = vmatpush1.bf16.msra.mxu0 0
    %3750 = vmatprep.subr.bf16.mxu0 0
    %3751 = vmatpush1.bf16.msra.mxu0 0
    %3752 = vmatprep.subr.bf16.mxu0 0
    %3753 = vmatpush1.bf16.msra.mxu0 0
    %3754 = vmatprep.subr.bf16.mxu0 0
    %3755 = vmatpush1.bf16.msra.mxu0 0
    %3756 = vmatprep.mubr.bf16.mxu0 0
    %3757 = vmatmul.mubr.bf16.gmra.mrb[0].mxu0 %v2090
    %v3758 = vpop.f32.mrb[0].mxu0
    %v3759 = vadd.f32 %v3719, %v3758
    %v3760 = vpop.f32.mrb[0].mxu0
    %v3761 = vpop.f32.mrb[0].mxu0
    %v3762 = vpop.f32.mrb[0].mxu0
    %3763 = vdwg.mxu0
    %v3764 = vmul.f32 %v3515, 0.5
    %v3765 = vmul.f32 %v3517, 0.5
    %v3766 = vmul.f32 %v3638, 0.5
    %v3767 = vmul.f32 %v3640, 0.5
    %v3768 = vmul.f32 %v3759, 0.5
    %v3769 = vmul.f32 %v3515, 0.70710677
    %v3770 = vmul.f32 %v3517, 0.70710677
    %v3771 = vmul.f32 %v3638, 0.70710677
    %v3772 = vmul.f32 %v3640, 0.70710677
    %v3773 = vmul.f32 %v3759, 0.70710677
    %v3774 = verf.f32.pop %v3769
    %v3775 = verf.f32.pop %v3770
    %v3776 = verf.f32.pop %v3771
    %v3777 = verf.f32.pop %v3772
    %v3778 = verf.f32.pop %v3773
    %v3779 = vadd.f32 %v3774, 1.0
    %v3780 = vadd.f32 %v3775, 1.0
    %v3781 = vadd.f32 %v3776, 1.0
    %v3782 = vadd.f32 %v3777, 1.0
    %v3783 = vadd.f32 %v3778, 1.0
    %v3784 = vmul.f32 %v3764, %v3779
    %v3785 = vmul.f32 %v3765, %v3780
    %v3786 = vmul.f32 %v3766, %v3781
    %v3787 = vmul.f32 %v3767, %v3782
    %v3788 = vmul.f32 %v3768, %v3783
    %v3789 = vpack.c.bf16 %v3784, %v3784
    %v3790 = vpack.c.bf16 %v3785, %v3785
    %v3791 = vpack.c.bf16 %v3786, %v3786
    %v3792 = vpack.c.bf16 %v3787, %v3787
    %v3793 = vpack.c.bf16 %v3788, %v3788
    %v3794 = vld [vmem:[#allocation8] sm:$0xff]
    %v3795 = vld [vmem:[#allocation8 + $0x8] sm:$0xff]
    %v3796 = vld [vmem:[#allocation8 + $0x10] sm:$0xf]
    %v3797 = vld [vmem:[#allocation8 + $0x14] sm:$0xff]
    %v3798 = vld [vmem:[#allocation8 + $0x1c] sm:$0xff]
    %v3799 = vld [vmem:[#allocation8 + $0x24] sm:$0xf]
    %v3800 = vld [vmem:[#allocation8 + $0x28] sm:$0xff]
    %v3801 = vld [vmem:[#allocation8 + $0x30] sm:$0xff]
    %v3802 = vld [vmem:[#allocation8 + $0x38] sm:$0xf]
    %v3803 = vld [vmem:[#allocation8 + $0x3c] sm:$0xff]
    %v3804 = vld [vmem:[#allocation8 + $0x44] sm:$0xff]
    %v3805 = vld [vmem:[#allocation8 + $0x4c] sm:$0xf]
    %v3806 = vld [vmem:[#allocation8 + $0x50] sm:$0xff]
    %v3807 = vld [vmem:[#allocation8 + $0x58] sm:$0xff]
    %v3808 = vld [vmem:[#allocation8 + $0x60] sm:$0xf]
    %v3809 = vld [vmem:[#allocation8 + $0x64] sm:$0xff]
    %v3810 = vld [vmem:[#allocation8 + $0x6c] sm:$0xff]
    %v3811 = vld [vmem:[#allocation8 + $0x74] sm:$0xf]
    %v3812 = vld [vmem:[#allocation8 + $0x78] sm:$0xff]
    %v3813 = vld [vmem:[#allocation8 + $0x80] sm:$0xff]
    %v3814 = vld [vmem:[#allocation8 + $0x88] sm:$0xf]
    %v3815 = vld [vmem:[#allocation8 + $0x8c] sm:$0xff]
    %v3816 = vld [vmem:[#allocation8 + $0x94] sm:$0xff]
    %v3817 = vld [vmem:[#allocation8 + $0x9c] sm:$0xf]
    %v3818 = vld [vmem:[#allocation8 + $0xa0] sm:$0xff]
    %v3819 = vld [vmem:[#allocation8 + $0xa8] sm:$0xff]
    %v3820 = vld [vmem:[#allocation8 + $0xb0] sm:$0xf]
    %v3821 = vld [vmem:[#allocation8 + $0xb4] sm:$0xff]
    %v3822 = vld [vmem:[#allocation8 + $0xbc] sm:$0xff]
    %v3823 = vld [vmem:[#allocation8 + $0xc4] sm:$0xf]
    %v3824 = vld [vmem:[#allocation8 + $0xc8] sm:$0xff]
    %v3825 = vld [vmem:[#allocation8 + $0xd0] sm:$0xff]
    %v3826 = vld [vmem:[#allocation8 + $0xd8] sm:$0xf]
    %v3827 = vld [vmem:[#allocation8 + $0xdc] sm:$0xff]
    %v3828 = vld [vmem:[#allocation8 + $0xe4] sm:$0xff]
    %v3829 = vld [vmem:[#allocation8 + $0xec] sm:$0xf]
    %v3830 = vld [vmem:[#allocation8 + $0xf0] sm:$0xff]
    %v3831 = vld [vmem:[#allocation8 + $0xf8] sm:$0xff]
    %v3832 = vld [vmem:[#allocation8 + $0x100] sm:$0xf]
    %v3833 = vld [vmem:[#allocation8 + $0x104] sm:$0xff]
    %v3834 = vld [vmem:[#allocation8 + $0x10c] sm:$0xff]
    %v3835 = vld [vmem:[#allocation8 + $0x114] sm:$0xf]
    %v3836 = vld [vmem:[#allocation8 + $0x118] sm:$0xff]
    %v3837 = vld [vmem:[#allocation8 + $0x120] sm:$0xff]
    %v3838 = vld [vmem:[#allocation8 + $0x128] sm:$0xf]
    %v3839 = vld [vmem:[#allocation8 + $0x12c] sm:$0xff]
    %v3840 = vld [vmem:[#allocation8 + $0x134] sm:$0xff]
    %v3841 = vld [vmem:[#allocation8 + $0x13c] sm:$0xf]
    %v3842 = vld [vmem:[#allocation8 + $0x140] sm:$0xff]
    %v3843 = vld [vmem:[#allocation8 + $0x148] sm:$0xff]
    %v3844 = vld [vmem:[#allocation8 + $0x150] sm:$0xf]
    %v3845 = vld [vmem:[#allocation8 + $0x154] sm:$0xff]
    %v3846 = vld [vmem:[#allocation8 + $0x15c] sm:$0xff]
    %v3847 = vld [vmem:[#allocation8 + $0x164] sm:$0xf]
    %v3848 = vld [vmem:[#allocation8 + $0x168] sm:$0xff]
    %v3849 = vld [vmem:[#allocation8 + $0x170] sm:$0xff]
    %v3850 = vld [vmem:[#allocation8 + $0x178] sm:$0xf]
    %v3851 = vld [vmem:[#allocation8 + $0x17c] sm:$0xff]
    %v3852 = vld [vmem:[#allocation8 + $0x184] sm:$0xff]
    %v3853 = vld [vmem:[#allocation8 + $0x18c] sm:$0xf]
    %v3854 = vld [vmem:[#allocation8 + $0x190] sm:$0xff]
    %v3855 = vld [vmem:[#allocation8 + $0x198] sm:$0xff]
    %v3856 = vld [vmem:[#allocation8 + $0x1a0] sm:$0xf]
    %v3857 = vld [vmem:[#allocation8 + $0x1a4] sm:$0xff]
    %v3858 = vld [vmem:[#allocation8 + $0x1ac] sm:$0xff]
    %v3859 = vld [vmem:[#allocation8 + $0x1b4] sm:$0xf]
    %v3860 = vld [vmem:[#allocation8 + $0x1b8] sm:$0xff]
    %v3861 = vld [vmem:[#allocation8 + $0x1c0] sm:$0xff]
    %v3862 = vld [vmem:[#allocation8 + $0x1c8] sm:$0xf]
    %v3863 = vld [vmem:[#allocation8 + $0x1cc] sm:$0xff]
    %v3864 = vld [vmem:[#allocation8 + $0x1d4] sm:$0xff]
    %v3865 = vld [vmem:[#allocation8 + $0x1dc] sm:$0xf]
    %v3866 = vld [vmem:[#allocation8 + $0x1e0] sm:$0xff]
    %v3867 = vld [vmem:[#allocation8 + $0x1e8] sm:$0xff]
    %v3868 = vld [vmem:[#allocation8 + $0x1f0] sm:$0xf]
    %v3869 = vld [vmem:[#allocation8 + $0x1f4] sm:$0xff]
    %v3870 = vld [vmem:[#allocation8 + $0x1fc] sm:$0xff]
    %v3871 = vld [vmem:[#allocation8 + $0x204] sm:$0xf]
    %v3872 = vld [vmem:[#allocation8 + $0x208] sm:$0xff]
    %v3873 = vld [vmem:[#allocation8 + $0x210] sm:$0xff]
    %v3874 = vld [vmem:[#allocation8 + $0x218] sm:$0xf]
    %v3875 = vld [vmem:[#allocation8 + $0x21c] sm:$0xff]
    %v3876 = vld [vmem:[#allocation8 + $0x224] sm:$0xff]
    %v3877 = vld [vmem:[#allocation8 + $0x22c] sm:$0xf]
    %v3878 = vld [vmem:[#allocation8 + $0x230] sm:$0xff]
    %v3879 = vld [vmem:[#allocation8 + $0x238] sm:$0xff]
    %v3880 = vld [vmem:[#allocation8 + $0x240] sm:$0xf]
    %v3881 = vld [vmem:[#allocation8 + $0x244] sm:$0xff]
    %v3882 = vld [vmem:[#allocation8 + $0x24c] sm:$0xff]
    %v3883 = vld [vmem:[#allocation8 + $0x254] sm:$0xf]
    %v3884 = vld [vmem:[#allocation8 + $0x258] sm:$0xff]
    %v3885 = vld [vmem:[#allocation8 + $0x260] sm:$0xff]
    %v3886 = vld [vmem:[#allocation8 + $0x268] sm:$0xf]
    %v3887 = vld [vmem:[#allocation8 + $0x26c] sm:$0xff]
    %v3888 = vld [vmem:[#allocation8 + $0x274] sm:$0xff]
    %v3889 = vld [vmem:[#allocation8 + $0x27c] sm:$0xf]
    %v3890 = vld [vmem:[#allocation8 + $0x280] sm:$0xff]
    %v3891 = vld [vmem:[#allocation8 + $0x288] sm:$0xff]
    %v3892 = vld [vmem:[#allocation8 + $0x290] sm:$0xf]
    %v3893 = vld [vmem:[#allocation8 + $0x294] sm:$0xff]
    %v3894 = vld [vmem:[#allocation8 + $0x29c] sm:$0xff]
    %v3895 = vld [vmem:[#allocation8 + $0x2a4] sm:$0xf]
    %v3896 = vld [vmem:[#allocation8 + $0x2a8] sm:$0xff]
    %v3897 = vld [vmem:[#allocation8 + $0x2b0] sm:$0xff]
    %v3898 = vld [vmem:[#allocation8 + $0x2b8] sm:$0xf]
    %v3899 = vld [vmem:[#allocation8 + $0x2bc] sm:$0xff]
    %v3900 = vld [vmem:[#allocation8 + $0x2c4] sm:$0xff]
    %v3901 = vld [vmem:[#allocation8 + $0x2cc] sm:$0xf]
    %v3902 = vld [vmem:[#allocation8 + $0x2d0] sm:$0xff]
    %v3903 = vld [vmem:[#allocation8 + $0x2d8] sm:$0xff]
    %v3904 = vld [vmem:[#allocation8 + $0x2e0] sm:$0xf]
    %v3905 = vld [vmem:[#allocation8 + $0x2e4] sm:$0xff]
    %v3906 = vld [vmem:[#allocation8 + $0x2ec] sm:$0xff]
    %v3907 = vld [vmem:[#allocation8 + $0x2f4] sm:$0xf]
    %v3908 = vld [vmem:[#allocation8 + $0x2f8] sm:$0xff]
    %v3909 = vld [vmem:[#allocation8 + $0x300] sm:$0xff]
    %v3910 = vld [vmem:[#allocation8 + $0x308] sm:$0xf]
    %v3911 = vld [vmem:[#allocation8 + $0x30c] sm:$0xff]
    %v3912 = vld [vmem:[#allocation8 + $0x314] sm:$0xff]
    %v3913 = vld [vmem:[#allocation8 + $0x31c] sm:$0xf]
    %v3914 = vld [vmem:[#allocation8 + $0x320] sm:$0xff]
    %v3915 = vld [vmem:[#allocation8 + $0x328] sm:$0xff]
    %v3916 = vld [vmem:[#allocation8 + $0x330] sm:$0xf]
    %v3917 = vld [vmem:[#allocation8 + $0x334] sm:$0xff]
    %v3918 = vld [vmem:[#allocation8 + $0x33c] sm:$0xff]
    %v3919 = vld [vmem:[#allocation8 + $0x344] sm:$0xf]
    %v3920 = vld [vmem:[#allocation8 + $0x348] sm:$0xff]
    %v3921 = vld [vmem:[#allocation8 + $0x350] sm:$0xff]
    %v3922 = vld [vmem:[#allocation8 + $0x358] sm:$0xf]
    %v3923 = vld [vmem:[#allocation8 + $0x35c] sm:$0xff]
    %v3924 = vld [vmem:[#allocation8 + $0x364] sm:$0xff]
    %v3925 = vld [vmem:[#allocation8 + $0x36c] sm:$0xf]
    %v3926 = vld [vmem:[#allocation8 + $0x370] sm:$0xff]
    %v3927 = vld [vmem:[#allocation8 + $0x378] sm:$0xff]
    %v3928 = vld [vmem:[#allocation8 + $0x380] sm:$0xf]
    %v3929 = vld [vmem:[#allocation8 + $0x384] sm:$0xff]
    %v3930 = vld [vmem:[#allocation8 + $0x38c] sm:$0xff]
    %v3931 = vld [vmem:[#allocation8 + $0x394] sm:$0xf]
    %v3932 = vld [vmem:[#allocation8 + $0x398] sm:$0xff]
    %v3933 = vld [vmem:[#allocation8 + $0x3a0] sm:$0xff]
    %v3934 = vld [vmem:[#allocation8 + $0x3a8] sm:$0xf]
    %v3935 = vld [vmem:[#allocation8 + $0x3ac] sm:$0xff]
    %v3936 = vld [vmem:[#allocation8 + $0x3b4] sm:$0xff]
    %v3937 = vld [vmem:[#allocation8 + $0x3bc] sm:$0xf]
    %v3938 = vld [vmem:[#allocation8 + $0x3c0] sm:$0xff]
    %v3939 = vld [vmem:[#allocation8 + $0x3c8] sm:$0xff]
    %v3940 = vld [vmem:[#allocation8 + $0x3d0] sm:$0xf]
    %v3941 = vld [vmem:[#allocation8 + $0x3d4] sm:$0xff]
    %v3942 = vld [vmem:[#allocation8 + $0x3dc] sm:$0xff]
    %v3943 = vld [vmem:[#allocation8 + $0x3e4] sm:$0xf]
    %v3944 = vld [vmem:[#allocation8 + $0x3e8] sm:$0xff]
    %v3945 = vld [vmem:[#allocation8 + $0x3f0] sm:$0xff]
    %v3946 = vld [vmem:[#allocation8 + $0x3f8] sm:$0xf]
    %v3947 = vld [vmem:[#allocation8 + $0x3fc] sm:$0xff]
    %v3948 = vld [vmem:[#allocation8 + $0x404] sm:$0xff]
    %v3949 = vld [vmem:[#allocation8 + $0x40c] sm:$0xf]
    %v3950 = vld [vmem:[#allocation8 + $0x410] sm:$0xff]
    %v3951 = vld [vmem:[#allocation8 + $0x418] sm:$0xff]
    %v3952 = vld [vmem:[#allocation8 + $0x420] sm:$0xf]
    %v3953 = vld [vmem:[#allocation8 + $0x424] sm:$0xff]
    %v3954 = vld [vmem:[#allocation8 + $0x42c] sm:$0xff]
    %v3955 = vld [vmem:[#allocation8 + $0x434] sm:$0xf]
    %v3956 = vld [vmem:[#allocation8 + $0x438] sm:$0xff]
    %v3957 = vld [vmem:[#allocation8 + $0x440] sm:$0xff]
    %v3958 = vld [vmem:[#allocation8 + $0x448] sm:$0xf]
    %v3959 = vld [vmem:[#allocation8 + $0x44c] sm:$0xff]
    %v3960 = vld [vmem:[#allocation8 + $0x454] sm:$0xff]
    %v3961 = vld [vmem:[#allocation8 + $0x45c] sm:$0xf]
    %v3962 = vld [vmem:[#allocation8 + $0x460] sm:$0xff]
    %v3963 = vld [vmem:[#allocation8 + $0x468] sm:$0xff]
    %v3964 = vld [vmem:[#allocation8 + $0x470] sm:$0xf]
    %v3965 = vld [vmem:[#allocation8 + $0x474] sm:$0xff]
    %v3966 = vld [vmem:[#allocation8 + $0x47c] sm:$0xff]
    %v3967 = vld [vmem:[#allocation8 + $0x484] sm:$0xf]
    %v3968 = vld [vmem:[#allocation8 + $0x488] sm:$0xff]
    %v3969 = vld [vmem:[#allocation8 + $0x490] sm:$0xff]
    %v3970 = vld [vmem:[#allocation8 + $0x498] sm:$0xf]
    %v3971 = vld [vmem:[#allocation8 + $0x49c] sm:$0xff]
    %v3972 = vld [vmem:[#allocation8 + $0x4a4] sm:$0xff]
    %v3973 = vld [vmem:[#allocation8 + $0x4ac] sm:$0xf]
    %v3974 = vld [vmem:[#allocation8 + $0x4b0] sm:$0xff]
    %v3975 = vld [vmem:[#allocation8 + $0x4b8] sm:$0xff]
    %v3976 = vld [vmem:[#allocation8 + $0x4c0] sm:$0xf]
    %v3977 = vld [vmem:[#allocation8 + $0x4c4] sm:$0xff]
    %v3978 = vld [vmem:[#allocation8 + $0x4cc] sm:$0xff]
    %v3979 = vld [vmem:[#allocation8 + $0x4d4] sm:$0xf]
    %v3980 = vld [vmem:[#allocation8 + $0x4d8] sm:$0xff]
    %v3981 = vld [vmem:[#allocation8 + $0x4e0] sm:$0xff]
    %v3982 = vld [vmem:[#allocation8 + $0x4e8] sm:$0xf]
    %v3983 = vld [vmem:[#allocation8 + $0x4ec] sm:$0xff]
    %v3984 = vld [vmem:[#allocation8 + $0x4f4] sm:$0xff]
    %v3985 = vld [vmem:[#allocation8 + $0x4fc] sm:$0xf]
    %v3986 = vld [vmem:[#allocation8 + $0x500] sm:$0xff]
    %v3987 = vld [vmem:[#allocation8 + $0x508] sm:$0xff]
    %v3988 = vld [vmem:[#allocation8 + $0x510] sm:$0xf]
    %v3989 = vld [vmem:[#allocation8 + $0x514] sm:$0xff]
    %v3990 = vld [vmem:[#allocation8 + $0x51c] sm:$0xff]
    %v3991 = vld [vmem:[#allocation8 + $0x524] sm:$0xf]
    %v3992 = vld [vmem:[#allocation8 + $0x528] sm:$0xff]
    %v3993 = vld [vmem:[#allocation8 + $0x530] sm:$0xff]
    %v3994 = vld [vmem:[#allocation8 + $0x538] sm:$0xf]
    %v3995 = vld [vmem:[#allocation8 + $0x53c] sm:$0xff]
    %v3996 = vld [vmem:[#allocation8 + $0x544] sm:$0xff]
    %v3997 = vld [vmem:[#allocation8 + $0x54c] sm:$0xf]
    %v3998 = vld [vmem:[#allocation8 + $0x550] sm:$0xff]
    %v3999 = vld [vmem:[#allocation8 + $0x558] sm:$0xff]
    %v4000 = vld [vmem:[#allocation8 + $0x560] sm:$0xf]
    %v4001 = vld [vmem:[#allocation8 + $0x564] sm:$0xff]
    %v4002 = vld [vmem:[#allocation8 + $0x56c] sm:$0xff]
    %v4003 = vld [vmem:[#allocation8 + $0x574] sm:$0xf]
    %v4004 = vld [vmem:[#allocation8 + $0x578] sm:$0xff]
    %v4005 = vld [vmem:[#allocation8 + $0x580] sm:$0xff]
    %v4006 = vld [vmem:[#allocation8 + $0x588] sm:$0xf]
    %v4007 = vld [vmem:[#allocation8 + $0x58c] sm:$0xff]
    %v4008 = vld [vmem:[#allocation8 + $0x594] sm:$0xff]
    %v4009 = vld [vmem:[#allocation8 + $0x59c] sm:$0xf]
    %v4010 = vld [vmem:[#allocation8 + $0x5a0] sm:$0xff]
    %v4011 = vld [vmem:[#allocation8 + $0x5a8] sm:$0xff]
    %v4012 = vld [vmem:[#allocation8 + $0x5b0] sm:$0xf]
    %v4013 = vld [vmem:[#allocation8 + $0x5b4] sm:$0xff]
    %v4014 = vld [vmem:[#allocation8 + $0x5bc] sm:$0xff]
    %v4015 = vld [vmem:[#allocation8 + $0x5c4] sm:$0xf]
    %v4016 = vld [vmem:[#allocation8 + $0x5c8] sm:$0xff]
    %v4017 = vld [vmem:[#allocation8 + $0x5d0] sm:$0xff]
    %v4018 = vld [vmem:[#allocation8 + $0x5d8] sm:$0xf]
    %v4019 = vld [vmem:[#allocation8 + $0x5dc] sm:$0xff]
    %v4020 = vld [vmem:[#allocation8 + $0x5e4] sm:$0xff]
    %v4021 = vld [vmem:[#allocation8 + $0x5ec] sm:$0xf]
    %v4022 = vld [vmem:[#allocation8 + $0x5f0] sm:$0xff]
    %v4023 = vld [vmem:[#allocation8 + $0x5f8] sm:$0xff]
    %v4024 = vld [vmem:[#allocation8 + $0x600] sm:$0xf]
    %v4025 = vld [vmem:[#allocation8 + $0x604] sm:$0xff]
    %v4026 = vld [vmem:[#allocation8 + $0x60c] sm:$0xff]
    %v4027 = vld [vmem:[#allocation8 + $0x614] sm:$0xf]
    %v4028 = vld [vmem:[#allocation8 + $0x618] sm:$0xff]
    %v4029 = vld [vmem:[#allocation8 + $0x620] sm:$0xff]
    %v4030 = vld [vmem:[#allocation8 + $0x628] sm:$0xf]
    %v4031 = vld [vmem:[#allocation8 + $0x62c] sm:$0xff]
    %v4032 = vld [vmem:[#allocation8 + $0x634] sm:$0xff]
    %v4033 = vld [vmem:[#allocation8 + $0x63c] sm:$0xf]
    %v4034 = vld [vmem:[%s6] sm:$0x1f]
    %v4036 = vlaneseq
    %v4037 = vshrl.u32 %v4036, 7
    %v4038 = vsub.s32 0, %v4037
    %v4039 = vrot.slane %v4034, %v4038
    %v4040 = vlaneseq
    %v4041 = vshrl.u32 %v4040, 7
    %v4042 = vsub.s32 1, %v4041
    %v4043 = vrot.slane %v4034, %v4042
    %v4044 = vlaneseq
    %v4045 = vshrl.u32 %v4044, 7
    %v4046 = vsub.s32 2, %v4045
    %v4047 = vrot.slane %v4034, %v4046
    %v4048 = vlaneseq
    %v4049 = vshrl.u32 %v4048, 7
    %v4050 = vsub.s32 3, %v4049
    %v4051 = vrot.slane %v4034, %v4050
    %v4052 = vlaneseq
    %v4053 = vshrl.u32 %v4052, 7
    %v4054 = vsub.s32 4, %v4053
    %v4055 = vrot.slane %v4034, %v4054
    %v4301 = vunpack.c.l.b16 %v3794
    %v4302 = vunpack.c.h.b16 %v3794
    %v4303 = vunpack.c.l.b16 %v3795
    %v4304 = vunpack.c.h.b16 %v3795
    %v4305 = vunpack.c.l.b16 %v3796
    %v4306 = vunpack.c.l.b16 %v3797
    %v4307 = vunpack.c.h.b16 %v3797
    %v4308 = vunpack.c.l.b16 %v3798
    %v4309 = vunpack.c.h.b16 %v3798
    %v4310 = vunpack.c.l.b16 %v3799
    %v4311 = vunpack.c.l.b16 %v3800
    %v4312 = vunpack.c.h.b16 %v3800
    %v4313 = vunpack.c.l.b16 %v3801
    %v4314 = vunpack.c.h.b16 %v3801
    %v4315 = vunpack.c.l.b16 %v3802
    %v4316 = vunpack.c.l.b16 %v3803
    %v4317 = vunpack.c.h.b16 %v3803
    %v4318 = vunpack.c.l.b16 %v3804
    %v4319 = vunpack.c.h.b16 %v3804
    %v4320 = vunpack.c.l.b16 %v3805
    %v4321 = vunpack.c.l.b16 %v3806
    %v4322 = vunpack.c.h.b16 %v3806
    %v4323 = vunpack.c.l.b16 %v3807
    %v4324 = vunpack.c.h.b16 %v3807
    %v4325 = vunpack.c.l.b16 %v3808
    %v4326 = vunpack.c.l.b16 %v3809
    %v4327 = vunpack.c.h.b16 %v3809
    %v4328 = vunpack.c.l.b16 %v3810
    %v4329 = vunpack.c.h.b16 %v3810
    %v4330 = vunpack.c.l.b16 %v3811
    %v4331 = vunpack.c.l.b16 %v3812
    %v4332 = vunpack.c.h.b16 %v3812
    %v4333 = vunpack.c.l.b16 %v3813
    %v4334 = vunpack.c.h.b16 %v3813
    %v4335 = vunpack.c.l.b16 %v3814
    %v4336 = vunpack.c.l.b16 %v3815
    %v4337 = vunpack.c.h.b16 %v3815
    %v4338 = vunpack.c.l.b16 %v3816
    %v4339 = vunpack.c.h.b16 %v3816
    %v4340 = vunpack.c.l.b16 %v3817
    %v4341 = vunpack.c.l.b16 %v3818
    %v4342 = vunpack.c.h.b16 %v3818
    %v4343 = vunpack.c.l.b16 %v3819
    %v4344 = vunpack.c.h.b16 %v3819
    %v4345 = vunpack.c.l.b16 %v3820
    %v4346 = vunpack.c.l.b16 %v3821
    %v4347 = vunpack.c.h.b16 %v3821
    %v4348 = vunpack.c.l.b16 %v3822
    %v4349 = vunpack.c.h.b16 %v3822
    %v4350 = vunpack.c.l.b16 %v3823
    %v4351 = vunpack.c.l.b16 %v3824
    %v4352 = vunpack.c.h.b16 %v3824
    %v4353 = vunpack.c.l.b16 %v3825
    %v4354 = vunpack.c.h.b16 %v3825
    %v4355 = vunpack.c.l.b16 %v3826
    %v4356 = vunpack.c.l.b16 %v3827
    %v4357 = vunpack.c.h.b16 %v3827
    %v4358 = vunpack.c.l.b16 %v3828
    %v4359 = vunpack.c.h.b16 %v3828
    %v4360 = vunpack.c.l.b16 %v3829
    %v4361 = vunpack.c.l.b16 %v3830
    %v4362 = vunpack.c.h.b16 %v3830
    %v4363 = vunpack.c.l.b16 %v3831
    %v4364 = vunpack.c.h.b16 %v3831
    %v4365 = vunpack.c.l.b16 %v3832
    %v4366 = vunpack.c.l.b16 %v3833
    %v4367 = vunpack.c.h.b16 %v3833
    %v4368 = vunpack.c.l.b16 %v3834
    %v4369 = vunpack.c.h.b16 %v3834
    %v4370 = vunpack.c.l.b16 %v3835
    %v4371 = vunpack.c.l.b16 %v3836
    %v4372 = vunpack.c.h.b16 %v3836
    %v4373 = vunpack.c.l.b16 %v3837
    %v4374 = vunpack.c.h.b16 %v3837
    %v4375 = vunpack.c.l.b16 %v3838
    %v4376 = vunpack.c.l.b16 %v3839
    %v4377 = vunpack.c.h.b16 %v3839
    %v4378 = vunpack.c.l.b16 %v3840
    %v4379 = vunpack.c.h.b16 %v3840
    %v4380 = vunpack.c.l.b16 %v3841
    %v4381 = vunpack.c.l.b16 %v3842
    %v4382 = vunpack.c.h.b16 %v3842
    %v4383 = vunpack.c.l.b16 %v3843
    %v4384 = vunpack.c.h.b16 %v3843
    %v4385 = vunpack.c.l.b16 %v3844
    %v4386 = vunpack.c.l.b16 %v3845
    %v4387 = vunpack.c.h.b16 %v3845
    %v4388 = vunpack.c.l.b16 %v3846
    %v4389 = vunpack.c.h.b16 %v3846
    %v4390 = vunpack.c.l.b16 %v3847
    %v4391 = vunpack.c.l.b16 %v3848
    %v4392 = vunpack.c.h.b16 %v3848
    %v4393 = vunpack.c.l.b16 %v3849
    %v4394 = vunpack.c.h.b16 %v3849
    %v4395 = vunpack.c.l.b16 %v3850
    %v4396 = vunpack.c.l.b16 %v3851
    %v4397 = vunpack.c.h.b16 %v3851
    %v4398 = vunpack.c.l.b16 %v3852
    %v4399 = vunpack.c.h.b16 %v3852
    %v4400 = vunpack.c.l.b16 %v3853
    %v4401 = vunpack.c.l.b16 %v3854
    %v4402 = vunpack.c.h.b16 %v3854
    %v4403 = vunpack.c.l.b16 %v3855
    %v4404 = vunpack.c.h.b16 %v3855
    %v4405 = vunpack.c.l.b16 %v3856
    %v4406 = vunpack.c.l.b16 %v3857
    %v4407 = vunpack.c.h.b16 %v3857
    %v4408 = vunpack.c.l.b16 %v3858
    %v4409 = vunpack.c.h.b16 %v3858
    %v4410 = vunpack.c.l.b16 %v3859
    %v4411 = vunpack.c.l.b16 %v3860
    %v4412 = vunpack.c.h.b16 %v3860
    %v4413 = vunpack.c.l.b16 %v3861
    %v4414 = vunpack.c.h.b16 %v3861
    %v4415 = vunpack.c.l.b16 %v3862
    %v4416 = vunpack.c.l.b16 %v3863
    %v4417 = vunpack.c.h.b16 %v3863
    %v4418 = vunpack.c.l.b16 %v3864
    %v4419 = vunpack.c.h.b16 %v3864
    %v4420 = vunpack.c.l.b16 %v3865
    %v4421 = vunpack.c.l.b16 %v3866
    %v4422 = vunpack.c.h.b16 %v3866
    %v4423 = vunpack.c.l.b16 %v3867
    %v4424 = vunpack.c.h.b16 %v3867
    %v4425 = vunpack.c.l.b16 %v3868
    %v4426 = vunpack.c.l.b16 %v3869
    %v4427 = vunpack.c.h.b16 %v3869
    %v4428 = vunpack.c.l.b16 %v3870
    %v4429 = vunpack.c.h.b16 %v3870
    %v4430 = vunpack.c.l.b16 %v3871
    %v4431 = vunpack.c.l.b16 %v3872
    %v4432 = vunpack.c.h.b16 %v3872
    %v4433 = vunpack.c.l.b16 %v3873
    %v4434 = vunpack.c.h.b16 %v3873
    %v4435 = vunpack.c.l.b16 %v3874
    %v4436 = vunpack.c.l.b16 %v3875
    %v4437 = vunpack.c.h.b16 %v3875
    %v4438 = vunpack.c.l.b16 %v3876
    %v4439 = vunpack.c.h.b16 %v3876
    %v4440 = vunpack.c.l.b16 %v3877
    %v4441 = vunpack.c.l.b16 %v3878
    %v4442 = vunpack.c.h.b16 %v3878
    %v4443 = vunpack.c.l.b16 %v3879
    %v4444 = vunpack.c.h.b16 %v3879
    %v4445 = vunpack.c.l.b16 %v3880
    %v4446 = vunpack.c.l.b16 %v3881
    %v4447 = vunpack.c.h.b16 %v3881
    %v4448 = vunpack.c.l.b16 %v3882
    %v4449 = vunpack.c.h.b16 %v3882
    %v4450 = vunpack.c.l.b16 %v3883
    %v4451 = vunpack.c.l.b16 %v3884
    %v4452 = vunpack.c.h.b16 %v3884
    %v4453 = vunpack.c.l.b16 %v3885
    %v4454 = vunpack.c.h.b16 %v3885
    %v4455 = vunpack.c.l.b16 %v3886
    %v4456 = vunpack.c.l.b16 %v3887
    %v4457 = vunpack.c.h.b16 %v3887
    %v4458 = vunpack.c.l.b16 %v3888
    %v4459 = vunpack.c.h.b16 %v3888
    %v4460 = vunpack.c.l.b16 %v3889
    %v4461 = vunpack.c.l.b16 %v3890
    %v4462 = vunpack.c.h.b16 %v3890
    %v4463 = vunpack.c.l.b16 %v3891
    %v4464 = vunpack.c.h.b16 %v3891
    %v4465 = vunpack.c.l.b16 %v3892
    %v4466 = vunpack.c.l.b16 %v3893
    %v4467 = vunpack.c.h.b16 %v3893
    %v4468 = vunpack.c.l.b16 %v3894
    %v4469 = vunpack.c.h.b16 %v3894
    %v4470 = vunpack.c.l.b16 %v3895
    %v4471 = vunpack.c.l.b16 %v3896
    %v4472 = vunpack.c.h.b16 %v3896
    %v4473 = vunpack.c.l.b16 %v3897
    %v4474 = vunpack.c.h.b16 %v3897
    %v4475 = vunpack.c.l.b16 %v3898
    %v4476 = vunpack.c.l.b16 %v3899
    %v4477 = vunpack.c.h.b16 %v3899
    %v4478 = vunpack.c.l.b16 %v3900
    %v4479 = vunpack.c.h.b16 %v3900
    %v4480 = vunpack.c.l.b16 %v3901
    %v4481 = vunpack.c.l.b16 %v3902
    %v4482 = vunpack.c.h.b16 %v3902
    %v4483 = vunpack.c.l.b16 %v3903
    %v4484 = vunpack.c.h.b16 %v3903
    %v4485 = vunpack.c.l.b16 %v3904
    %v4486 = vunpack.c.l.b16 %v3905
    %v4487 = vunpack.c.h.b16 %v3905
    %v4488 = vunpack.c.l.b16 %v3906
    %v4489 = vunpack.c.h.b16 %v3906
    %v4490 = vunpack.c.l.b16 %v3907
    %v4491 = vunpack.c.l.b16 %v3908
    %v4492 = vunpack.c.h.b16 %v3908
    %v4493 = vunpack.c.l.b16 %v3909
    %v4494 = vunpack.c.h.b16 %v3909
    %v4495 = vunpack.c.l.b16 %v3910
    %v4496 = vunpack.c.l.b16 %v3911
    %v4497 = vunpack.c.h.b16 %v3911
    %v4498 = vunpack.c.l.b16 %v3912
    %v4499 = vunpack.c.h.b16 %v3912
    %v4500 = vunpack.c.l.b16 %v3913
    %v4501 = vunpack.c.l.b16 %v3914
    %v4502 = vunpack.c.h.b16 %v3914
    %v4503 = vunpack.c.l.b16 %v3915
    %v4504 = vunpack.c.h.b16 %v3915
    %v4505 = vunpack.c.l.b16 %v3916
    %v4506 = vunpack.c.l.b16 %v3917
    %v4507 = vunpack.c.h.b16 %v3917
    %v4508 = vunpack.c.l.b16 %v3918
    %v4509 = vunpack.c.h.b16 %v3918
    %v4510 = vunpack.c.l.b16 %v3919
    %v4511 = vunpack.c.l.b16 %v3920
    %v4512 = vunpack.c.h.b16 %v3920
    %v4513 = vunpack.c.l.b16 %v3921
    %v4514 = vunpack.c.h.b16 %v3921
    %v4515 = vunpack.c.l.b16 %v3922
    %v4516 = vunpack.c.l.b16 %v3923
    %v4517 = vunpack.c.h.b16 %v3923
    %v4518 = vunpack.c.l.b16 %v3924
    %v4519 = vunpack.c.h.b16 %v3924
    %v4520 = vunpack.c.l.b16 %v3925
    %v4521 = vunpack.c.l.b16 %v3926
    %v4522 = vunpack.c.h.b16 %v3926
    %v4523 = vunpack.c.l.b16 %v3927
    %v4524 = vunpack.c.h.b16 %v3927
    %v4525 = vunpack.c.l.b16 %v3928
    %v4526 = vunpack.c.l.b16 %v3929
    %v4527 = vunpack.c.h.b16 %v3929
    %v4528 = vunpack.c.l.b16 %v3930
    %v4529 = vunpack.c.h.b16 %v3930
    %v4530 = vunpack.c.l.b16 %v3931
    %v4531 = vunpack.c.l.b16 %v3932
    %v4532 = vunpack.c.h.b16 %v3932
    %v4533 = vunpack.c.l.b16 %v3933
    %v4534 = vunpack.c.h.b16 %v3933
    %v4535 = vunpack.c.l.b16 %v3934
    %v4536 = vunpack.c.l.b16 %v3935
    %v4537 = vunpack.c.h.b16 %v3935
    %v4538 = vunpack.c.l.b16 %v3936
    %v4539 = vunpack.c.h.b16 %v3936
    %v4540 = vunpack.c.l.b16 %v3937
    %v4541 = vunpack.c.l.b16 %v3938
    %v4542 = vunpack.c.h.b16 %v3938
    %v4543 = vunpack.c.l.b16 %v3939
    %v4544 = vunpack.c.h.b16 %v3939
    %v4545 = vunpack.c.l.b16 %v3940
    %v4546 = vunpack.c.l.b16 %v3941
    %v4547 = vunpack.c.h.b16 %v3941
    %v4548 = vunpack.c.l.b16 %v3942
    %v4549 = vunpack.c.h.b16 %v3942
    %v4550 = vunpack.c.l.b16 %v3943
    %v4551 = vunpack.c.l.b16 %v3944
    %v4552 = vunpack.c.h.b16 %v3944
    %v4553 = vunpack.c.l.b16 %v3945
    %v4554 = vunpack.c.h.b16 %v3945
    %v4555 = vunpack.c.l.b16 %v3946
    %v4556 = vunpack.c.l.b16 %v3947
    %v4557 = vunpack.c.h.b16 %v3947
    %v4558 = vunpack.c.l.b16 %v3948
    %v4559 = vunpack.c.h.b16 %v3948
    %v4560 = vunpack.c.l.b16 %v3949
    %v4561 = vunpack.c.l.b16 %v3950
    %v4562 = vunpack.c.h.b16 %v3950
    %v4563 = vunpack.c.l.b16 %v3951
    %v4564 = vunpack.c.h.b16 %v3951
    %v4565 = vunpack.c.l.b16 %v3952
    %v4566 = vunpack.c.l.b16 %v3953
    %v4567 = vunpack.c.h.b16 %v3953
    %v4568 = vunpack.c.l.b16 %v3954
    %v4569 = vunpack.c.h.b16 %v3954
    %v4570 = vunpack.c.l.b16 %v3955
    %v4571 = vunpack.c.l.b16 %v3956
    %v4572 = vunpack.c.h.b16 %v3956
    %v4573 = vunpack.c.l.b16 %v3957
    %v4574 = vunpack.c.h.b16 %v3957
    %v4575 = vunpack.c.l.b16 %v3958
    %v4576 = vunpack.c.l.b16 %v3959
    %v4577 = vunpack.c.h.b16 %v3959
    %v4578 = vunpack.c.l.b16 %v3960
    %v4579 = vunpack.c.h.b16 %v3960
    %v4580 = vunpack.c.l.b16 %v3961
    %v4581 = vunpack.c.l.b16 %v3962
    %v4582 = vunpack.c.h.b16 %v3962
    %v4583 = vunpack.c.l.b16 %v3963
    %v4584 = vunpack.c.h.b16 %v3963
    %v4585 = vunpack.c.l.b16 %v3964
    %v4586 = vunpack.c.l.b16 %v3965
    %v4587 = vunpack.c.h.b16 %v3965
    %v4588 = vunpack.c.l.b16 %v3966
    %v4589 = vunpack.c.h.b16 %v3966
    %v4590 = vunpack.c.l.b16 %v3967
    %v4591 = vunpack.c.l.b16 %v3968
    %v4592 = vunpack.c.h.b16 %v3968
    %v4593 = vunpack.c.l.b16 %v3969
    %v4594 = vunpack.c.h.b16 %v3969
    %v4595 = vunpack.c.l.b16 %v3970
    %v4596 = vunpack.c.l.b16 %v3971
    %v4597 = vunpack.c.h.b16 %v3971
    %v4598 = vunpack.c.l.b16 %v3972
    %v4599 = vunpack.c.h.b16 %v3972
    %v4600 = vunpack.c.l.b16 %v3973
    %v4601 = vunpack.c.l.b16 %v3974
    %v4602 = vunpack.c.h.b16 %v3974
    %v4603 = vunpack.c.l.b16 %v3975
    %v4604 = vunpack.c.h.b16 %v3975
    %v4605 = vunpack.c.l.b16 %v3976
    %v4606 = vunpack.c.l.b16 %v3977
    %v4607 = vunpack.c.h.b16 %v3977
    %v4608 = vunpack.c.l.b16 %v3978
    %v4609 = vunpack.c.h.b16 %v3978
    %v4610 = vunpack.c.l.b16 %v3979
    %v4611 = vunpack.c.l.b16 %v3980
    %v4612 = vunpack.c.h.b16 %v3980
    %v4613 = vunpack.c.l.b16 %v3981
    %v4614 = vunpack.c.h.b16 %v3981
    %v4615 = vunpack.c.l.b16 %v3982
    %v4616 = vunpack.c.l.b16 %v3983
    %v4617 = vunpack.c.h.b16 %v3983
    %v4618 = vunpack.c.l.b16 %v3984
    %v4619 = vunpack.c.h.b16 %v3984
    %v4620 = vunpack.c.l.b16 %v3985
    %v4621 = vunpack.c.l.b16 %v3986
    %v4622 = vunpack.c.h.b16 %v3986
    %v4623 = vunpack.c.l.b16 %v3987
    %v4624 = vunpack.c.h.b16 %v3987
    %v4625 = vunpack.c.l.b16 %v3988
    %v4626 = vunpack.c.l.b16 %v3989
    %v4627 = vunpack.c.h.b16 %v3989
    %v4628 = vunpack.c.l.b16 %v3990
    %v4629 = vunpack.c.h.b16 %v3990
    %v4630 = vunpack.c.l.b16 %v3991
    %v4631 = vunpack.c.l.b16 %v3992
    %v4632 = vunpack.c.h.b16 %v3992
    %v4633 = vunpack.c.l.b16 %v3993
    %v4634 = vunpack.c.h.b16 %v3993
    %v4635 = vunpack.c.l.b16 %v3994
    %v4636 = vunpack.c.l.b16 %v3995
    %v4637 = vunpack.c.h.b16 %v3995
    %v4638 = vunpack.c.l.b16 %v3996
    %v4639 = vunpack.c.h.b16 %v3996
    %v4640 = vunpack.c.l.b16 %v3997
    %v4641 = vunpack.c.l.b16 %v3998
    %v4642 = vunpack.c.h.b16 %v3998
    %v4643 = vunpack.c.l.b16 %v3999
    %v4644 = vunpack.c.h.b16 %v3999
    %v4645 = vunpack.c.l.b16 %v4000
    %v4646 = vunpack.c.l.b16 %v4001
    %v4647 = vunpack.c.h.b16 %v4001
    %v4648 = vunpack.c.l.b16 %v4002
    %v4649 = vunpack.c.h.b16 %v4002
    %v4650 = vunpack.c.l.b16 %v4003
    %v4651 = vunpack.c.l.b16 %v4004
    %v4652 = vunpack.c.h.b16 %v4004
    %v4653 = vunpack.c.l.b16 %v4005
    %v4654 = vunpack.c.h.b16 %v4005
    %v4655 = vunpack.c.l.b16 %v4006
    %v4656 = vunpack.c.l.b16 %v4007
    %v4657 = vunpack.c.h.b16 %v4007
    %v4658 = vunpack.c.l.b16 %v4008
    %v4659 = vunpack.c.h.b16 %v4008
    %v4660 = vunpack.c.l.b16 %v4009
    %v4661 = vunpack.c.l.b16 %v4010
    %v4662 = vunpack.c.h.b16 %v4010
    %v4663 = vunpack.c.l.b16 %v4011
    %v4664 = vunpack.c.h.b16 %v4011
    %v4665 = vunpack.c.l.b16 %v4012
    %v4666 = vunpack.c.l.b16 %v4013
    %v4667 = vunpack.c.h.b16 %v4013
    %v4668 = vunpack.c.l.b16 %v4014
    %v4669 = vunpack.c.h.b16 %v4014
    %v4670 = vunpack.c.l.b16 %v4015
    %v4671 = vunpack.c.l.b16 %v4016
    %v4672 = vunpack.c.h.b16 %v4016
    %v4673 = vunpack.c.l.b16 %v4017
    %v4674 = vunpack.c.h.b16 %v4017
    %v4675 = vunpack.c.l.b16 %v4018
    %v4676 = vunpack.c.l.b16 %v4019
    %v4677 = vunpack.c.h.b16 %v4019
    %v4678 = vunpack.c.l.b16 %v4020
    %v4679 = vunpack.c.h.b16 %v4020
    %v4680 = vunpack.c.l.b16 %v4021
    %v4681 = vunpack.c.l.b16 %v4022
    %v4682 = vunpack.c.h.b16 %v4022
    %v4683 = vunpack.c.l.b16 %v4023
    %v4684 = vunpack.c.h.b16 %v4023
    %v4685 = vunpack.c.l.b16 %v4024
    %v4686 = vunpack.c.l.b16 %v4025
    %v4687 = vunpack.c.h.b16 %v4025
    %v4688 = vunpack.c.l.b16 %v4026
    %v4689 = vunpack.c.h.b16 %v4026
    %v4690 = vunpack.c.l.b16 %v4027
    %v4691 = vunpack.c.l.b16 %v4028
    %v4692 = vunpack.c.h.b16 %v4028
    %v4693 = vunpack.c.l.b16 %v4029
    %v4694 = vunpack.c.h.b16 %v4029
    %v4695 = vunpack.c.l.b16 %v4030
    %v4696 = vunpack.c.l.b16 %v4031
    %v4697 = vunpack.c.h.b16 %v4031
    %v4698 = vunpack.c.l.b16 %v4032
    %v4699 = vunpack.c.h.b16 %v4032
    %v4700 = vunpack.c.l.b16 %v4033
    %v4701 = vpack.c.b16 %v4306, %v4301
    %v4702 = vpack.c.b16 %v4307, %v4302
    %v4703 = vpack.c.b16 %v4308, %v4303
    %v4704 = vpack.c.b16 %v4309, %v4304
    %v4705 = vpack.c.b16 %v4310, %v4305
    %v4706 = vpack.c.b16 %v4316, %v4311
    %v4707 = vpack.c.b16 %v4317, %v4312
    %v4708 = vpack.c.b16 %v4318, %v4313
    %v4709 = vpack.c.b16 %v4319, %v4314
    %v4710 = vpack.c.b16 %v4320, %v4315
    %v4711 = vpack.c.b16 %v4326, %v4321
    %v4712 = vpack.c.b16 %v4327, %v4322
    %v4713 = vpack.c.b16 %v4328, %v4323
    %v4714 = vpack.c.b16 %v4329, %v4324
    %v4715 = vpack.c.b16 %v4330, %v4325
    %v4716 = vpack.c.b16 %v4336, %v4331
    %v4717 = vpack.c.b16 %v4337, %v4332
    %v4718 = vpack.c.b16 %v4338, %v4333
    %v4719 = vpack.c.b16 %v4339, %v4334
    %v4720 = vpack.c.b16 %v4340, %v4335
    %v4721 = vpack.c.b16 %v4346, %v4341
    %v4722 = vpack.c.b16 %v4347, %v4342
    %v4723 = vpack.c.b16 %v4348, %v4343
    %v4724 = vpack.c.b16 %v4349, %v4344
    %v4725 = vpack.c.b16 %v4350, %v4345
    %v4726 = vpack.c.b16 %v4356, %v4351
    %v4727 = vpack.c.b16 %v4357, %v4352
    %v4728 = vpack.c.b16 %v4358, %v4353
    %v4729 = vpack.c.b16 %v4359, %v4354
    %v4730 = vpack.c.b16 %v4360, %v4355
    %v4731 = vpack.c.b16 %v4366, %v4361
    %v4732 = vpack.c.b16 %v4367, %v4362
    %v4733 = vpack.c.b16 %v4368, %v4363
    %v4734 = vpack.c.b16 %v4369, %v4364
    %v4735 = vpack.c.b16 %v4370, %v4365
    %v4736 = vpack.c.b16 %v4376, %v4371
    %v4737 = vpack.c.b16 %v4377, %v4372
    %v4738 = vpack.c.b16 %v4378, %v4373
    %v4739 = vpack.c.b16 %v4379, %v4374
    %v4740 = vpack.c.b16 %v4380, %v4375
    %v4741 = vpack.c.b16 %v4386, %v4381
    %v4742 = vpack.c.b16 %v4387, %v4382
    %v4743 = vpack.c.b16 %v4388, %v4383
    %v4744 = vpack.c.b16 %v4389, %v4384
    %v4745 = vpack.c.b16 %v4390, %v4385
    %v4746 = vpack.c.b16 %v4396, %v4391
    %v4747 = vpack.c.b16 %v4397, %v4392
    %v4748 = vpack.c.b16 %v4398, %v4393
    %v4749 = vpack.c.b16 %v4399, %v4394
    %v4750 = vpack.c.b16 %v4400, %v4395
    %v4751 = vpack.c.b16 %v4406, %v4401
    %v4752 = vpack.c.b16 %v4407, %v4402
    %v4753 = vpack.c.b16 %v4408, %v4403
    %v4754 = vpack.c.b16 %v4409, %v4404
    %v4755 = vpack.c.b16 %v4410, %v4405
    %v4756 = vpack.c.b16 %v4416, %v4411
    %v4757 = vpack.c.b16 %v4417, %v4412
    %v4758 = vpack.c.b16 %v4418, %v4413
    %v4759 = vpack.c.b16 %v4419, %v4414
    %v4760 = vpack.c.b16 %v4420, %v4415
    %v4761 = vpack.c.b16 %v4426, %v4421
    %v4762 = vpack.c.b16 %v4427, %v4422
    %v4763 = vpack.c.b16 %v4428, %v4423
    %v4764 = vpack.c.b16 %v4429, %v4424
    %v4765 = vpack.c.b16 %v4430, %v4425
    %v4766 = vpack.c.b16 %v4436, %v4431
    %v4767 = vpack.c.b16 %v4437, %v4432
    %v4768 = vpack.c.b16 %v4438, %v4433
    %v4769 = vpack.c.b16 %v4439, %v4434
    %v4770 = vpack.c.b16 %v4440, %v4435
    %v4771 = vpack.c.b16 %v4446, %v4441
    %v4772 = vpack.c.b16 %v4447, %v4442
    %v4773 = vpack.c.b16 %v4448, %v4443
    %v4774 = vpack.c.b16 %v4449, %v4444
    %v4775 = vpack.c.b16 %v4450, %v4445
    %v4776 = vpack.c.b16 %v4456, %v4451
    %v4777 = vpack.c.b16 %v4457, %v4452
    %v4778 = vpack.c.b16 %v4458, %v4453
    %v4779 = vpack.c.b16 %v4459, %v4454
    %v4780 = vpack.c.b16 %v4460, %v4455
    %v4781 = vpack.c.b16 %v4466, %v4461
    %v4782 = vpack.c.b16 %v4467, %v4462
    %v4783 = vpack.c.b16 %v4468, %v4463
    %v4784 = vpack.c.b16 %v4469, %v4464
    %v4785 = vpack.c.b16 %v4470, %v4465
    %v4786 = vpack.c.b16 %v4476, %v4471
    %v4787 = vpack.c.b16 %v4477, %v4472
    %v4788 = vpack.c.b16 %v4478, %v4473
    %v4789 = vpack.c.b16 %v4479, %v4474
    %v4790 = vpack.c.b16 %v4480, %v4475
    %v4791 = vpack.c.b16 %v4486, %v4481
    %v4792 = vpack.c.b16 %v4487, %v4482
    %v4793 = vpack.c.b16 %v4488, %v4483
    %v4794 = vpack.c.b16 %v4489, %v4484
    %v4795 = vpack.c.b16 %v4490, %v4485
    %v4796 = vpack.c.b16 %v4496, %v4491
    %v4797 = vpack.c.b16 %v4497, %v4492
    %v4798 = vpack.c.b16 %v4498, %v4493
    %v4799 = vpack.c.b16 %v4499, %v4494
    %v4800 = vpack.c.b16 %v4500, %v4495
    %v4801 = vpack.c.b16 %v4506, %v4501
    %v4802 = vpack.c.b16 %v4507, %v4502
    %v4803 = vpack.c.b16 %v4508, %v4503
    %v4804 = vpack.c.b16 %v4509, %v4504
    %v4805 = vpack.c.b16 %v4510, %v4505
    %v4806 = vpack.c.b16 %v4516, %v4511
    %v4807 = vpack.c.b16 %v4517, %v4512
    %v4808 = vpack.c.b16 %v4518, %v4513
    %v4809 = vpack.c.b16 %v4519, %v4514
    %v4810 = vpack.c.b16 %v4520, %v4515
    %v4811 = vpack.c.b16 %v4526, %v4521
    %v4812 = vpack.c.b16 %v4527, %v4522
    %v4813 = vpack.c.b16 %v4528, %v4523
    %v4814 = vpack.c.b16 %v4529, %v4524
    %v4815 = vpack.c.b16 %v4530, %v4525
    %v4816 = vpack.c.b16 %v4536, %v4531
    %v4817 = vpack.c.b16 %v4537, %v4532
    %v4818 = vpack.c.b16 %v4538, %v4533
    %v4819 = vpack.c.b16 %v4539, %v4534
    %v4820 = vpack.c.b16 %v4540, %v4535
    %v4821 = vpack.c.b16 %v4546, %v4541
    %v4822 = vpack.c.b16 %v4547, %v4542
    %v4823 = vpack.c.b16 %v4548, %v4543
    %v4824 = vpack.c.b16 %v4549, %v4544
    %v4825 = vpack.c.b16 %v4550, %v4545
    %v4826 = vpack.c.b16 %v4556, %v4551
    %v4827 = vpack.c.b16 %v4557, %v4552
    %v4828 = vpack.c.b16 %v4558, %v4553
    %v4829 = vpack.c.b16 %v4559, %v4554
    %v4830 = vpack.c.b16 %v4560, %v4555
    %v4831 = vpack.c.b16 %v4566, %v4561
    %v4832 = vpack.c.b16 %v4567, %v4562
    %v4833 = vpack.c.b16 %v4568, %v4563
    %v4834 = vpack.c.b16 %v4569, %v4564
    %v4835 = vpack.c.b16 %v4570, %v4565
    %v4836 = vpack.c.b16 %v4576, %v4571
    %v4837 = vpack.c.b16 %v4577, %v4572
    %v4838 = vpack.c.b16 %v4578, %v4573
    %v4839 = vpack.c.b16 %v4579, %v4574
    %v4840 = vpack.c.b16 %v4580, %v4575
    %v4841 = vpack.c.b16 %v4586, %v4581
    %v4842 = vpack.c.b16 %v4587, %v4582
    %v4843 = vpack.c.b16 %v4588, %v4583
    %v4844 = vpack.c.b16 %v4589, %v4584
    %v4845 = vpack.c.b16 %v4590, %v4585
    %v4846 = vpack.c.b16 %v4596, %v4591
    %v4847 = vpack.c.b16 %v4597, %v4592
    %v4848 = vpack.c.b16 %v4598, %v4593
    %v4849 = vpack.c.b16 %v4599, %v4594
    %v4850 = vpack.c.b16 %v4600, %v4595
    %v4851 = vpack.c.b16 %v4606, %v4601
    %v4852 = vpack.c.b16 %v4607, %v4602
    %v4853 = vpack.c.b16 %v4608, %v4603
    %v4854 = vpack.c.b16 %v4609, %v4604
    %v4855 = vpack.c.b16 %v4610, %v4605
    %v4856 = vpack.c.b16 %v4616, %v4611
    %v4857 = vpack.c.b16 %v4617, %v4612
    %v4858 = vpack.c.b16 %v4618, %v4613
    %v4859 = vpack.c.b16 %v4619, %v4614
    %v4860 = vpack.c.b16 %v4620, %v4615
    %v4861 = vpack.c.b16 %v4626, %v4621
    %v4862 = vpack.c.b16 %v4627, %v4622
    %v4863 = vpack.c.b16 %v4628, %v4623
    %v4864 = vpack.c.b16 %v4629, %v4624
    %v4865 = vpack.c.b16 %v4630, %v4625
    %v4866 = vpack.c.b16 %v4636, %v4631
    %v4867 = vpack.c.b16 %v4637, %v4632
    %v4868 = vpack.c.b16 %v4638, %v4633
    %v4869 = vpack.c.b16 %v4639, %v4634
    %v4870 = vpack.c.b16 %v4640, %v4635
    %v4871 = vpack.c.b16 %v4646, %v4641
    %v4872 = vpack.c.b16 %v4647, %v4642
    %v4873 = vpack.c.b16 %v4648, %v4643
    %v4874 = vpack.c.b16 %v4649, %v4644
    %v4875 = vpack.c.b16 %v4650, %v4645
    %v4876 = vpack.c.b16 %v4656, %v4651
    %v4877 = vpack.c.b16 %v4657, %v4652
    %v4878 = vpack.c.b16 %v4658, %v4653
    %v4879 = vpack.c.b16 %v4659, %v4654
    %v4880 = vpack.c.b16 %v4660, %v4655
    %v4881 = vpack.c.b16 %v4666, %v4661
    %v4882 = vpack.c.b16 %v4667, %v4662
    %v4883 = vpack.c.b16 %v4668, %v4663
    %v4884 = vpack.c.b16 %v4669, %v4664
    %v4885 = vpack.c.b16 %v4670, %v4665
    %v4886 = vpack.c.b16 %v4676, %v4671
    %v4887 = vpack.c.b16 %v4677, %v4672
    %v4888 = vpack.c.b16 %v4678, %v4673
    %v4889 = vpack.c.b16 %v4679, %v4674
    %v4890 = vpack.c.b16 %v4680, %v4675
    %v4891 = vpack.c.b16 %v4686, %v4681
    %v4892 = vpack.c.b16 %v4687, %v4682
    %v4893 = vpack.c.b16 %v4688, %v4683
    %v4894 = vpack.c.b16 %v4689, %v4684
    %v4895 = vpack.c.b16 %v4690, %v4685
    %v4896 = vpack.c.b16 %v4696, %v4691
    %v4897 = vpack.c.b16 %v4697, %v4692
    %v4898 = vpack.c.b16 %v4698, %v4693
    %v4899 = vpack.c.b16 %v4699, %v4694
    %v4900 = vpack.c.b16 %v4700, %v4695
    %5101 = vmatprep.subr.bf16.mxu0 %v4702
    %5102 = vmatpush1.bf16.msra.mxu0 %v4701
    %5103 = vmatprep.subr.bf16.mxu0 %v4707
    %5104 = vmatpush1.bf16.msra.mxu0 %v4706
    %5105 = vmatprep.subr.bf16.mxu0 %v4712
    %5106 = vmatpush1.bf16.msra.mxu0 %v4711
    %5107 = vmatprep.subr.bf16.mxu0 %v4717
    %5108 = vmatpush1.bf16.msra.mxu0 %v4716
    %5109 = vmatprep.subr.bf16.mxu0 %v4722
    %5110 = vmatpush1.bf16.msra.mxu0 %v4721
    %5111 = vmatprep.subr.bf16.mxu0 %v4727
    %5112 = vmatpush1.bf16.msra.mxu0 %v4726
    %5113 = vmatprep.subr.bf16.mxu0 %v4732
    %5114 = vmatpush1.bf16.msra.mxu0 %v4731
    %5115 = vmatprep.subr.bf16.mxu0 %v4737
    %5116 = vmatpush1.bf16.msra.mxu0 %v4736
    %5117 = vmatprep.subr.bf16.mxu0 %v4742
    %5118 = vmatpush1.bf16.msra.mxu0 %v4741
    %5119 = vmatprep.subr.bf16.mxu0 %v4747
    %5120 = vmatpush1.bf16.msra.mxu0 %v4746
    %5121 = vmatprep.subr.bf16.mxu0 %v4752
    %5122 = vmatpush1.bf16.msra.mxu0 %v4751
    %5123 = vmatprep.subr.bf16.mxu0 %v4757
    %5124 = vmatpush1.bf16.msra.mxu0 %v4756
    %5125 = vmatprep.subr.bf16.mxu0 %v4762
    %5126 = vmatpush1.bf16.msra.mxu0 %v4761
    %5127 = vmatprep.subr.bf16.mxu0 %v4767
    %5128 = vmatpush1.bf16.msra.mxu0 %v4766
    %5129 = vmatprep.subr.bf16.mxu0 %v4772
    %5130 = vmatpush1.bf16.msra.mxu0 %v4771
    %5131 = vmatprep.subr.bf16.mxu0 %v4777
    %5132 = vmatpush1.bf16.msra.mxu0 %v4776
    %5133 = vmatprep.mubr.bf16.mxu0 %v3790
    %5134 = vmatmul.mubr.bf16.gmra.mrb[0].mxu0 %v3789
    %v5135 = vpop.f32.mrb[0].mxu0
    %v5136 = vadd.f32 %v4039, %v5135
    %v5137 = vpop.f32.mrb[0].mxu0
    %v5138 = vadd.f32 %v4043, %v5137
    %v5139 = vpop.f32.mrb[0].mxu0
    %v5140 = vpop.f32.mrb[0].mxu0
    %5141 = vdwg.mxu0
    %5142 = vmatprep.subr.bf16.mxu0 %v4782
    %5143 = vmatpush1.bf16.msra.mxu0 %v4781
    %5144 = vmatprep.subr.bf16.mxu0 %v4787
    %5145 = vmatpush1.bf16.msra.mxu0 %v4786
    %5146 = vmatprep.subr.bf16.mxu0 %v4792
    %5147 = vmatpush1.bf16.msra.mxu0 %v4791
    %5148 = vmatprep.subr.bf16.mxu0 %v4797
    %5149 = vmatpush1.bf16.msra.mxu0 %v4796
    %5150 = vmatprep.subr.bf16.mxu0 %v4802
    %5151 = vmatpush1.bf16.msra.mxu0 %v4801
    %5152 = vmatprep.subr.bf16.mxu0 %v4807
    %5153 = vmatpush1.bf16.msra.mxu0 %v4806
    %5154 = vmatprep.subr.bf16.mxu0 %v4812
    %5155 = vmatpush1.bf16.msra.mxu0 %v4811
    %5156 = vmatprep.subr.bf16.mxu0 %v4817
    %5157 = vmatpush1.bf16.msra.mxu0 %v4816
    %5158 = vmatprep.subr.bf16.mxu0 %v4822
    %5159 = vmatpush1.bf16.msra.mxu0 %v4821
    %5160 = vmatprep.subr.bf16.mxu0 %v4827
    %5161 = vmatpush1.bf16.msra.mxu0 %v4826
    %5162 = vmatprep.subr.bf16.mxu0 %v4832
    %5163 = vmatpush1.bf16.msra.mxu0 %v4831
    %5164 = vmatprep.subr.bf16.mxu0 %v4837
    %5165 = vmatpush1.bf16.msra.mxu0 %v4836
    %5166 = vmatprep.subr.bf16.mxu0 %v4842
    %5167 = vmatpush1.bf16.msra.mxu0 %v4841
    %5168 = vmatprep.subr.bf16.mxu0 %v4847
    %5169 = vmatpush1.bf16.msra.mxu0 %v4846
    %5170 = vmatprep.subr.bf16.mxu0 %v4852
    %5171 = vmatpush1.bf16.msra.mxu0 %v4851
    %5172 = vmatprep.subr.bf16.mxu0 %v4857
    %5173 = vmatpush1.bf16.msra.mxu0 %v4856
    %5174 = vmatprep.mubr.bf16.mxu0 %v3792
    %5175 = vmatmul.mubr.bf16.gmra.mrb[0].mxu0 %v3791
    %v5176 = vpop.f32.mrb[0].mxu0
    %v5177 = vadd.f32 %v5136, %v5176
    %v5178 = vpop.f32.mrb[0].mxu0
    %v5179 = vadd.f32 %v5138, %v5178
    %v5180 = vpop.f32.mrb[0].mxu0
    %v5181 = vpop.f32.mrb[0].mxu0
    %5182 = vdwg.mxu0
    %5183 = vmatprep.subr.bf16.mxu0 %v4862
    %5184 = vmatpush1.bf16.msra.mxu0 %v4861
    %5185 = vmatprep.subr.bf16.mxu0 %v4867
    %5186 = vmatpush1.bf16.msra.mxu0 %v4866
    %5187 = vmatprep.subr.bf16.mxu0 %v4872
    %5188 = vmatpush1.bf16.msra.mxu0 %v4871
    %5189 = vmatprep.subr.bf16.mxu0 %v4877
    %5190 = vmatpush1.bf16.msra.mxu0 %v4876
    %5191 = vmatprep.subr.bf16.mxu0 %v4882
    %5192 = vmatpush1.bf16.msra.mxu0 %v4881
    %5193 = vmatprep.subr.bf16.mxu0 %v4887
    %5194 = vmatpush1.bf16.msra.mxu0 %v4886
    %5195 = vmatprep.subr.bf16.mxu0 %v4892
    %5196 = vmatpush1.bf16.msra.mxu0 %v4891
    %5197 = vmatprep.subr.bf16.mxu0 %v4897
    %5198 = vmatpush1.bf16.msra.mxu0 %v4896
    %5199 = vmatprep.subr.bf16.mxu0 0
    %5200 = vmatpush1.bf16.msra.mxu0 0
    %5201 = vmatprep.subr.bf16.mxu0 0
    %5202 = vmatpush1.bf16.msra.mxu0 0
    %5203 = vmatprep.subr.bf16.mxu0 0
    %5204 = vmatpush1.bf16.msra.mxu0 0
    %5205 = vmatprep.subr.bf16.mxu0 0
    %5206 = vmatpush1.bf16.msra.mxu0 0
    %5207 = vmatprep.subr.bf16.mxu0 0
    %5208 = vmatpush1.bf16.msra.mxu0 0
    %5209 = vmatprep.subr.bf16.mxu0 0
    %5210 = vmatpush1.bf16.msra.mxu0 0
    %5211 = vmatprep.subr.bf16.mxu0 0
    %5212 = vmatpush1.bf16.msra.mxu0 0
    %5213 = vmatprep.subr.bf16.mxu0 0
    %5214 = vmatpush1.bf16.msra.mxu0 0
    %5215 = vmatprep.mubr.bf16.mxu0 0
    %5216 = vmatmul.mubr.bf16.gmra.mrb[0].mxu0 %v3793
    %v5217 = vpop.f32.mrb[0].mxu0
    %v5218 = vadd.f32 %v5177, %v5217
    %v5219 = vpop.f32.mrb[0].mxu0
    %v5220 = vadd.f32 %v5179, %v5219
    %v5221 = vpop.f32.mrb[0].mxu0
    %v5222 = vpop.f32.mrb[0].mxu0
    %5223 = vdwg.mxu0
    %5224 = vmatprep.subr.bf16.mxu0 %v4704
    %5225 = vmatpush1.bf16.msra.mxu0 %v4703
    %5226 = vmatprep.subr.bf16.mxu0 %v4709
    %5227 = vmatpush1.bf16.msra.mxu0 %v4708
    %5228 = vmatprep.subr.bf16.mxu0 %v4714
    %5229 = vmatpush1.bf16.msra.mxu0 %v4713
    %5230 = vmatprep.subr.bf16.mxu0 %v4719
    %5231 = vmatpush1.bf16.msra.mxu0 %v4718
    %5232 = vmatprep.subr.bf16.mxu0 %v4724
    %5233 = vmatpush1.bf16.msra.mxu0 %v4723
    %5234 = vmatprep.subr.bf16.mxu0 %v4729
    %5235 = vmatpush1.bf16.msra.mxu0 %v4728
    %5236 = vmatprep.subr.bf16.mxu0 %v4734
    %5237 = vmatpush1.bf16.msra.mxu0 %v4733
    %5238 = vmatprep.subr.bf16.mxu0 %v4739
    %5239 = vmatpush1.bf16.msra.mxu0 %v4738
    %5240 = vmatprep.subr.bf16.mxu0 %v4744
    %5241 = vmatpush1.bf16.msra.mxu0 %v4743
    %5242 = vmatprep.subr.bf16.mxu0 %v4749
    %5243 = vmatpush1.bf16.msra.mxu0 %v4748
    %5244 = vmatprep.subr.bf16.mxu0 %v4754
    %5245 = vmatpush1.bf16.msra.mxu0 %v4753
    %5246 = vmatprep.subr.bf16.mxu0 %v4759
    %5247 = vmatpush1.bf16.msra.mxu0 %v4758
    %5248 = vmatprep.subr.bf16.mxu0 %v4764
    %5249 = vmatpush1.bf16.msra.mxu0 %v4763
    %5250 = vmatprep.subr.bf16.mxu0 %v4769
    %5251 = vmatpush1.bf16.msra.mxu0 %v4768
    %5252 = vmatprep.subr.bf16.mxu0 %v4774
    %5253 = vmatpush1.bf16.msra.mxu0 %v4773
    %5254 = vmatprep.subr.bf16.mxu0 %v4779
    %5255 = vmatpush1.bf16.msra.mxu0 %v4778
    %5256 = vmatprep.mubr.bf16.mxu0 %v3790
    %5257 = vmatmul.mubr.bf16.gmra.mrb[0].mxu0 %v3789
    %v5258 = vpop.f32.mrb[0].mxu0
    %v5259 = vadd.f32 %v4047, %v5258
    %v5260 = vpop.f32.mrb[0].mxu0
    %v5261 = vadd.f32 %v4051, %v5260
    %v5262 = vpop.f32.mrb[0].mxu0
    %v5263 = vpop.f32.mrb[0].mxu0
    %5264 = vdwg.mxu0
    %5265 = vmatprep.subr.bf16.mxu0 %v4784
    %5266 = vmatpush1.bf16.msra.mxu0 %v4783
    %5267 = vmatprep.subr.bf16.mxu0 %v4789
    %5268 = vmatpush1.bf16.msra.mxu0 %v4788
    %5269 = vmatprep.subr.bf16.mxu0 %v4794
    %5270 = vmatpush1.bf16.msra.mxu0 %v4793
    %5271 = vmatprep.subr.bf16.mxu0 %v4799
    %5272 = vmatpush1.bf16.msra.mxu0 %v4798
    %5273 = vmatprep.subr.bf16.mxu0 %v4804
    %5274 = vmatpush1.bf16.msra.mxu0 %v4803
    %5275 = vmatprep.subr.bf16.mxu0 %v4809
    %5276 = vmatpush1.bf16.msra.mxu0 %v4808
    %5277 = vmatprep.subr.bf16.mxu0 %v4814
    %5278 = vmatpush1.bf16.msra.mxu0 %v4813
    %5279 = vmatprep.subr.bf16.mxu0 %v4819
    %5280 = vmatpush1.bf16.msra.mxu0 %v4818
    %5281 = vmatprep.subr.bf16.mxu0 %v4824
    %5282 = vmatpush1.bf16.msra.mxu0 %v4823
    %5283 = vmatprep.subr.bf16.mxu0 %v4829
    %5284 = vmatpush1.bf16.msra.mxu0 %v4828
    %5285 = vmatprep.subr.bf16.mxu0 %v4834
    %5286 = vmatpush1.bf16.msra.mxu0 %v4833
    %5287 = vmatprep.subr.bf16.mxu0 %v4839
    %5288 = vmatpush1.bf16.msra.mxu0 %v4838
    %5289 = vmatprep.subr.bf16.mxu0 %v4844
    %5290 = vmatpush1.bf16.msra.mxu0 %v4843
    %5291 = vmatprep.subr.bf16.mxu0 %v4849
    %5292 = vmatpush1.bf16.msra.mxu0 %v4848
    %5293 = vmatprep.subr.bf16.mxu0 %v4854
    %5294 = vmatpush1.bf16.msra.mxu0 %v4853
    %5295 = vmatprep.subr.bf16.mxu0 %v4859
    %5296 = vmatpush1.bf16.msra.mxu0 %v4858
    %5297 = vmatprep.mubr.bf16.mxu0 %v3792
    %5298 = vmatmul.mubr.bf16.gmra.mrb[0].mxu0 %v3791
    %v5299 = vpop.f32.mrb[0].mxu0
    %v5300 = vadd.f32 %v5259, %v5299
    %v5301 = vpop.f32.mrb[0].mxu0
    %v5302 = vadd.f32 %v5261, %v5301
    %v5303 = vpop.f32.mrb[0].mxu0
    %v5304 = vpop.f32.mrb[0].mxu0
    %5305 = vdwg.mxu0
    %5306 = vmatprep.subr.bf16.mxu0 %v4864
    %5307 = vmatpush1.bf16.msra.mxu0 %v4863
    %5308 = vmatprep.subr.bf16.mxu0 %v4869
    %5309 = vmatpush1.bf16.msra.mxu0 %v4868
    %5310 = vmatprep.subr.bf16.mxu0 %v4874
    %5311 = vmatpush1.bf16.msra.mxu0 %v4873
    %5312 = vmatprep.subr.bf16.mxu0 %v4879
    %5313 = vmatpush1.bf16.msra.mxu0 %v4878
    %5314 = vmatprep.subr.bf16.mxu0 %v4884
    %5315 = vmatpush1.bf16.msra.mxu0 %v4883
    %5316 = vmatprep.subr.bf16.mxu0 %v4889
    %5317 = vmatpush1.bf16.msra.mxu0 %v4888
    %5318 = vmatprep.subr.bf16.mxu0 %v4894
    %5319 = vmatpush1.bf16.msra.mxu0 %v4893
    %5320 = vmatprep.subr.bf16.mxu0 %v4899
    %5321 = vmatpush1.bf16.msra.mxu0 %v4898
    %5322 = vmatprep.subr.bf16.mxu0 0
    %5323 = vmatpush1.bf16.msra.mxu0 0
    %5324 = vmatprep.subr.bf16.mxu0 0
    %5325 = vmatpush1.bf16.msra.mxu0 0
    %5326 = vmatprep.subr.bf16.mxu0 0
    %5327 = vmatpush1.bf16.msra.mxu0 0
    %5328 = vmatprep.subr.bf16.mxu0 0
    %5329 = vmatpush1.bf16.msra.mxu0 0
    %5330 = vmatprep.subr.bf16.mxu0 0
    %5331 = vmatpush1.bf16.msra.mxu0 0
    %5332 = vmatprep.subr.bf16.mxu0 0
    %5333 = vmatpush1.bf16.msra.mxu0 0
    %5334 = vmatprep.subr.bf16.mxu0 0
    %5335 = vmatpush1.bf16.msra.mxu0 0
    %5336 = vmatprep.subr.bf16.mxu0 0
    %5337 = vmatpush1.bf16.msra.mxu0 0
    %5338 = vmatprep.mubr.bf16.mxu0 0
    %5339 = vmatmul.mubr.bf16.gmra.mrb[0].mxu0 %v3793
    %v5340 = vpop.f32.mrb[0].mxu0
    %v5341 = vadd.f32 %v5300, %v5340
    %v5342 = vpop.f32.mrb[0].mxu0
    %v5343 = vadd.f32 %v5302, %v5342
    %v5344 = vpop.f32.mrb[0].mxu0
    %v5345 = vpop.f32.mrb[0].mxu0
    %5346 = vdwg.mxu0
    %5347 = vmatprep.subr.bf16.mxu0 0
    %5348 = vmatpush1.bf16.msra.mxu0 %v4705
    %5349 = vmatprep.subr.bf16.mxu0 0
    %5350 = vmatpush1.bf16.msra.mxu0 %v4710
    %5351 = vmatprep.subr.bf16.mxu0 0
    %5352 = vmatpush1.bf16.msra.mxu0 %v4715
    %5353 = vmatprep.subr.bf16.mxu0 0
    %5354 = vmatpush1.bf16.msra.mxu0 %v4720
    %5355 = vmatprep.subr.bf16.mxu0 0
    %5356 = vmatpush1.bf16.msra.mxu0 %v4725
    %5357 = vmatprep.subr.bf16.mxu0 0
    %5358 = vmatpush1.bf16.msra.mxu0 %v4730
    %5359 = vmatprep.subr.bf16.mxu0 0
    %5360 = vmatpush1.bf16.msra.mxu0 %v4735
    %5361 = vmatprep.subr.bf16.mxu0 0
    %5362 = vmatpush1.bf16.msra.mxu0 %v4740
    %5363 = vmatprep.subr.bf16.mxu0 0
    %5364 = vmatpush1.bf16.msra.mxu0 %v4745
    %5365 = vmatprep.subr.bf16.mxu0 0
    %5366 = vmatpush1.bf16.msra.mxu0 %v4750
    %5367 = vmatprep.subr.bf16.mxu0 0
    %5368 = vmatpush1.bf16.msra.mxu0 %v4755
    %5369 = vmatprep.subr.bf16.mxu0 0
    %5370 = vmatpush1.bf16.msra.mxu0 %v4760
    %5371 = vmatprep.subr.bf16.mxu0 0
    %5372 = vmatpush1.bf16.msra.mxu0 %v4765
    %5373 = vmatprep.subr.bf16.mxu0 0
    %5374 = vmatpush1.bf16.msra.mxu0 %v4770
    %5375 = vmatprep.subr.bf16.mxu0 0
    %5376 = vmatpush1.bf16.msra.mxu0 %v4775
    %5377 = vmatprep.subr.bf16.mxu0 0
    %5378 = vmatpush1.bf16.msra.mxu0 %v4780
    %5379 = vmatprep.mubr.bf16.mxu0 %v3790
    %5380 = vmatmul.mubr.bf16.gmra.mrb[0].mxu0 %v3789
    %v5381 = vpop.f32.mrb[0].mxu0
    %v5382 = vadd.f32 %v4055, %v5381
    %v5383 = vpop.f32.mrb[0].mxu0
    %v5384 = vpop.f32.mrb[0].mxu0
    %v5385 = vpop.f32.mrb[0].mxu0
    %5386 = vdwg.mxu0
    %5387 = vmatprep.subr.bf16.mxu0 0
    %5388 = vmatpush1.bf16.msra.mxu0 %v4785
    %5389 = vmatprep.subr.bf16.mxu0 0
    %5390 = vmatpush1.bf16.msra.mxu0 %v4790
    %5391 = vmatprep.subr.bf16.mxu0 0
    %5392 = vmatpush1.bf16.msra.mxu0 %v4795
    %5393 = vmatprep.subr.bf16.mxu0 0
    %5394 = vmatpush1.bf16.msra.mxu0 %v4800
    %5395 = vmatprep.subr.bf16.mxu0 0
    %5396 = vmatpush1.bf16.msra.mxu0 %v4805
    %5397 = vmatprep.subr.bf16.mxu0 0
    %5398 = vmatpush1.bf16.msra.mxu0 %v4810
    %5399 = vmatprep.subr.bf16.mxu0 0
    %5400 = vmatpush1.bf16.msra.mxu0 %v4815
    %5401 = vmatprep.subr.bf16.mxu0 0
    %5402 = vmatpush1.bf16.msra.mxu0 %v4820
    %5403 = vmatprep.subr.bf16.mxu0 0
    %5404 = vmatpush1.bf16.msra.mxu0 %v4825
    %5405 = vmatprep.subr.bf16.mxu0 0
    %5406 = vmatpush1.bf16.msra.mxu0 %v4830
    %5407 = vmatprep.subr.bf16.mxu0 0
    %5408 = vmatpush1.bf16.msra.mxu0 %v4835
    %5409 = vmatprep.subr.bf16.mxu0 0
    %5410 = vmatpush1.bf16.msra.mxu0 %v4840
    %5411 = vmatprep.subr.bf16.mxu0 0
    %5412 = vmatpush1.bf16.msra.mxu0 %v4845
    %5413 = vmatprep.subr.bf16.mxu0 0
    %5414 = vmatpush1.bf16.msra.mxu0 %v4850
    %5415 = vmatprep.subr.bf16.mxu0 0
    %5416 = vmatpush1.bf16.msra.mxu0 %v4855
    %5417 = vmatprep.subr.bf16.mxu0 0
    %5418 = vmatpush1.bf16.msra.mxu0 %v4860
    %5419 = vmatprep.mubr.bf16.mxu0 %v3792
    %5420 = vmatmul.mubr.bf16.gmra.mrb[0].mxu0 %v3791
    %v5421 = vpop.f32.mrb[0].mxu0
    %v5422 = vadd.f32 %v5382, %v5421
    %v5423 = vpop.f32.mrb[0].mxu0
    %v5424 = vpop.f32.mrb[0].mxu0
    %v5425 = vpop.f32.mrb[0].mxu0
    %5426 = vdwg.mxu0
    %5427 = vmatprep.subr.bf16.mxu0 0
    %5428 = vmatpush1.bf16.msra.mxu0 %v4865
    %5429 = vmatprep.subr.bf16.mxu0 0
    %5430 = vmatpush1.bf16.msra.mxu0 %v4870
    %5431 = vmatprep.subr.bf16.mxu0 0
    %5432 = vmatpush1.bf16.msra.mxu0 %v4875
    %5433 = vmatprep.subr.bf16.mxu0 0
    %5434 = vmatpush1.bf16.msra.mxu0 %v4880
    %5435 = vmatprep.subr.bf16.mxu0 0
    %5436 = vmatpush1.bf16.msra.mxu0 %v4885
    %5437 = vmatprep.subr.bf16.mxu0 0
    %5438 = vmatpush1.bf16.msra.mxu0 %v4890
    %5439 = vmatprep.subr.bf16.mxu0 0
    %5440 = vmatpush1.bf16.msra.mxu0 %v4895
    %5441 = vmatprep.subr.bf16.mxu0 0
    %5442 = vmatpush1.bf16.msra.mxu0 %v4900
    %5443 = vmatprep.subr.bf16.mxu0 0
    %5444 = vmatpush1.bf16.msra.mxu0 0
    %5445 = vmatprep.subr.bf16.mxu0 0
    %5446 = vmatpush1.bf16.msra.mxu0 0
    %5447 = vmatprep.subr.bf16.mxu0 0
    %5448 = vmatpush1.bf16.msra.mxu0 0
    %5449 = vmatprep.subr.bf16.mxu0 0
    %5450 = vmatpush1.bf16.msra.mxu0 0
    %5451 = vmatprep.subr.bf16.mxu0 0
    %5452 = vmatpush1.bf16.msra.mxu0 0
    %5453 = vmatprep.subr.bf16.mxu0 0
    %5454 = vmatpush1.bf16.msra.mxu0 0
    %5455 = vmatprep.subr.bf16.mxu0 0
    %5456 = vmatpush1.bf16.msra.mxu0 0
    %5457 = vmatprep.subr.bf16.mxu0 0
    %5458 = vmatpush1.bf16.msra.mxu0 0
    %5459 = vmatprep.mubr.bf16.mxu0 0
    %5460 = vmatmul.mubr.bf16.gmra.mrb[0].mxu0 %v3793
    %v5461 = vpop.f32.mrb[0].mxu0
    %v5462 = vadd.f32 %v5422, %v5461
    %v5463 = vpop.f32.mrb[0].mxu0
    %v5464 = vpop.f32.mrb[0].mxu0
    %v5465 = vpop.f32.mrb[0].mxu0
    %5466 = vdwg.mxu0
    %v5467 = vmul.f32 %v5218, 0.5
    %v5468 = vmul.f32 %v5220, 0.5
    %v5469 = vmul.f32 %v5341, 0.5
    %v5470 = vmul.f32 %v5343, 0.5
    %v5471 = vmul.f32 %v5462, 0.5
    %v5472 = vmul.f32 %v5218, 0.70710677
    %v5473 = vmul.f32 %v5220, 0.70710677
    %v5474 = vmul.f32 %v5341, 0.70710677
    %v5475 = vmul.f32 %v5343, 0.70710677
    %v5476 = vmul.f32 %v5462, 0.70710677
    %v5477 = verf.f32.pop %v5472
    %v5478 = verf.f32.pop %v5473
    %v5479 = verf.f32.pop %v5474
    %v5480 = verf.f32.pop %v5475
    %v5481 = verf.f32.pop %v5476
    %v5482 = vadd.f32 %v5477, 1.0
    %v5483 = vadd.f32 %v5478, 1.0
    %v5484 = vadd.f32 %v5479, 1.0
    %v5485 = vadd.f32 %v5480, 1.0
    %v5486 = vadd.f32 %v5481, 1.0
    %v5487 = vmul.f32 %v5467, %v5482
    %v5488 = vmul.f32 %v5468, %v5483
    %v5489 = vmul.f32 %v5469, %v5484
    %v5490 = vmul.f32 %v5470, %v5485
    %v5491 = vmul.f32 %v5471, %v5486
    %v5492 = vpack.c.bf16 %v5487, %v5487
    %v5493 = vpack.c.bf16 %v5488, %v5488
    %v5494 = vpack.c.bf16 %v5489, %v5489
    %v5495 = vpack.c.bf16 %v5490, %v5490
    %v5496 = vpack.c.bf16 %v5491, %v5491
    %v5497 = vld [vmem:[#allocation10] sm:$0xff]
    %v5498 = vld [vmem:[#allocation10 + $0x8] sm:$0xf]
    %v5499 = vld [vmem:[#allocation10 + $0xc] sm:$0xff]
    %v5500 = vld [vmem:[#allocation10 + $0x14] sm:$0xf]
    %v5501 = vld [vmem:[#allocation10 + $0x18] sm:$0xff]
    %v5502 = vld [vmem:[#allocation10 + $0x20] sm:$0xf]
    %v5503 = vld [vmem:[#allocation10 + $0x24] sm:$0xff]
    %v5504 = vld [vmem:[#allocation10 + $0x2c] sm:$0xf]
    %v5505 = vld [vmem:[#allocation10 + $0x30] sm:$0xff]
    %v5506 = vld [vmem:[#allocation10 + $0x38] sm:$0xf]
    %v5507 = vld [vmem:[#allocation10 + $0x3c] sm:$0xff]
    %v5508 = vld [vmem:[#allocation10 + $0x44] sm:$0xf]
    %v5509 = vld [vmem:[#allocation10 + $0x48] sm:$0xff]
    %v5510 = vld [vmem:[#allocation10 + $0x50] sm:$0xf]
    %v5511 = vld [vmem:[#allocation10 + $0x54] sm:$0xff]
    %v5512 = vld [vmem:[#allocation10 + $0x5c] sm:$0xf]
    %v5513 = vld [vmem:[#allocation10 + $0x60] sm:$0xff]
    %v5514 = vld [vmem:[#allocation10 + $0x68] sm:$0xf]
    %v5515 = vld [vmem:[#allocation10 + $0x6c] sm:$0xff]
    %v5516 = vld [vmem:[#allocation10 + $0x74] sm:$0xf]
    %v5517 = vld [vmem:[#allocation10 + $0x78] sm:$0xff]
    %v5518 = vld [vmem:[#allocation10 + $0x80] sm:$0xf]
    %v5519 = vld [vmem:[#allocation10 + $0x84] sm:$0xff]
    %v5520 = vld [vmem:[#allocation10 + $0x8c] sm:$0xf]
    %v5521 = vld [vmem:[#allocation10 + $0x90] sm:$0xff]
    %v5522 = vld [vmem:[#allocation10 + $0x98] sm:$0xf]
    %v5523 = vld [vmem:[#allocation10 + $0x9c] sm:$0xff]
    %v5524 = vld [vmem:[#allocation10 + $0xa4] sm:$0xf]
    %v5525 = vld [vmem:[#allocation10 + $0xa8] sm:$0xff]
    %v5526 = vld [vmem:[#allocation10 + $0xb0] sm:$0xf]
    %v5527 = vld [vmem:[#allocation10 + $0xb4] sm:$0xff]
    %v5528 = vld [vmem:[#allocation10 + $0xbc] sm:$0xf]
    %v5529 = vld [vmem:[#allocation10 + $0xc0] sm:$0xff]
    %v5530 = vld [vmem:[#allocation10 + $0xc8] sm:$0xf]
    %v5531 = vld [vmem:[#allocation10 + $0xcc] sm:$0xff]
    %v5532 = vld [vmem:[#allocation10 + $0xd4] sm:$0xf]
    %v5533 = vld [vmem:[#allocation10 + $0xd8] sm:$0xff]
    %v5534 = vld [vmem:[#allocation10 + $0xe0] sm:$0xf]
    %v5535 = vld [vmem:[#allocation10 + $0xe4] sm:$0xff]
    %v5536 = vld [vmem:[#allocation10 + $0xec] sm:$0xf]
    %v5537 = vld [vmem:[#allocation10 + $0xf0] sm:$0xff]
    %v5538 = vld [vmem:[#allocation10 + $0xf8] sm:$0xf]
    %v5539 = vld [vmem:[#allocation10 + $0xfc] sm:$0xff]
    %v5540 = vld [vmem:[#allocation10 + $0x104] sm:$0xf]
    %v5541 = vld [vmem:[#allocation10 + $0x108] sm:$0xff]
    %v5542 = vld [vmem:[#allocation10 + $0x110] sm:$0xf]
    %v5543 = vld [vmem:[#allocation10 + $0x114] sm:$0xff]
    %v5544 = vld [vmem:[#allocation10 + $0x11c] sm:$0xf]
    %v5545 = vld [vmem:[#allocation10 + $0x120] sm:$0xff]
    %v5546 = vld [vmem:[#allocation10 + $0x128] sm:$0xf]
    %v5547 = vld [vmem:[#allocation10 + $0x12c] sm:$0xff]
    %v5548 = vld [vmem:[#allocation10 + $0x134] sm:$0xf]
    %v5549 = vld [vmem:[#allocation10 + $0x138] sm:$0xff]
    %v5550 = vld [vmem:[#allocation10 + $0x140] sm:$0xf]
    %v5551 = vld [vmem:[#allocation10 + $0x144] sm:$0xff]
    %v5552 = vld [vmem:[#allocation10 + $0x14c] sm:$0xf]
    %v5553 = vld [vmem:[#allocation10 + $0x150] sm:$0xff]
    %v5554 = vld [vmem:[#allocation10 + $0x158] sm:$0xf]
    %v5555 = vld [vmem:[#allocation10 + $0x15c] sm:$0xff]
    %v5556 = vld [vmem:[#allocation10 + $0x164] sm:$0xf]
    %v5557 = vld [vmem:[#allocation10 + $0x168] sm:$0xff]
    %v5558 = vld [vmem:[#allocation10 + $0x170] sm:$0xf]
    %v5559 = vld [vmem:[#allocation10 + $0x174] sm:$0xff]
    %v5560 = vld [vmem:[#allocation10 + $0x17c] sm:$0xf]
    %v5561 = vld [vmem:[#allocation10 + $0x180] sm:$0xff]
    %v5562 = vld [vmem:[#allocation10 + $0x188] sm:$0xf]
    %v5563 = vld [vmem:[#allocation10 + $0x18c] sm:$0xff]
    %v5564 = vld [vmem:[#allocation10 + $0x194] sm:$0xf]
    %v5565 = vld [vmem:[#allocation10 + $0x198] sm:$0xff]
    %v5566 = vld [vmem:[#allocation10 + $0x1a0] sm:$0xf]
    %v5567 = vld [vmem:[#allocation10 + $0x1a4] sm:$0xff]
    %v5568 = vld [vmem:[#allocation10 + $0x1ac] sm:$0xf]
    %v5569 = vld [vmem:[#allocation10 + $0x1b0] sm:$0xff]
    %v5570 = vld [vmem:[#allocation10 + $0x1b8] sm:$0xf]
    %v5571 = vld [vmem:[#allocation10 + $0x1bc] sm:$0xff]
    %v5572 = vld [vmem:[#allocation10 + $0x1c4] sm:$0xf]
    %v5573 = vld [vmem:[#allocation10 + $0x1c8] sm:$0xff]
    %v5574 = vld [vmem:[#allocation10 + $0x1d0] sm:$0xf]
    %v5575 = vld [vmem:[#allocation10 + $0x1d4] sm:$0xff]
    %v5576 = vld [vmem:[#allocation10 + $0x1dc] sm:$0xf]
    %v5577 = vld [vmem:[#allocation10 + $0x1e0] sm:$0xff]
    %v5578 = vld [vmem:[#allocation10 + $0x1e8] sm:$0xf]
    %v5579 = vld [vmem:[#allocation10 + $0x1ec] sm:$0xff]
    %v5580 = vld [vmem:[#allocation10 + $0x1f4] sm:$0xf]
    %v5581 = vld [vmem:[#allocation10 + $0x1f8] sm:$0xff]
    %v5582 = vld [vmem:[#allocation10 + $0x200] sm:$0xf]
    %v5583 = vld [vmem:[#allocation10 + $0x204] sm:$0xff]
    %v5584 = vld [vmem:[#allocation10 + $0x20c] sm:$0xf]
    %v5585 = vld [vmem:[#allocation10 + $0x210] sm:$0xff]
    %v5586 = vld [vmem:[#allocation10 + $0x218] sm:$0xf]
    %v5587 = vld [vmem:[#allocation10 + $0x21c] sm:$0xff]
    %v5588 = vld [vmem:[#allocation10 + $0x224] sm:$0xf]
    %v5589 = vld [vmem:[#allocation10 + $0x228] sm:$0xff]
    %v5590 = vld [vmem:[#allocation10 + $0x230] sm:$0xf]
    %v5591 = vld [vmem:[#allocation10 + $0x234] sm:$0xff]
    %v5592 = vld [vmem:[#allocation10 + $0x23c] sm:$0xf]
    %v5593 = vld [vmem:[#allocation10 + $0x240] sm:$0xff]
    %v5594 = vld [vmem:[#allocation10 + $0x248] sm:$0xf]
    %v5595 = vld [vmem:[#allocation10 + $0x24c] sm:$0xff]
    %v5596 = vld [vmem:[#allocation10 + $0x254] sm:$0xf]
    %v5597 = vld [vmem:[#allocation10 + $0x258] sm:$0xff]
    %v5598 = vld [vmem:[#allocation10 + $0x260] sm:$0xf]
    %v5599 = vld [vmem:[#allocation10 + $0x264] sm:$0xff]
    %v5600 = vld [vmem:[#allocation10 + $0x26c] sm:$0xf]
    %v5601 = vld [vmem:[#allocation10 + $0x270] sm:$0xff]
    %v5602 = vld [vmem:[#allocation10 + $0x278] sm:$0xf]
    %v5603 = vld [vmem:[#allocation10 + $0x27c] sm:$0xff]
    %v5604 = vld [vmem:[#allocation10 + $0x284] sm:$0xf]
    %v5605 = vld [vmem:[#allocation10 + $0x288] sm:$0xff]
    %v5606 = vld [vmem:[#allocation10 + $0x290] sm:$0xf]
    %v5607 = vld [vmem:[#allocation10 + $0x294] sm:$0xff]
    %v5608 = vld [vmem:[#allocation10 + $0x29c] sm:$0xf]
    %v5609 = vld [vmem:[#allocation10 + $0x2a0] sm:$0xff]
    %v5610 = vld [vmem:[#allocation10 + $0x2a8] sm:$0xf]
    %v5611 = vld [vmem:[#allocation10 + $0x2ac] sm:$0xff]
    %v5612 = vld [vmem:[#allocation10 + $0x2b4] sm:$0xf]
    %v5613 = vld [vmem:[#allocation10 + $0x2b8] sm:$0xff]
    %v5614 = vld [vmem:[#allocation10 + $0x2c0] sm:$0xf]
    %v5615 = vld [vmem:[#allocation10 + $0x2c4] sm:$0xff]
    %v5616 = vld [vmem:[#allocation10 + $0x2cc] sm:$0xf]
    %v5617 = vld [vmem:[#allocation10 + $0x2d0] sm:$0xff]
    %v5618 = vld [vmem:[#allocation10 + $0x2d8] sm:$0xf]
    %v5619 = vld [vmem:[#allocation10 + $0x2dc] sm:$0xff]
    %v5620 = vld [vmem:[#allocation10 + $0x2e4] sm:$0xf]
    %v5621 = vld [vmem:[#allocation10 + $0x2e8] sm:$0xff]
    %v5622 = vld [vmem:[#allocation10 + $0x2f0] sm:$0xf]
    %v5623 = vld [vmem:[#allocation10 + $0x2f4] sm:$0xff]
    %v5624 = vld [vmem:[#allocation10 + $0x2fc] sm:$0xf]
    %v5625 = vld [vmem:[#allocation10 + $0x300] sm:$0xff]
    %v5626 = vld [vmem:[#allocation10 + $0x308] sm:$0xf]
    %v5627 = vld [vmem:[#allocation10 + $0x30c] sm:$0xff]
    %v5628 = vld [vmem:[#allocation10 + $0x314] sm:$0xf]
    %v5629 = vld [vmem:[#allocation10 + $0x318] sm:$0xff]
    %v5630 = vld [vmem:[#allocation10 + $0x320] sm:$0xf]
    %v5631 = vld [vmem:[#allocation10 + $0x324] sm:$0xff]
    %v5632 = vld [vmem:[#allocation10 + $0x32c] sm:$0xf]
    %v5633 = vld [vmem:[#allocation10 + $0x330] sm:$0xff]
    %v5634 = vld [vmem:[#allocation10 + $0x338] sm:$0xf]
    %v5635 = vld [vmem:[#allocation10 + $0x33c] sm:$0xff]
    %v5636 = vld [vmem:[#allocation10 + $0x344] sm:$0xf]
    %v5637 = vld [vmem:[#allocation10 + $0x348] sm:$0xff]
    %v5638 = vld [vmem:[#allocation10 + $0x350] sm:$0xf]
    %v5639 = vld [vmem:[#allocation10 + $0x354] sm:$0xff]
    %v5640 = vld [vmem:[#allocation10 + $0x35c] sm:$0xf]
    %v5641 = vld [vmem:[#allocation10 + $0x360] sm:$0xff]
    %v5642 = vld [vmem:[#allocation10 + $0x368] sm:$0xf]
    %v5643 = vld [vmem:[#allocation10 + $0x36c] sm:$0xff]
    %v5644 = vld [vmem:[#allocation10 + $0x374] sm:$0xf]
    %v5645 = vld [vmem:[#allocation10 + $0x378] sm:$0xff]
    %v5646 = vld [vmem:[#allocation10 + $0x380] sm:$0xf]
    %v5647 = vld [vmem:[#allocation10 + $0x384] sm:$0xff]
    %v5648 = vld [vmem:[#allocation10 + $0x38c] sm:$0xf]
    %v5649 = vld [vmem:[#allocation10 + $0x390] sm:$0xff]
    %v5650 = vld [vmem:[#allocation10 + $0x398] sm:$0xf]
    %v5651 = vld [vmem:[#allocation10 + $0x39c] sm:$0xff]
    %v5652 = vld [vmem:[#allocation10 + $0x3a4] sm:$0xf]
    %v5653 = vld [vmem:[#allocation10 + $0x3a8] sm:$0xff]
    %v5654 = vld [vmem:[#allocation10 + $0x3b0] sm:$0xf]
    %v5655 = vld [vmem:[#allocation10 + $0x3b4] sm:$0xff]
    %v5656 = vld [vmem:[#allocation10 + $0x3bc] sm:$0xf]
    %v5657 = vld [vmem:[%s8] sm:$0x7]
    %v5659 = vlaneseq
    %v5660 = vshrl.u32 %v5659, 7
    %v5661 = vsub.s32 0, %v5660
    %v5662 = vrot.slane %v5657, %v5661
    %v5663 = vlaneseq
    %v5664 = vshrl.u32 %v5663, 7
    %v5665 = vsub.s32 1, %v5664
    %v5666 = vrot.slane %v5657, %v5665
    %v5667 = vlaneseq
    %v5668 = vshrl.u32 %v5667, 7
    %v5669 = vsub.s32 2, %v5668
    %v5670 = vrot.slane %v5657, %v5669
    %v5834 = vunpack.c.l.b16 %v5497
    %v5835 = vunpack.c.h.b16 %v5497
    %v5836 = vunpack.c.l.b16 %v5498
    %v5837 = vunpack.c.l.b16 %v5499
    %v5838 = vunpack.c.h.b16 %v5499
    %v5839 = vunpack.c.l.b16 %v5500
    %v5840 = vunpack.c.l.b16 %v5501
    %v5841 = vunpack.c.h.b16 %v5501
    %v5842 = vunpack.c.l.b16 %v5502
    %v5843 = vunpack.c.l.b16 %v5503
    %v5844 = vunpack.c.h.b16 %v5503
    %v5845 = vunpack.c.l.b16 %v5504
    %v5846 = vunpack.c.l.b16 %v5505
    %v5847 = vunpack.c.h.b16 %v5505
    %v5848 = vunpack.c.l.b16 %v5506
    %v5849 = vunpack.c.l.b16 %v5507
    %v5850 = vunpack.c.h.b16 %v5507
    %v5851 = vunpack.c.l.b16 %v5508
    %v5852 = vunpack.c.l.b16 %v5509
    %v5853 = vunpack.c.h.b16 %v5509
    %v5854 = vunpack.c.l.b16 %v5510
    %v5855 = vunpack.c.l.b16 %v5511
    %v5856 = vunpack.c.h.b16 %v5511
    %v5857 = vunpack.c.l.b16 %v5512
    %v5858 = vunpack.c.l.b16 %v5513
    %v5859 = vunpack.c.h.b16 %v5513
    %v5860 = vunpack.c.l.b16 %v5514
    %v5861 = vunpack.c.l.b16 %v5515
    %v5862 = vunpack.c.h.b16 %v5515
    %v5863 = vunpack.c.l.b16 %v5516
    %v5864 = vunpack.c.l.b16 %v5517
    %v5865 = vunpack.c.h.b16 %v5517
    %v5866 = vunpack.c.l.b16 %v5518
    %v5867 = vunpack.c.l.b16 %v5519
    %v5868 = vunpack.c.h.b16 %v5519
    %v5869 = vunpack.c.l.b16 %v5520
    %v5870 = vunpack.c.l.b16 %v5521
    %v5871 = vunpack.c.h.b16 %v5521
    %v5872 = vunpack.c.l.b16 %v5522
    %v5873 = vunpack.c.l.b16 %v5523
    %v5874 = vunpack.c.h.b16 %v5523
    %v5875 = vunpack.c.l.b16 %v5524
    %v5876 = vunpack.c.l.b16 %v5525
    %v5877 = vunpack.c.h.b16 %v5525
    %v5878 = vunpack.c.l.b16 %v5526
    %v5879 = vunpack.c.l.b16 %v5527
    %v5880 = vunpack.c.h.b16 %v5527
    %v5881 = vunpack.c.l.b16 %v5528
    %v5882 = vunpack.c.l.b16 %v5529
    %v5883 = vunpack.c.h.b16 %v5529
    %v5884 = vunpack.c.l.b16 %v5530
    %v5885 = vunpack.c.l.b16 %v5531
    %v5886 = vunpack.c.h.b16 %v5531
    %v5887 = vunpack.c.l.b16 %v5532
    %v5888 = vunpack.c.l.b16 %v5533
    %v5889 = vunpack.c.h.b16 %v5533
    %v5890 = vunpack.c.l.b16 %v5534
    %v5891 = vunpack.c.l.b16 %v5535
    %v5892 = vunpack.c.h.b16 %v5535
    %v5893 = vunpack.c.l.b16 %v5536
    %v5894 = vunpack.c.l.b16 %v5537
    %v5895 = vunpack.c.h.b16 %v5537
    %v5896 = vunpack.c.l.b16 %v5538
    %v5897 = vunpack.c.l.b16 %v5539
    %v5898 = vunpack.c.h.b16 %v5539
    %v5899 = vunpack.c.l.b16 %v5540
    %v5900 = vunpack.c.l.b16 %v5541
    %v5901 = vunpack.c.h.b16 %v5541
    %v5902 = vunpack.c.l.b16 %v5542
    %v5903 = vunpack.c.l.b16 %v5543
    %v5904 = vunpack.c.h.b16 %v5543
    %v5905 = vunpack.c.l.b16 %v5544
    %v5906 = vunpack.c.l.b16 %v5545
    %v5907 = vunpack.c.h.b16 %v5545
    %v5908 = vunpack.c.l.b16 %v5546
    %v5909 = vunpack.c.l.b16 %v5547
    %v5910 = vunpack.c.h.b16 %v5547
    %v5911 = vunpack.c.l.b16 %v5548
    %v5912 = vunpack.c.l.b16 %v5549
    %v5913 = vunpack.c.h.b16 %v5549
    %v5914 = vunpack.c.l.b16 %v5550
    %v5915 = vunpack.c.l.b16 %v5551
    %v5916 = vunpack.c.h.b16 %v5551
    %v5917 = vunpack.c.l.b16 %v5552
    %v5918 = vunpack.c.l.b16 %v5553
    %v5919 = vunpack.c.h.b16 %v5553
    %v5920 = vunpack.c.l.b16 %v5554
    %v5921 = vunpack.c.l.b16 %v5555
    %v5922 = vunpack.c.h.b16 %v5555
    %v5923 = vunpack.c.l.b16 %v5556
    %v5924 = vunpack.c.l.b16 %v5557
    %v5925 = vunpack.c.h.b16 %v5557
    %v5926 = vunpack.c.l.b16 %v5558
    %v5927 = vunpack.c.l.b16 %v5559
    %v5928 = vunpack.c.h.b16 %v5559
    %v5929 = vunpack.c.l.b16 %v5560
    %v5930 = vunpack.c.l.b16 %v5561
    %v5931 = vunpack.c.h.b16 %v5561
    %v5932 = vunpack.c.l.b16 %v5562
    %v5933 = vunpack.c.l.b16 %v5563
    %v5934 = vunpack.c.h.b16 %v5563
    %v5935 = vunpack.c.l.b16 %v5564
    %v5936 = vunpack.c.l.b16 %v5565
    %v5937 = vunpack.c.h.b16 %v5565
    %v5938 = vunpack.c.l.b16 %v5566
    %v5939 = vunpack.c.l.b16 %v5567
    %v5940 = vunpack.c.h.b16 %v5567
    %v5941 = vunpack.c.l.b16 %v5568
    %v5942 = vunpack.c.l.b16 %v5569
    %v5943 = vunpack.c.h.b16 %v5569
    %v5944 = vunpack.c.l.b16 %v5570
    %v5945 = vunpack.c.l.b16 %v5571
    %v5946 = vunpack.c.h.b16 %v5571
    %v5947 = vunpack.c.l.b16 %v5572
    %v5948 = vunpack.c.l.b16 %v5573
    %v5949 = vunpack.c.h.b16 %v5573
    %v5950 = vunpack.c.l.b16 %v5574
    %v5951 = vunpack.c.l.b16 %v5575
    %v5952 = vunpack.c.h.b16 %v5575
    %v5953 = vunpack.c.l.b16 %v5576
    %v5954 = vunpack.c.l.b16 %v5577
    %v5955 = vunpack.c.h.b16 %v5577
    %v5956 = vunpack.c.l.b16 %v5578
    %v5957 = vunpack.c.l.b16 %v5579
    %v5958 = vunpack.c.h.b16 %v5579
    %v5959 = vunpack.c.l.b16 %v5580
    %v5960 = vunpack.c.l.b16 %v5581
    %v5961 = vunpack.c.h.b16 %v5581
    %v5962 = vunpack.c.l.b16 %v5582
    %v5963 = vunpack.c.l.b16 %v5583
    %v5964 = vunpack.c.h.b16 %v5583
    %v5965 = vunpack.c.l.b16 %v5584
    %v5966 = vunpack.c.l.b16 %v5585
    %v5967 = vunpack.c.h.b16 %v5585
    %v5968 = vunpack.c.l.b16 %v5586
    %v5969 = vunpack.c.l.b16 %v5587
    %v5970 = vunpack.c.h.b16 %v5587
    %v5971 = vunpack.c.l.b16 %v5588
    %v5972 = vunpack.c.l.b16 %v5589
    %v5973 = vunpack.c.h.b16 %v5589
    %v5974 = vunpack.c.l.b16 %v5590
    %v5975 = vunpack.c.l.b16 %v5591
    %v5976 = vunpack.c.h.b16 %v5591
    %v5977 = vunpack.c.l.b16 %v5592
    %v5978 = vunpack.c.l.b16 %v5593
    %v5979 = vunpack.c.h.b16 %v5593
    %v5980 = vunpack.c.l.b16 %v5594
    %v5981 = vunpack.c.l.b16 %v5595
    %v5982 = vunpack.c.h.b16 %v5595
    %v5983 = vunpack.c.l.b16 %v5596
    %v5984 = vunpack.c.l.b16 %v5597
    %v5985 = vunpack.c.h.b16 %v5597
    %v5986 = vunpack.c.l.b16 %v5598
    %v5987 = vunpack.c.l.b16 %v5599
    %v5988 = vunpack.c.h.b16 %v5599
    %v5989 = vunpack.c.l.b16 %v5600
    %v5990 = vunpack.c.l.b16 %v5601
    %v5991 = vunpack.c.h.b16 %v5601
    %v5992 = vunpack.c.l.b16 %v5602
    %v5993 = vunpack.c.l.b16 %v5603
    %v5994 = vunpack.c.h.b16 %v5603
    %v5995 = vunpack.c.l.b16 %v5604
    %v5996 = vunpack.c.l.b16 %v5605
    %v5997 = vunpack.c.h.b16 %v5605
    %v5998 = vunpack.c.l.b16 %v5606
    %v5999 = vunpack.c.l.b16 %v5607
    %v6000 = vunpack.c.h.b16 %v5607
    %v6001 = vunpack.c.l.b16 %v5608
    %v6002 = vunpack.c.l.b16 %v5609
    %v6003 = vunpack.c.h.b16 %v5609
    %v6004 = vunpack.c.l.b16 %v5610
    %v6005 = vunpack.c.l.b16 %v5611
    %v6006 = vunpack.c.h.b16 %v5611
    %v6007 = vunpack.c.l.b16 %v5612
    %v6008 = vunpack.c.l.b16 %v5613
    %v6009 = vunpack.c.h.b16 %v5613
    %v6010 = vunpack.c.l.b16 %v5614
    %v6011 = vunpack.c.l.b16 %v5615
    %v6012 = vunpack.c.h.b16 %v5615
    %v6013 = vunpack.c.l.b16 %v5616
    %v6014 = vunpack.c.l.b16 %v5617
    %v6015 = vunpack.c.h.b16 %v5617
    %v6016 = vunpack.c.l.b16 %v5618
    %v6017 = vunpack.c.l.b16 %v5619
    %v6018 = vunpack.c.h.b16 %v5619
    %v6019 = vunpack.c.l.b16 %v5620
    %v6020 = vunpack.c.l.b16 %v5621
    %v6021 = vunpack.c.h.b16 %v5621
    %v6022 = vunpack.c.l.b16 %v5622
    %v6023 = vunpack.c.l.b16 %v5623
    %v6024 = vunpack.c.h.b16 %v5623
    %v6025 = vunpack.c.l.b16 %v5624
    %v6026 = vunpack.c.l.b16 %v5625
    %v6027 = vunpack.c.h.b16 %v5625
    %v6028 = vunpack.c.l.b16 %v5626
    %v6029 = vunpack.c.l.b16 %v5627
    %v6030 = vunpack.c.h.b16 %v5627
    %v6031 = vunpack.c.l.b16 %v5628
    %v6032 = vunpack.c.l.b16 %v5629
    %v6033 = vunpack.c.h.b16 %v5629
    %v6034 = vunpack.c.l.b16 %v5630
    %v6035 = vunpack.c.l.b16 %v5631
    %v6036 = vunpack.c.h.b16 %v5631
    %v6037 = vunpack.c.l.b16 %v5632
    %v6038 = vunpack.c.l.b16 %v5633
    %v6039 = vunpack.c.h.b16 %v5633
    %v6040 = vunpack.c.l.b16 %v5634
    %v6041 = vunpack.c.l.b16 %v5635
    %v6042 = vunpack.c.h.b16 %v5635
    %v6043 = vunpack.c.l.b16 %v5636
    %v6044 = vunpack.c.l.b16 %v5637
    %v6045 = vunpack.c.h.b16 %v5637
    %v6046 = vunpack.c.l.b16 %v5638
    %v6047 = vunpack.c.l.b16 %v5639
    %v6048 = vunpack.c.h.b16 %v5639
    %v6049 = vunpack.c.l.b16 %v5640
    %v6050 = vunpack.c.l.b16 %v5641
    %v6051 = vunpack.c.h.b16 %v5641
    %v6052 = vunpack.c.l.b16 %v5642
    %v6053 = vunpack.c.l.b16 %v5643
    %v6054 = vunpack.c.h.b16 %v5643
    %v6055 = vunpack.c.l.b16 %v5644
    %v6056 = vunpack.c.l.b16 %v5645
    %v6057 = vunpack.c.h.b16 %v5645
    %v6058 = vunpack.c.l.b16 %v5646
    %v6059 = vunpack.c.l.b16 %v5647
    %v6060 = vunpack.c.h.b16 %v5647
    %v6061 = vunpack.c.l.b16 %v5648
    %v6062 = vunpack.c.l.b16 %v5649
    %v6063 = vunpack.c.h.b16 %v5649
    %v6064 = vunpack.c.l.b16 %v5650
    %v6065 = vunpack.c.l.b16 %v5651
    %v6066 = vunpack.c.h.b16 %v5651
    %v6067 = vunpack.c.l.b16 %v5652
    %v6068 = vunpack.c.l.b16 %v5653
    %v6069 = vunpack.c.h.b16 %v5653
    %v6070 = vunpack.c.l.b16 %v5654
    %v6071 = vunpack.c.l.b16 %v5655
    %v6072 = vunpack.c.h.b16 %v5655
    %v6073 = vunpack.c.l.b16 %v5656
    %v6074 = vpack.c.b16 %v5837, %v5834
    %v6075 = vpack.c.b16 %v5838, %v5835
    %v6076 = vpack.c.b16 %v5839, %v5836
    %v6077 = vpack.c.b16 %v5843, %v5840
    %v6078 = vpack.c.b16 %v5844, %v5841
    %v6079 = vpack.c.b16 %v5845, %v5842
    %v6080 = vpack.c.b16 %v5849, %v5846
    %v6081 = vpack.c.b16 %v5850, %v5847
    %v6082 = vpack.c.b16 %v5851, %v5848
    %v6083 = vpack.c.b16 %v5855, %v5852
    %v6084 = vpack.c.b16 %v5856, %v5853
    %v6085 = vpack.c.b16 %v5857, %v5854
    %v6086 = vpack.c.b16 %v5861, %v5858
    %v6087 = vpack.c.b16 %v5862, %v5859
    %v6088 = vpack.c.b16 %v5863, %v5860
    %v6089 = vpack.c.b16 %v5867, %v5864
    %v6090 = vpack.c.b16 %v5868, %v5865
    %v6091 = vpack.c.b16 %v5869, %v5866
    %v6092 = vpack.c.b16 %v5873, %v5870
    %v6093 = vpack.c.b16 %v5874, %v5871
    %v6094 = vpack.c.b16 %v5875, %v5872
    %v6095 = vpack.c.b16 %v5879, %v5876
    %v6096 = vpack.c.b16 %v5880, %v5877
    %v6097 = vpack.c.b16 %v5881, %v5878
    %v6098 = vpack.c.b16 %v5885, %v5882
    %v6099 = vpack.c.b16 %v5886, %v5883
    %v6100 = vpack.c.b16 %v5887, %v5884
    %v6101 = vpack.c.b16 %v5891, %v5888
    %v6102 = vpack.c.b16 %v5892, %v5889
    %v6103 = vpack.c.b16 %v5893, %v5890
    %v6104 = vpack.c.b16 %v5897, %v5894
    %v6105 = vpack.c.b16 %v5898, %v5895
    %v6106 = vpack.c.b16 %v5899, %v5896
    %v6107 = vpack.c.b16 %v5903, %v5900
    %v6108 = vpack.c.b16 %v5904, %v5901
    %v6109 = vpack.c.b16 %v5905, %v5902
    %v6110 = vpack.c.b16 %v5909, %v5906
    %v6111 = vpack.c.b16 %v5910, %v5907
    %v6112 = vpack.c.b16 %v5911, %v5908
    %v6113 = vpack.c.b16 %v5915, %v5912
    %v6114 = vpack.c.b16 %v5916, %v5913
    %v6115 = vpack.c.b16 %v5917, %v5914
    %v6116 = vpack.c.b16 %v5921, %v5918
    %v6117 = vpack.c.b16 %v5922, %v5919
    %v6118 = vpack.c.b16 %v5923, %v5920
    %v6119 = vpack.c.b16 %v5927, %v5924
    %v6120 = vpack.c.b16 %v5928, %v5925
    %v6121 = vpack.c.b16 %v5929, %v5926
    %v6122 = vpack.c.b16 %v5933, %v5930
    %v6123 = vpack.c.b16 %v5934, %v5931
    %v6124 = vpack.c.b16 %v5935, %v5932
    %v6125 = vpack.c.b16 %v5939, %v5936
    %v6126 = vpack.c.b16 %v5940, %v5937
    %v6127 = vpack.c.b16 %v5941, %v5938
    %v6128 = vpack.c.b16 %v5945, %v5942
    %v6129 = vpack.c.b16 %v5946, %v5943
    %v6130 = vpack.c.b16 %v5947, %v5944
    %v6131 = vpack.c.b16 %v5951, %v5948
    %v6132 = vpack.c.b16 %v5952, %v5949
    %v6133 = vpack.c.b16 %v5953, %v5950
    %v6134 = vpack.c.b16 %v5957, %v5954
    %v6135 = vpack.c.b16 %v5958, %v5955
    %v6136 = vpack.c.b16 %v5959, %v5956
    %v6137 = vpack.c.b16 %v5963, %v5960
    %v6138 = vpack.c.b16 %v5964, %v5961
    %v6139 = vpack.c.b16 %v5965, %v5962
    %v6140 = vpack.c.b16 %v5969, %v5966
    %v6141 = vpack.c.b16 %v5970, %v5967
    %v6142 = vpack.c.b16 %v5971, %v5968
    %v6143 = vpack.c.b16 %v5975, %v5972
    %v6144 = vpack.c.b16 %v5976, %v5973
    %v6145 = vpack.c.b16 %v5977, %v5974
    %v6146 = vpack.c.b16 %v5981, %v5978
    %v6147 = vpack.c.b16 %v5982, %v5979
    %v6148 = vpack.c.b16 %v5983, %v5980
    %v6149 = vpack.c.b16 %v5987, %v5984
    %v6150 = vpack.c.b16 %v5988, %v5985
    %v6151 = vpack.c.b16 %v5989, %v5986
    %v6152 = vpack.c.b16 %v5993, %v5990
    %v6153 = vpack.c.b16 %v5994, %v5991
    %v6154 = vpack.c.b16 %v5995, %v5992
    %v6155 = vpack.c.b16 %v5999, %v5996
    %v6156 = vpack.c.b16 %v6000, %v5997
    %v6157 = vpack.c.b16 %v6001, %v5998
    %v6158 = vpack.c.b16 %v6005, %v6002
    %v6159 = vpack.c.b16 %v6006, %v6003
    %v6160 = vpack.c.b16 %v6007, %v6004
    %v6161 = vpack.c.b16 %v6011, %v6008
    %v6162 = vpack.c.b16 %v6012, %v6009
    %v6163 = vpack.c.b16 %v6013, %v6010
    %v6164 = vpack.c.b16 %v6017, %v6014
    %v6165 = vpack.c.b16 %v6018, %v6015
    %v6166 = vpack.c.b16 %v6019, %v6016
    %v6167 = vpack.c.b16 %v6023, %v6020
    %v6168 = vpack.c.b16 %v6024, %v6021
    %v6169 = vpack.c.b16 %v6025, %v6022
    %v6170 = vpack.c.b16 %v6029, %v6026
    %v6171 = vpack.c.b16 %v6030, %v6027
    %v6172 = vpack.c.b16 %v6031, %v6028
    %v6173 = vpack.c.b16 %v6035, %v6032
    %v6174 = vpack.c.b16 %v6036, %v6033
    %v6175 = vpack.c.b16 %v6037, %v6034
    %v6176 = vpack.c.b16 %v6041, %v6038
    %v6177 = vpack.c.b16 %v6042, %v6039
    %v6178 = vpack.c.b16 %v6043, %v6040
    %v6179 = vpack.c.b16 %v6047, %v6044
    %v6180 = vpack.c.b16 %v6048, %v6045
    %v6181 = vpack.c.b16 %v6049, %v6046
    %v6182 = vpack.c.b16 %v6053, %v6050
    %v6183 = vpack.c.b16 %v6054, %v6051
    %v6184 = vpack.c.b16 %v6055, %v6052
    %v6185 = vpack.c.b16 %v6059, %v6056
    %v6186 = vpack.c.b16 %v6060, %v6057
    %v6187 = vpack.c.b16 %v6061, %v6058
    %v6188 = vpack.c.b16 %v6065, %v6062
    %v6189 = vpack.c.b16 %v6066, %v6063
    %v6190 = vpack.c.b16 %v6067, %v6064
    %v6191 = vpack.c.b16 %v6071, %v6068
    %v6192 = vpack.c.b16 %v6072, %v6069
    %v6193 = vpack.c.b16 %v6073, %v6070
    %6314 = vmatprep.subr.bf16.mxu0 %v6075
    %6315 = vmatpush1.bf16.msra.mxu0 %v6074
    %6316 = vmatprep.subr.bf16.mxu0 %v6078
    %6317 = vmatpush1.bf16.msra.mxu0 %v6077
    %6318 = vmatprep.subr.bf16.mxu0 %v6081
    %6319 = vmatpush1.bf16.msra.mxu0 %v6080
    %6320 = vmatprep.subr.bf16.mxu0 %v6084
    %6321 = vmatpush1.bf16.msra.mxu0 %v6083
    %6322 = vmatprep.subr.bf16.mxu0 %v6087
    %6323 = vmatpush1.bf16.msra.mxu0 %v6086
    %6324 = vmatprep.subr.bf16.mxu0 %v6090
    %6325 = vmatpush1.bf16.msra.mxu0 %v6089
    %6326 = vmatprep.subr.bf16.mxu0 %v6093
    %6327 = vmatpush1.bf16.msra.mxu0 %v6092
    %6328 = vmatprep.subr.bf16.mxu0 %v6096
    %6329 = vmatpush1.bf16.msra.mxu0 %v6095
    %6330 = vmatprep.subr.bf16.mxu0 %v6099
    %6331 = vmatpush1.bf16.msra.mxu0 %v6098
    %6332 = vmatprep.subr.bf16.mxu0 %v6102
    %6333 = vmatpush1.bf16.msra.mxu0 %v6101
    %6334 = vmatprep.subr.bf16.mxu0 %v6105
    %6335 = vmatpush1.bf16.msra.mxu0 %v6104
    %6336 = vmatprep.subr.bf16.mxu0 %v6108
    %6337 = vmatpush1.bf16.msra.mxu0 %v6107
    %6338 = vmatprep.subr.bf16.mxu0 %v6111
    %6339 = vmatpush1.bf16.msra.mxu0 %v6110
    %6340 = vmatprep.subr.bf16.mxu0 %v6114
    %6341 = vmatpush1.bf16.msra.mxu0 %v6113
    %6342 = vmatprep.subr.bf16.mxu0 %v6117
    %6343 = vmatpush1.bf16.msra.mxu0 %v6116
    %6344 = vmatprep.subr.bf16.mxu0 %v6120
    %6345 = vmatpush1.bf16.msra.mxu0 %v6119
    %6346 = vmatprep.mubr.bf16.mxu0 %v5493
    %6347 = vmatmul.mubr.bf16.gmra.mrb[0].mxu0 %v5492
    %v6348 = vpop.f32.mrb[0].mxu0
    %v6349 = vadd.f32 %v5662, %v6348
    %v6350 = vpop.f32.mrb[0].mxu0
    %v6351 = vadd.f32 %v5666, %v6350
    %v6352 = vpop.f32.mrb[0].mxu0
    %v6353 = vpop.f32.mrb[0].mxu0
    %6354 = vdwg.mxu0
    %6355 = vmatprep.subr.bf16.mxu0 %v6123
    %6356 = vmatpush1.bf16.msra.mxu0 %v6122
    %6357 = vmatprep.subr.bf16.mxu0 %v6126
    %6358 = vmatpush1.bf16.msra.mxu0 %v6125
    %6359 = vmatprep.subr.bf16.mxu0 %v6129
    %6360 = vmatpush1.bf16.msra.mxu0 %v6128
    %6361 = vmatprep.subr.bf16.mxu0 %v6132
    %6362 = vmatpush1.bf16.msra.mxu0 %v6131
    %6363 = vmatprep.subr.bf16.mxu0 %v6135
    %6364 = vmatpush1.bf16.msra.mxu0 %v6134
    %6365 = vmatprep.subr.bf16.mxu0 %v6138
    %6366 = vmatpush1.bf16.msra.mxu0 %v6137
    %6367 = vmatprep.subr.bf16.mxu0 %v6141
    %6368 = vmatpush1.bf16.msra.mxu0 %v6140
    %6369 = vmatprep.subr.bf16.mxu0 %v6144
    %6370 = vmatpush1.bf16.msra.mxu0 %v6143
    %6371 = vmatprep.subr.bf16.mxu0 %v6147
    %6372 = vmatpush1.bf16.msra.mxu0 %v6146
    %6373 = vmatprep.subr.bf16.mxu0 %v6150
    %6374 = vmatpush1.bf16.msra.mxu0 %v6149
    %6375 = vmatprep.subr.bf16.mxu0 %v6153
    %6376 = vmatpush1.bf16.msra.mxu0 %v6152
    %6377 = vmatprep.subr.bf16.mxu0 %v6156
    %6378 = vmatpush1.bf16.msra.mxu0 %v6155
    %6379 = vmatprep.subr.bf16.mxu0 %v6159
    %6380 = vmatpush1.bf16.msra.mxu0 %v6158
    %6381 = vmatprep.subr.bf16.mxu0 %v6162
    %6382 = vmatpush1.bf16.msra.mxu0 %v6161
    %6383 = vmatprep.subr.bf16.mxu0 %v6165
    %6384 = vmatpush1.bf16.msra.mxu0 %v6164
    %6385 = vmatprep.subr.bf16.mxu0 %v6168
    %6386 = vmatpush1.bf16.msra.mxu0 %v6167
    %6387 = vmatprep.mubr.bf16.mxu0 %v5495
    %6388 = vmatmul.mubr.bf16.gmra.mrb[0].mxu0 %v5494
    %v6389 = vpop.f32.mrb[0].mxu0
    %v6390 = vadd.f32 %v6349, %v6389
    %v6391 = vpop.f32.mrb[0].mxu0
    %v6392 = vadd.f32 %v6351, %v6391
    %v6393 = vpop.f32.mrb[0].mxu0
    %v6394 = vpop.f32.mrb[0].mxu0
    %6395 = vdwg.mxu0
    %6396 = vmatprep.subr.bf16.mxu0 %v6171
    %6397 = vmatpush1.bf16.msra.mxu0 %v6170
    %6398 = vmatprep.subr.bf16.mxu0 %v6174
    %6399 = vmatpush1.bf16.msra.mxu0 %v6173
    %6400 = vmatprep.subr.bf16.mxu0 %v6177
    %6401 = vmatpush1.bf16.msra.mxu0 %v6176
    %6402 = vmatprep.subr.bf16.mxu0 %v6180
    %6403 = vmatpush1.bf16.msra.mxu0 %v6179
    %6404 = vmatprep.subr.bf16.mxu0 %v6183
    %6405 = vmatpush1.bf16.msra.mxu0 %v6182
    %6406 = vmatprep.subr.bf16.mxu0 %v6186
    %6407 = vmatpush1.bf16.msra.mxu0 %v6185
    %6408 = vmatprep.subr.bf16.mxu0 %v6189
    %6409 = vmatpush1.bf16.msra.mxu0 %v6188
    %6410 = vmatprep.subr.bf16.mxu0 %v6192
    %6411 = vmatpush1.bf16.msra.mxu0 %v6191
    %6412 = vmatprep.subr.bf16.mxu0 0
    %6413 = vmatpush1.bf16.msra.mxu0 0
    %6414 = vmatprep.subr.bf16.mxu0 0
    %6415 = vmatpush1.bf16.msra.mxu0 0
    %6416 = vmatprep.subr.bf16.mxu0 0
    %6417 = vmatpush1.bf16.msra.mxu0 0
    %6418 = vmatprep.subr.bf16.mxu0 0
    %6419 = vmatpush1.bf16.msra.mxu0 0
    %6420 = vmatprep.subr.bf16.mxu0 0
    %6421 = vmatpush1.bf16.msra.mxu0 0
    %6422 = vmatprep.subr.bf16.mxu0 0
    %6423 = vmatpush1.bf16.msra.mxu0 0
    %6424 = vmatprep.subr.bf16.mxu0 0
    %6425 = vmatpush1.bf16.msra.mxu0 0
    %6426 = vmatprep.subr.bf16.mxu0 0
    %6427 = vmatpush1.bf16.msra.mxu0 0
    %6428 = vmatprep.mubr.bf16.mxu0 0
    %6429 = vmatmul.mubr.bf16.gmra.mrb[0].mxu0 %v5496
    %v6430 = vpop.f32.mrb[0].mxu0
    %v6431 = vadd.f32 %v6390, %v6430
    %v6432 = vpop.f32.mrb[0].mxu0
    %v6433 = vadd.f32 %v6392, %v6432
    %v6434 = vpop.f32.mrb[0].mxu0
    %v6435 = vpop.f32.mrb[0].mxu0
    %6436 = vdwg.mxu0
    %6437 = vmatprep.subr.bf16.mxu0 0
    %6438 = vmatpush1.bf16.msra.mxu0 %v6076
    %6439 = vmatprep.subr.bf16.mxu0 0
    %6440 = vmatpush1.bf16.msra.mxu0 %v6079
    %6441 = vmatprep.subr.bf16.mxu0 0
    %6442 = vmatpush1.bf16.msra.mxu0 %v6082
    %6443 = vmatprep.subr.bf16.mxu0 0
    %6444 = vmatpush1.bf16.msra.mxu0 %v6085
    %6445 = vmatprep.subr.bf16.mxu0 0
    %6446 = vmatpush1.bf16.msra.mxu0 %v6088
    %6447 = vmatprep.subr.bf16.mxu0 0
    %6448 = vmatpush1.bf16.msra.mxu0 %v6091
    %6449 = vmatprep.subr.bf16.mxu0 0
    %6450 = vmatpush1.bf16.msra.mxu0 %v6094
    %6451 = vmatprep.subr.bf16.mxu0 0
    %6452 = vmatpush1.bf16.msra.mxu0 %v6097
    %6453 = vmatprep.subr.bf16.mxu0 0
    %6454 = vmatpush1.bf16.msra.mxu0 %v6100
    %6455 = vmatprep.subr.bf16.mxu0 0
    %6456 = vmatpush1.bf16.msra.mxu0 %v6103
    %6457 = vmatprep.subr.bf16.mxu0 0
    %6458 = vmatpush1.bf16.msra.mxu0 %v6106
    %6459 = vmatprep.subr.bf16.mxu0 0
    %6460 = vmatpush1.bf16.msra.mxu0 %v6109
    %6461 = vmatprep.subr.bf16.mxu0 0
    %6462 = vmatpush1.bf16.msra.mxu0 %v6112
    %6463 = vmatprep.subr.bf16.mxu0 0
    %6464 = vmatpush1.bf16.msra.mxu0 %v6115
    %6465 = vmatprep.subr.bf16.mxu0 0
    %6466 = vmatpush1.bf16.msra.mxu0 %v6118
    %6467 = vmatprep.subr.bf16.mxu0 0
    %6468 = vmatpush1.bf16.msra.mxu0 %v6121
    %6469 = vmatprep.mubr.bf16.mxu0 %v5493
    %6470 = vmatmul.mubr.bf16.gmra.mrb[0].mxu0 %v5492
    %v6471 = vpop.f32.mrb[0].mxu0
    %v6472 = vadd.f32 %v5670, %v6471
    %v6473 = vpop.f32.mrb[0].mxu0
    %v6474 = vpop.f32.mrb[0].mxu0
    %v6475 = vpop.f32.mrb[0].mxu0
    %6476 = vdwg.mxu0
    %6477 = vmatprep.subr.bf16.mxu0 0
    %6478 = vmatpush1.bf16.msra.mxu0 %v6124
    %6479 = vmatprep.subr.bf16.mxu0 0
    %6480 = vmatpush1.bf16.msra.mxu0 %v6127
    %6481 = vmatprep.subr.bf16.mxu0 0
    %6482 = vmatpush1.bf16.msra.mxu0 %v6130
    %6483 = vmatprep.subr.bf16.mxu0 0
    %6484 = vmatpush1.bf16.msra.mxu0 %v6133
    %6485 = vmatprep.subr.bf16.mxu0 0
    %6486 = vmatpush1.bf16.msra.mxu0 %v6136
    %6487 = vmatprep.subr.bf16.mxu0 0
    %6488 = vmatpush1.bf16.msra.mxu0 %v6139
    %6489 = vmatprep.subr.bf16.mxu0 0
    %6490 = vmatpush1.bf16.msra.mxu0 %v6142
    %6491 = vmatprep.subr.bf16.mxu0 0
    %6492 = vmatpush1.bf16.msra.mxu0 %v6145
    %6493 = vmatprep.subr.bf16.mxu0 0
    %6494 = vmatpush1.bf16.msra.mxu0 %v6148
    %6495 = vmatprep.subr.bf16.mxu0 0
    %6496 = vmatpush1.bf16.msra.mxu0 %v6151
    %6497 = vmatprep.subr.bf16.mxu0 0
    %6498 = vmatpush1.bf16.msra.mxu0 %v6154
    %6499 = vmatprep.subr.bf16.mxu0 0
    %6500 = vmatpush1.bf16.msra.mxu0 %v6157
    %6501 = vmatprep.subr.bf16.mxu0 0
    %6502 = vmatpush1.bf16.msra.mxu0 %v6160
    %6503 = vmatprep.subr.bf16.mxu0 0
    %6504 = vmatpush1.bf16.msra.mxu0 %v6163
    %6505 = vmatprep.subr.bf16.mxu0 0
    %6506 = vmatpush1.bf16.msra.mxu0 %v6166
    %6507 = vmatprep.subr.bf16.mxu0 0
    %6508 = vmatpush1.bf16.msra.mxu0 %v6169
    %6509 = vmatprep.mubr.bf16.mxu0 %v5495
    %6510 = vmatmul.mubr.bf16.gmra.mrb[0].mxu0 %v5494
    %v6511 = vpop.f32.mrb[0].mxu0
    %v6512 = vadd.f32 %v6472, %v6511
    %v6513 = vpop.f32.mrb[0].mxu0
    %v6514 = vpop.f32.mrb[0].mxu0
    %v6515 = vpop.f32.mrb[0].mxu0
    %6516 = vdwg.mxu0
    %6517 = vmatprep.subr.bf16.mxu0 0
    %6518 = vmatpush1.bf16.msra.mxu0 %v6172
    %6519 = vmatprep.subr.bf16.mxu0 0
    %6520 = vmatpush1.bf16.msra.mxu0 %v6175
    %6521 = vmatprep.subr.bf16.mxu0 0
    %6522 = vmatpush1.bf16.msra.mxu0 %v6178
    %6523 = vmatprep.subr.bf16.mxu0 0
    %6524 = vmatpush1.bf16.msra.mxu0 %v6181
    %6525 = vmatprep.subr.bf16.mxu0 0
    %6526 = vmatpush1.bf16.msra.mxu0 %v6184
    %6527 = vmatprep.subr.bf16.mxu0 0
    %6528 = vmatpush1.bf16.msra.mxu0 %v6187
    %6529 = vmatprep.subr.bf16.mxu0 0
    %6530 = vmatpush1.bf16.msra.mxu0 %v6190
    %6531 = vmatprep.subr.bf16.mxu0 0
    %6532 = vmatpush1.bf16.msra.mxu0 %v6193
    %6533 = vmatprep.subr.bf16.mxu0 0
    %6534 = vmatpush1.bf16.msra.mxu0 0
    %6535 = vmatprep.subr.bf16.mxu0 0
    %6536 = vmatpush1.bf16.msra.mxu0 0
    %6537 = vmatprep.subr.bf16.mxu0 0
    %6538 = vmatpush1.bf16.msra.mxu0 0
    %6539 = vmatprep.subr.bf16.mxu0 0
    %6540 = vmatpush1.bf16.msra.mxu0 0
    %6541 = vmatprep.subr.bf16.mxu0 0
    %6542 = vmatpush1.bf16.msra.mxu0 0
    %6543 = vmatprep.subr.bf16.mxu0 0
    %6544 = vmatpush1.bf16.msra.mxu0 0
    %6545 = vmatprep.subr.bf16.mxu0 0
    %6546 = vmatpush1.bf16.msra.mxu0 0
    %6547 = vmatprep.subr.bf16.mxu0 0
    %6548 = vmatpush1.bf16.msra.mxu0 0
    %6549 = vmatprep.mubr.bf16.mxu0 0
    %6550 = vmatmul.mubr.bf16.gmra.mrb[0].mxu0 %v5496
    %v6551 = vpop.f32.mrb[0].mxu0
    %v6552 = vadd.f32 %v6512, %v6551
    %v6553 = vpop.f32.mrb[0].mxu0
    %v6554 = vpop.f32.mrb[0].mxu0
    %v6555 = vpop.f32.mrb[0].mxu0
    %6556 = vdwg.mxu0
    %v6557 = vmul.f32 %v6431, 0.5
    %v6558 = vmul.f32 %v6433, 0.5
    %v6559 = vmul.f32 %v6552, 0.5
    %v6560 = vmul.f32 %v6431, 0.70710677
    %v6561 = vmul.f32 %v6433, 0.70710677
    %v6562 = vmul.f32 %v6552, 0.70710677
    %v6563 = verf.f32.pop %v6560
    %v6564 = verf.f32.pop %v6561
    %v6565 = verf.f32.pop %v6562
    %v6566 = vadd.f32 %v6563, 1.0
    %v6567 = vadd.f32 %v6564, 1.0
    %v6568 = vadd.f32 %v6565, 1.0
    %v6569 = vmul.f32 %v6557, %v6566
    %v6570 = vmul.f32 %v6558, %v6567
    %v6571 = vmul.f32 %v6559, %v6568
    %v6572 = vpack.c.bf16 %v6569, %v6569
    %v6573 = vpack.c.bf16 %v6570, %v6570
    %v6574 = vpack.c.bf16 %v6571, %v6571
    %v6575 = vld [vmem:[#allocation11] sm:$0xf]
    %v6576 = vld [vmem:[#allocation11 + $0x4] sm:$0xf]
    %v6577 = vld [vmem:[#allocation11 + $0x8] sm:$0xf]
    %v6578 = vld [vmem:[#allocation11 + $0xc] sm:$0xf]
    %v6579 = vld [vmem:[#allocation11 + $0x10] sm:$0xf]
    %v6580 = vld [vmem:[#allocation11 + $0x14] sm:$0xf]
    %v6581 = vld [vmem:[#allocation11 + $0x18] sm:$0xf]
    %v6582 = vld [vmem:[#allocation11 + $0x1c] sm:$0xf]
    %v6583 = vld [vmem:[#allocation11 + $0x20] sm:$0xf]
    %v6584 = vld [vmem:[#allocation11 + $0x24] sm:$0xf]
    %v6585 = vld [vmem:[#allocation11 + $0x28] sm:$0xf]
    %v6586 = vld [vmem:[#allocation11 + $0x2c] sm:$0xf]
    %v6587 = vld [vmem:[#allocation11 + $0x30] sm:$0xf]
    %v6588 = vld [vmem:[#allocation11 + $0x34] sm:$0xf]
    %v6589 = vld [vmem:[#allocation11 + $0x38] sm:$0xf]
    %v6590 = vld [vmem:[#allocation11 + $0x3c] sm:$0xf]
    %v6591 = vld [vmem:[#allocation11 + $0x40] sm:$0xf]
    %v6592 = vld [vmem:[#allocation11 + $0x44] sm:$0xf]
    %v6593 = vld [vmem:[#allocation11 + $0x48] sm:$0xf]
    %v6594 = vld [vmem:[#allocation11 + $0x4c] sm:$0xf]
    %v6595 = vld [vmem:[#allocation11 + $0x50] sm:$0xf]
    %v6596 = vld [vmem:[#allocation11 + $0x54] sm:$0xf]
    %v6597 = vld [vmem:[#allocation11 + $0x58] sm:$0xf]
    %v6598 = vld [vmem:[#allocation11 + $0x5c] sm:$0xf]
    %v6599 = vld [vmem:[#allocation11 + $0x60] sm:$0xf]
    %v6600 = vld [vmem:[#allocation11 + $0x64] sm:$0xf]
    %v6601 = vld [vmem:[#allocation11 + $0x68] sm:$0xf]
    %v6602 = vld [vmem:[#allocation11 + $0x6c] sm:$0xf]
    %v6603 = vld [vmem:[#allocation11 + $0x70] sm:$0xf]
    %v6604 = vld [vmem:[#allocation11 + $0x74] sm:$0xf]
    %v6605 = vld [vmem:[#allocation11 + $0x78] sm:$0xf]
    %v6606 = vld [vmem:[#allocation11 + $0x7c] sm:$0xf]
    %v6607 = vld [vmem:[#allocation11 + $0x80] sm:$0xf]
    %v6608 = vld [vmem:[#allocation11 + $0x84] sm:$0xf]
    %v6609 = vld [vmem:[#allocation11 + $0x88] sm:$0xf]
    %v6610 = vld [vmem:[#allocation11 + $0x8c] sm:$0xf]
    %v6611 = vld [vmem:[#allocation11 + $0x90] sm:$0xf]
    %v6612 = vld [vmem:[#allocation11 + $0x94] sm:$0xf]
    %v6613 = vld [vmem:[#allocation11 + $0x98] sm:$0xf]
    %v6614 = vld [vmem:[#allocation11 + $0x9c] sm:$0xf]
    %v6615 = vld [vmem:[#allocation11 + $0xa0] sm:$0xf]
    %v6616 = vld [vmem:[#allocation11 + $0xa4] sm:$0xf]
    %v6617 = vld [vmem:[#allocation11 + $0xa8] sm:$0xf]
    %v6618 = vld [vmem:[#allocation11 + $0xac] sm:$0xf]
    %v6619 = vld [vmem:[#allocation11 + $0xb0] sm:$0xf]
    %v6620 = vld [vmem:[#allocation11 + $0xb4] sm:$0xf]
    %v6621 = vld [vmem:[#allocation11 + $0xb8] sm:$0xf]
    %v6622 = vld [vmem:[#allocation11 + $0xbc] sm:$0xf]
    %v6623 = vld [vmem:[%s10] sm:$0x1]
    %v6625 = vlaneseq
    %v6626 = vshrl.u32 %v6625, 7
    %v6627 = vsub.s32 0, %v6626
    %v6628 = vrot.slane %v6623, %v6627
    %v6678 = vunpack.c.l.b16 %v6575
    %v6679 = vunpack.c.l.b16 %v6576
    %v6680 = vunpack.c.l.b16 %v6577
    %v6681 = vunpack.c.l.b16 %v6578
    %v6682 = vunpack.c.l.b16 %v6579
    %v6683 = vunpack.c.l.b16 %v6580
    %v6684 = vunpack.c.l.b16 %v6581
    %v6685 = vunpack.c.l.b16 %v6582
    %v6686 = vunpack.c.l.b16 %v6583
    %v6687 = vunpack.c.l.b16 %v6584
    %v6688 = vunpack.c.l.b16 %v6585
    %v6689 = vunpack.c.l.b16 %v6586
    %v6690 = vunpack.c.l.b16 %v6587
    %v6691 = vunpack.c.l.b16 %v6588
    %v6692 = vunpack.c.l.b16 %v6589
    %v6693 = vunpack.c.l.b16 %v6590
    %v6694 = vunpack.c.l.b16 %v6591
    %v6695 = vunpack.c.l.b16 %v6592
    %v6696 = vunpack.c.l.b16 %v6593
    %v6697 = vunpack.c.l.b16 %v6594
    %v6698 = vunpack.c.l.b16 %v6595
    %v6699 = vunpack.c.l.b16 %v6596
    %v6700 = vunpack.c.l.b16 %v6597
    %v6701 = vunpack.c.l.b16 %v6598
    %v6702 = vunpack.c.l.b16 %v6599
    %v6703 = vunpack.c.l.b16 %v6600
    %v6704 = vunpack.c.l.b16 %v6601
    %v6705 = vunpack.c.l.b16 %v6602
    %v6706 = vunpack.c.l.b16 %v6603
    %v6707 = vunpack.c.l.b16 %v6604
    %v6708 = vunpack.c.l.b16 %v6605
    %v6709 = vunpack.c.l.b16 %v6606
    %v6710 = vunpack.c.l.b16 %v6607
    %v6711 = vunpack.c.l.b16 %v6608
    %v6712 = vunpack.c.l.b16 %v6609
    %v6713 = vunpack.c.l.b16 %v6610
    %v6714 = vunpack.c.l.b16 %v6611
    %v6715 = vunpack.c.l.b16 %v6612
    %v6716 = vunpack.c.l.b16 %v6613
    %v6717 = vunpack.c.l.b16 %v6614
    %v6718 = vunpack.c.l.b16 %v6615
    %v6719 = vunpack.c.l.b16 %v6616
    %v6720 = vunpack.c.l.b16 %v6617
    %v6721 = vunpack.c.l.b16 %v6618
    %v6722 = vunpack.c.l.b16 %v6619
    %v6723 = vunpack.c.l.b16 %v6620
    %v6724 = vunpack.c.l.b16 %v6621
    %v6725 = vunpack.c.l.b16 %v6622
    %v6726 = vpack.c.b16 %v6679, %v6678
    %v6727 = vpack.c.b16 %v6681, %v6680
    %v6728 = vpack.c.b16 %v6683, %v6682
    %v6729 = vpack.c.b16 %v6685, %v6684
    %v6730 = vpack.c.b16 %v6687, %v6686
    %v6731 = vpack.c.b16 %v6689, %v6688
    %v6732 = vpack.c.b16 %v6691, %v6690
    %v6733 = vpack.c.b16 %v6693, %v6692
    %v6734 = vpack.c.b16 %v6695, %v6694
    %v6735 = vpack.c.b16 %v6697, %v6696
    %v6736 = vpack.c.b16 %v6699, %v6698
    %v6737 = vpack.c.b16 %v6701, %v6700
    %v6738 = vpack.c.b16 %v6703, %v6702
    %v6739 = vpack.c.b16 %v6705, %v6704
    %v6740 = vpack.c.b16 %v6707, %v6706
    %v6741 = vpack.c.b16 %v6709, %v6708
    %v6742 = vpack.c.b16 %v6711, %v6710
    %v6743 = vpack.c.b16 %v6713, %v6712
    %v6744 = vpack.c.b16 %v6715, %v6714
    %v6745 = vpack.c.b16 %v6717, %v6716
    %v6746 = vpack.c.b16 %v6719, %v6718
    %v6747 = vpack.c.b16 %v6721, %v6720
    %v6748 = vpack.c.b16 %v6723, %v6722
    %v6749 = vpack.c.b16 %v6725, %v6724
    %6774 = vmatprep.subr.bf16.mxu0 0
    %6775 = vmatpush1.bf16.msra.mxu0 %v6726
    %6776 = vmatprep.subr.bf16.mxu0 0
    %6777 = vmatpush1.bf16.msra.mxu0 %v6727
    %6778 = vmatprep.subr.bf16.mxu0 0
    %6779 = vmatpush1.bf16.msra.mxu0 %v6728
    %6780 = vmatprep.subr.bf16.mxu0 0
    %6781 = vmatpush1.bf16.msra.mxu0 %v6729
    %6782 = vmatprep.subr.bf16.mxu0 0
    %6783 = vmatpush1.bf16.msra.mxu0 %v6730
    %6784 = vmatprep.subr.bf16.mxu0 0
    %6785 = vmatpush1.bf16.msra.mxu0 %v6731
    %6786 = vmatprep.subr.bf16.mxu0 0
    %6787 = vmatpush1.bf16.msra.mxu0 %v6732
    %6788 = vmatprep.subr.bf16.mxu0 0
    %6789 = vmatpush1.bf16.msra.mxu0 %v6733
    %6790 = vmatprep.subr.bf16.mxu0 0
    %6791 = vmatpush1.bf16.msra.mxu0 %v6734
    %6792 = vmatprep.subr.bf16.mxu0 0
    %6793 = vmatpush1.bf16.msra.mxu0 %v6735
    %6794 = vmatprep.subr.bf16.mxu0 0
    %6795 = vmatpush1.bf16.msra.mxu0 %v6736
    %6796 = vmatprep.subr.bf16.mxu0 0
    %6797 = vmatpush1.bf16.msra.mxu0 %v6737
    %6798 = vmatprep.subr.bf16.mxu0 0
    %6799 = vmatpush1.bf16.msra.mxu0 %v6738
    %6800 = vmatprep.subr.bf16.mxu0 0
    %6801 = vmatpush1.bf16.msra.mxu0 %v6739
    %6802 = vmatprep.subr.bf16.mxu0 0
    %6803 = vmatpush1.bf16.msra.mxu0 %v6740
    %6804 = vmatprep.subr.bf16.mxu0 0
    %6805 = vmatpush1.bf16.msra.mxu0 %v6741
    %6806 = vmatprep.mubr.bf16.mxu0 %v6573
    %6807 = vmatmul.mubr.bf16.gmra.mrb[0].mxu0 %v6572
    %v6808 = vpop.f32.mrb[0].mxu0
    %v6809 = vadd.f32 %v6628, %v6808
    %v6810 = vpop.f32.mrb[0].mxu0
    %v6811 = vpop.f32.mrb[0].mxu0
    %v6812 = vpop.f32.mrb[0].mxu0
    %6813 = vdwg.mxu0
    %6814 = vmatprep.subr.bf16.mxu0 0
    %6815 = vmatpush1.bf16.msra.mxu0 %v6742
    %6816 = vmatprep.subr.bf16.mxu0 0
    %6817 = vmatpush1.bf16.msra.mxu0 %v6743
    %6818 = vmatprep.subr.bf16.mxu0 0
    %6819 = vmatpush1.bf16.msra.mxu0 %v6744
    %6820 = vmatprep.subr.bf16.mxu0 0
    %6821 = vmatpush1.bf16.msra.mxu0 %v6745
    %6822 = vmatprep.subr.bf16.mxu0 0
    %6823 = vmatpush1.bf16.msra.mxu0 %v6746
    %6824 = vmatprep.subr.bf16.mxu0 0
    %6825 = vmatpush1.bf16.msra.mxu0 %v6747
    %6826 = vmatprep.subr.bf16.mxu0 0
    %6827 = vmatpush1.bf16.msra.mxu0 %v6748
    %6828 = vmatprep.subr.bf16.mxu0 0
    %6829 = vmatpush1.bf16.msra.mxu0 %v6749
    %6830 = vmatprep.subr.bf16.mxu0 0
    %6831 = vmatpush1.bf16.msra.mxu0 0
    %6832 = vmatprep.subr.bf16.mxu0 0
    %6833 = vmatpush1.bf16.msra.mxu0 0
    %6834 = vmatprep.subr.bf16.mxu0 0
    %6835 = vmatpush1.bf16.msra.mxu0 0
    %6836 = vmatprep.subr.bf16.mxu0 0
    %6837 = vmatpush1.bf16.msra.mxu0 0
    %6838 = vmatprep.subr.bf16.mxu0 0
    %6839 = vmatpush1.bf16.msra.mxu0 0
    %6840 = vmatprep.subr.bf16.mxu0 0
    %6841 = vmatpush1.bf16.msra.mxu0 0
    %6842 = vmatprep.subr.bf16.mxu0 0
    %6843 = vmatpush1.bf16.msra.mxu0 0
    %6844 = vmatprep.subr.bf16.mxu0 0
    %6845 = vmatpush1.bf16.msra.mxu0 0
    %6846 = vmatprep.mubr.bf16.mxu0 0
    %6847 = vmatmul.mubr.bf16.gmra.mrb[0].mxu0 %v6574
    %v6848 = vpop.f32.mrb[0].mxu0
    %v6849 = vadd.f32 %v6809, %v6848
    %v6850 = vpop.f32.mrb[0].mxu0
    %v6851 = vpop.f32.mrb[0].mxu0
    %v6852 = vpop.f32.mrb[0].mxu0
    %6853 = vdwg.mxu0
    %6854 = vst [vmem:[#allocation13] sm:$0xff] %v6849
    // Predicated region
    $region70: #{mlp_forward.1} parent=1 // pred_check
      _
    $region71: #{mlp_forward.1} parent=1 // pred_check_branch
      %6856 = sbr.rel (0) target = $region73
    $region72: #{mlp_forward.1} parent=1 // pred_region
      %s6858 = ssub.s32 128, 128
      %6859 = vsyncadd [#allocation4], %s6858
      %s6861 = sshll.u32 [#allocation13], 4
      %s6862 = int_to_ptr.vmem [resolvable:$true] %s6861
      %6864 = dma.vmem_to_hbm [thread:$0]  %s6862, 128, %s11, [#allocation4]
    $region73: #{mlp_forward.1} parent=1 // pred_fallthru
      _
    // Predicated region
    $region74: #{mlp_forward.1} parent=1 // pred_check
      _
    $region75: #{mlp_forward.1} parent=1 // pred_check_branch
      %6866 = sbr.rel (0) target = $region77
    $region76: #{mlp_forward.1} parent=1 // pred_region
      %6867 = dma.done [#allocation4], 128
    $region77: #{mlp_forward.1} parent=1 // pred_fallthru
      _
    %6868 = vsyncpa [#allocation3], 1
    %6869 = vsyncpa [#allocation6], 1
    %6870 = vsyncpa [#allocation9], 1
    %6871 = vsyncpa [#allocation12], 1
    %6872 = vsyncpa [#allocation4], 1

</llo_original>
